<compile_context>
chip_gen: v6e
topology: v6e:2x2x1
jax: 0.10.0
libtpu: 0.0.40
codegen_flags: <defaults>
</compile_context>

<pallas_src>
import numpy as np

import jax
import jax.numpy as jnp
from jax.experimental import pallas as pl
from jax.experimental.pallas import tpu as pltpu


BB = 8  # images per grid step (batch tile)


# ------------------------- trace-time weight packing -------------------------

def pack_params(params, bb=BB):
    """Pack/band the PyTorch weights once, outside the jitted forward."""
    f32 = jnp.float32
    w1 = jnp.asarray(params["conv1_w"], f32)   # (8, 1, 3, 3)
    b1 = jnp.asarray(params["conv1_b"], f32)   # (8,)
    w2 = jnp.asarray(params["conv2_w"], f32)   # (16, 8, 3, 3)
    b2 = jnp.asarray(params["conv2_b"], f32)   # (16,)
    fw1 = jnp.asarray(params["fc1_w"], f32)    # (64, 784)
    fb1 = jnp.asarray(params["fc1_b"], f32)    # (64,)
    fw2 = jnp.asarray(params["fc2_w"], f32)    # (10, 64)
    fb2 = jnp.asarray(params["fc2_b"], f32)    # (10,)

    # --- conv1 banded weights, (3, 28, 256): input col j is the UNPADDED image
    # column (column zero-padding folded in by dropping out-of-range taps).
    # Output cols  8 + p*8 + c  (even pool col, x=2p)   in half [0,128)
    #            136 + p*8 + c  (odd  pool col, x=2p+1) in half [128,256)
    # which is exactly the zero-padded conv2 input column layout xp*8+c.
    j = np.arange(28)[:, None, None]
    p = np.arange(14)[None, :, None]
    q = np.arange(3)[None, None, :]
    t1e = (j == 2 * p + q - 1).astype(np.float32)          # (28, 14, 3)
    t1o = (j == 2 * p + q).astype(np.float32)
    w1r = w1[:, 0, :, :]                                    # (c, kh, kw)
    w1e = jnp.einsum("jpq,chq->hjpc", t1e, w1r).reshape(3, 28, 112)
    w1o = jnp.einsum("jpq,chq->hjpc", t1o, w1r).reshape(3, 28, 112)
    z8 = jnp.zeros((3, 28, 8), f32)
    w1cat = jnp.concatenate([z8, w1e, z8, z8, w1o, z8], axis=2)   # (3, 28, 256)
    b1row = jnp.pad(jnp.tile(b1, 14), (8, 8)).reshape(1, 128)

    # --- conv2 banded weights, (3, 128, 256): input col s = xp*8 + c
    # (xp in [0,16) padded pooled column), output cols p*16 + d (even pool2
    # col) in [0,112) and 128 + p*16 + d (odd) in [128,240); rest zero.
    s = np.arange(128)[:, None, None, None]
    pp = np.arange(7)[None, :, None, None]
    qq = np.arange(3)[None, None, :, None]
    cc = np.arange(8)[None, None, None, :]
    t2e = (s == (2 * pp + qq) * 8 + cc).astype(np.float32)       # (128, 7, 3, 8)
    t2o = (s == (2 * pp + 1 + qq) * 8 + cc).astype(np.float32)
    w2e = jnp.einsum("spqc,dchq->hspd", t2e, w2).reshape(3, 128, 112)
    w2o = jnp.einsum("spqc,dchq->hspd", t2o, w2).reshape(3, 128, 112)
    z16 = jnp.zeros((3, 128, 16), f32)
    w2cat = jnp.concatenate([w2e, z16, w2o, z16], axis=2)         # (3, 128, 256)
    b2row = jnp.pad(jnp.tile(b2, 7), (0, 16)).reshape(1, 128)

    # --- pool1 row-pair selectors (block-diagonal over the batch tile).
    # P1[b*16 + i] = max(v1[b*30 + 2i-1], v1[b*30 + 2i]) for i in 1..14;
    # rows i=0,15 stay zero (they are conv2's zero row padding).
    re1 = np.zeros((bb * 16, bb * 30), np.float32)
    ro1 = np.zeros((bb * 16, bb * 30), np.float32)
    for b in range(bb):
        for i in range(1, 15):
            re1[b * 16 + i, b * 30 + 2 * i - 1] = 1.0
            ro1[b * 16 + i, b * 30 + 2 * i] = 1.0

    # --- pool2 row-pair selectors; output row order is (a, b) = a*bb + b so
    # that per-a slices of the result are contiguous, sublane-aligned blocks.
    re2 = np.zeros((7 * bb, bb * 16), np.float32)
    ro2 = np.zeros((7 * bb, bb * 16), np.float32)
    for a in range(7):
        for b in range(bb):
            re2[a * bb + b, b * 16 + 2 * a + 1] = 1.0
            ro2[a * bb + b, b * 16 + 2 * a + 2] = 1.0

    # --- fc1 weights: PyTorch NCHW flatten (d*49 + a*7 + p) permuted to the
    # kernel's lane layout (a*128 + p*16 + d), zero rows at the 16 pad lanes.
    a1 = fw1.reshape(64, 16, 7, 7).transpose(2, 3, 1, 0).reshape(7, 112, 64)
    a1 = jnp.concatenate([a1, jnp.zeros((7, 16, 64), f32)], axis=1)  # (7,128,64)
    a1 = a1.reshape(896, 64)
    bfc1 = fb1.reshape(1, 64)

    # --- fc2 padded to a lane-dense 128-wide output.
    wfc2 = jnp.zeros((64, 128), f32).at[:, :10].set(fw2.T)
    bfc2 = jnp.zeros((1, 128), f32).at[0, :10].set(fb2)

    return (w1cat, b1row, jnp.asarray(re1), jnp.asarray(ro1),
            w2cat, b2row, jnp.asarray(re2), jnp.asarray(ro2),
            a1, bfc1, wfc2, bfc2)


# --------------------------------- kernel -----------------------------------

def _shift_down(m):
    """out[r] = m[r-1], zero at r=0."""
    return jnp.concatenate(
        [jnp.zeros((1, m.shape[1]), m.dtype), m[:-1, :]], axis=0)


def _shift_up(m):
    """out[r] = m[r+1], zero at the last row."""
    return jnp.concatenate(
        [m[1:, :], jnp.zeros((1, m.shape[1]), m.dtype)], axis=0)


def _fused_cnn_kernel(x_ref, w1_ref, b1_ref, re1_ref, ro1_ref,
                      w2_ref, b2_ref, re2_ref, ro2_ref,
                      a1_ref, bfc1_ref, wfc2_ref, bfc2_ref, o_ref):
    f32 = jnp.float32

    # ---- conv1 (+bias +ReLU) with pool1 column selection folded in ----
    # x: BB images stacked along rows, 30 padded rows each (rows 0/29 zero).
    x = x_ref[...]                                     # (BB*30, 28)
    xm = _shift_down(x)                                # rows y-1
    xp = _shift_up(x)                                  # rows y+1
    c1 = (jnp.dot(xm, w1_ref[0], preferred_element_type=f32)
          + jnp.dot(x, w1_ref[1], preferred_element_type=f32)
          + jnp.dot(xp, w1_ref[2], preferred_element_type=f32))   # (BB*30, 256)
    v1 = jnp.maximum(jnp.maximum(c1[:, :128], c1[:, 128:]) + b1_ref[...], 0.0)

    # pool1 row-pair max -> conv2 input layout (BB*16, 128), pad rows/cols zero
    p1 = jnp.maximum(jnp.dot(re1_ref[...], v1, preferred_element_type=f32),
                     jnp.dot(ro1_ref[...], v1, preferred_element_type=f32))

    # ---- conv2 (+bias +ReLU) with pool2 column selection folded in ----
    p1m = _shift_down(p1)
    p1p = _shift_up(p1)
    c2 = (jnp.dot(p1m, w2_ref[0], preferred_element_type=f32)
          + jnp.dot(p1, w2_ref[1], preferred_element_type=f32)
          + jnp.dot(p1p, w2_ref[2], preferred_element_type=f32))  # (BB*16, 256)
    v2 = jnp.maximum(jnp.maximum(c2[:, :128], c2[:, 128:]) + b2_ref[...], 0.0)

    # pool2 row-pair max, rows ordered (a, b) -> (7*BB, 128)
    p2 = jnp.maximum(jnp.dot(re2_ref[...], v2, preferred_element_type=f32),
                     jnp.dot(ro2_ref[...], v2, preferred_element_type=f32))

    # ---- fc1 (+ReLU) as ONE wide-K dot, then fc2 (lane-dense 128 output) ----
    hin = jnp.concatenate([p2[a * BB:(a + 1) * BB, :] for a in range(7)],
                          axis=1)                              # (BB, 896)
    h = jnp.maximum(jnp.dot(hin, a1_ref[...], preferred_element_type=f32)
                    + bfc1_ref[...], 0.0)                      # (BB, 64)
    o_ref[...] = (jnp.dot(h, wfc2_ref[...], preferred_element_type=f32)
                  + bfc2_ref[...]).astype(o_ref.dtype)          # (BB, 128)


# ------------------------------- entry point ---------------------------------

def digit_classifier_forward(x_nchw, packed):
    f32 = jnp.float32
    B = x_nchw.shape[0]
    nb = pl.cdiv(B, BB)
    bpad = nb * BB

    x = x_nchw.astype(f32)[:, 0, :, :]                        # (B, 28, 28)
    # Pad batch remainder + one zero row top/bottom (column pad is folded into
    # the banded conv1 weights), then stack images along rows.
    x = jnp.pad(x, ((0, bpad - B), (1, 1), (0, 0)))            # (bpad, 30, 28)
    xs = x.reshape(bpad * 30, 28)

    const_specs = [pl.BlockSpec(w.shape, (lambda i, nd=w.ndim: (0,) * nd))
                   for w in packed]

    out = pl.pallas_call(
        _fused_cnn_kernel,
        out_shape=jax.ShapeDtypeStruct((bpad, 128), f32),
        grid=(nb,),
        in_specs=[pl.BlockSpec((BB * 30, 28), lambda i: (i, 0))] + const_specs,
        out_specs=pl.BlockSpec((BB, 128), lambda i: (i, 0)),
        compiler_params=pltpu.CompilerParams(
            dimension_semantics=("parallel",)),
    )(xs, *packed)
    return out[:B, :10]


# ------------------------------ pure-JAX ref ----------------------------------

def reference_forward(x_nchw, params):
    dn = ("NCHW", "OIHW", "NCHW")
    y = jax.lax.conv_general_dilated(x_nchw, params["conv1_w"], (1, 1), "SAME",
                                     dimension_numbers=dn)
    y = jnp.maximum(y + params["conv1_b"][None, :, None, None], 0.0)
    y = jax.lax.reduce_window(y, -jnp.inf, jax.lax.max, (1, 1, 2, 2), (1, 1, 2, 2), "VALID")
    y = jax.lax.conv_general_dilated(y, params["conv2_w"], (1, 1), "SAME",
                                     dimension_numbers=dn)
    y = jnp.maximum(y + params["conv2_b"][None, :, None, None], 0.0)
    y = jax.lax.reduce_window(y, -jnp.inf, jax.lax.max, (1, 1, 2, 2), (1, 1, 2, 2), "VALID")
    y = y.reshape(y.shape[0], -1)
    y = jnp.maximum(y @ params["fc1_w"].T + params["fc1_b"], 0.0)
    return y @ params["fc2_w"].T + params["fc2_b"]


# ----------------------------------- main -------------------------------------

def init_params(key):
    ks = jax.random.split(key, 8)
    s = 0.1
    return {
        "conv1_w": s * jax.random.normal(ks[0], (8, 1, 3, 3), jnp.float32),
        "conv1_b": s * jax.random.normal(ks[1], (8,), jnp.float32),
        "conv2_w": s * jax.random.normal(ks[2], (16, 8, 3, 3), jnp.float32),
        "conv2_b": s * jax.random.normal(ks[3], (16,), jnp.float32),
        "fc1_w": s * jax.random.normal(ks[4], (64, 16 * 7 * 7), jnp.float32),
        "fc1_b": s * jax.random.normal(ks[5], (64,), jnp.float32),
        "fc2_w": s * jax.random.normal(ks[6], (10, 64), jnp.float32),
        "fc2_b": s * jax.random.normal(ks[7], (10,), jnp.float32),
    }


if __name__ == "__main__":
    key = jax.random.PRNGKey(0)
    k_x, k_p = jax.random.split(key)
    # MNIST-like input implied by fc1 = Linear(16*7*7, 64): 28 -> 14 -> 7.
    x = jax.random.normal(k_x, (2, 1, 28, 28), jnp.float32)
    params = init_params(k_p)

    packed = pack_params(params)          # packed ONCE, outside the jit
    fwd = jax.jit(digit_classifier_forward)
    logits = jax.block_until_ready(fwd(x, packed))

    ref = jax.block_until_ready(reference_forward(x, params))
    assert logits.shape == (2, 10)
    err = float(jnp.max(jnp.abs(logits - ref)))
    assert jnp.allclose(logits, ref, atol=2e-4, rtol=2e-4), \
        f"mismatch vs reference (max |err|={err})"

    print("KERNEL_OK")
</pallas_src>

<mosaic_0001>
module attributes {stable_mosaic.version = 11 : i64} {
  func.func @_fused_cnn_kernel(%arg0: i32, %arg1: memref<240x28xf32, #tpu.memory_space<vmem>>, %arg2: memref<3x28x256xf32, #tpu.memory_space<vmem>>, %arg3: memref<1x128xf32, #tpu.memory_space<vmem>>, %arg4: memref<128x240xf32, #tpu.memory_space<vmem>>, %arg5: memref<128x240xf32, #tpu.memory_space<vmem>>, %arg6: memref<3x128x256xf32, #tpu.memory_space<vmem>>, %arg7: memref<1x128xf32, #tpu.memory_space<vmem>>, %arg8: memref<56x128xf32, #tpu.memory_space<vmem>>, %arg9: memref<56x128xf32, #tpu.memory_space<vmem>>, %arg10: memref<896x64xf32, #tpu.memory_space<vmem>>, %arg11: memref<1x64xf32, #tpu.memory_space<vmem>>, %arg12: memref<64x128xf32, #tpu.memory_space<vmem>>, %arg13: memref<1x128xf32, #tpu.memory_space<vmem>>, %arg14: memref<8x128xf32, #tpu.memory_space<vmem>>) attributes {dimension_semantics = [#tpu.dimension_semantics<parallel>], iteration_bounds = array<i64: 1>, scalar_prefetch = 0 : i64, scratch_operands = 0 : i64, tpu.core_type = #tpu.core_type<tc>, window_params = [{transform_indices = @transform_0, window_bounds = array<i64: 240, 28>}, {pipeline_mode = #tpu.pipeline_mode<synchronous>, transform_indices = @transform_1, window_bounds = array<i64: 3, 28, 256>}, {pipeline_mode = #tpu.pipeline_mode<synchronous>, transform_indices = @transform_2, window_bounds = array<i64: 1, 128>}, {pipeline_mode = #tpu.pipeline_mode<synchronous>, transform_indices = @transform_3, window_bounds = array<i64: 128, 240>}, {pipeline_mode = #tpu.pipeline_mode<synchronous>, transform_indices = @transform_4, window_bounds = array<i64: 128, 240>}, {pipeline_mode = #tpu.pipeline_mode<synchronous>, transform_indices = @transform_5, window_bounds = array<i64: 3, 128, 256>}, {pipeline_mode = #tpu.pipeline_mode<synchronous>, transform_indices = @transform_6, window_bounds = array<i64: 1, 128>}, {pipeline_mode = #tpu.pipeline_mode<synchronous>, transform_indices = @transform_7, window_bounds = array<i64: 56, 128>}, {pipeline_mode = #tpu.pipeline_mode<synchronous>, transform_indices = @transform_8, window_bounds = array<i64: 56, 128>}, {pipeline_mode = #tpu.pipeline_mode<synchronous>, transform_indices = @transform_9, window_bounds = array<i64: 896, 64>}, {pipeline_mode = #tpu.pipeline_mode<synchronous>, transform_indices = @transform_10, window_bounds = array<i64: 1, 64>}, {pipeline_mode = #tpu.pipeline_mode<synchronous>, transform_indices = @transform_11, window_bounds = array<i64: 64, 128>}, {pipeline_mode = #tpu.pipeline_mode<synchronous>, transform_indices = @transform_12, window_bounds = array<i64: 1, 128>}, {transform_indices = @transform_13, window_bounds = array<i64: 8, 128>}]} {
    %c0 = arith.constant 0 : index
    %c0_0 = arith.constant 0 : index
    %0 = vector.load %arg1[%c0, %c0_0] : memref<240x28xf32, #tpu.memory_space<vmem>>, vector<240x28xf32>
    %cst = arith.constant 0.000000e+00 : f32
    %1 = vector.broadcast %cst : f32 to vector<1x28xf32>
    %2 = vector.extract_strided_slice %0 {offsets = [0, 0], sizes = [239, 28], strides = [1, 1]} : vector<240x28xf32> to vector<239x28xf32>
    %3 = tpu.concatenate %1, %2 in 0 : vector<1x28xf32>, vector<239x28xf32> -> vector<240x28xf32>
    %4 = vector.extract_strided_slice %0 {offsets = [1, 0], sizes = [239, 28], strides = [1, 1]} : vector<240x28xf32> to vector<239x28xf32>
    %cst_1 = arith.constant 0.000000e+00 : f32
    %5 = vector.broadcast %cst_1 : f32 to vector<1x28xf32>
    %6 = tpu.concatenate %4, %5 in 0 : vector<239x28xf32>, vector<1x28xf32> -> vector<240x28xf32>
    %c0_2 = arith.constant 0 : index
    %c0_3 = arith.constant 0 : index
    %c0_4 = arith.constant 0 : index
    %7 = vector.load %arg2[%c0_2, %c0_3, %c0_4] : memref<3x28x256xf32, #tpu.memory_space<vmem>>, vector<1x28x256xf32>
    %8 = vector.shape_cast %7 : vector<1x28x256xf32> to vector<28x256xf32>
    %cst_5 = arith.constant dense<0.000000e+00> : vector<240x256xf32>
    %9 = tpu.matmul %3, %8, %cst_5 {dimension_numbers = #tpu.dot_dimension_numbers<[1], [0], [0], [1], [0, 0, 1, 1], [], []>} : vector<240x28xf32>, vector<28x256xf32>, vector<240x256xf32> -> vector<240x256xf32>
    %c1 = arith.constant 1 : index
    %c0_6 = arith.constant 0 : index
    %c0_7 = arith.constant 0 : index
    %10 = vector.load %arg2[%c1, %c0_6, %c0_7] : memref<3x28x256xf32, #tpu.memory_space<vmem>>, vector<1x28x256xf32>
    %11 = vector.shape_cast %10 : vector<1x28x256xf32> to vector<28x256xf32>
    %cst_8 = arith.constant dense<0.000000e+00> : vector<240x256xf32>
    %12 = tpu.matmul %0, %11, %cst_8 {dimension_numbers = #tpu.dot_dimension_numbers<[1], [0], [0], [1], [0, 0, 1, 1], [], []>} : vector<240x28xf32>, vector<28x256xf32>, vector<240x256xf32> -> vector<240x256xf32>
    %13 = arith.addf %9, %12 : vector<240x256xf32>
    %c2 = arith.constant 2 : index
    %c0_9 = arith.constant 0 : index
    %c0_10 = arith.constant 0 : index
    %14 = vector.load %arg2[%c2, %c0_9, %c0_10] : memref<3x28x256xf32, #tpu.memory_space<vmem>>, vector<1x28x256xf32>
    %15 = vector.shape_cast %14 : vector<1x28x256xf32> to vector<28x256xf32>
    %cst_11 = arith.constant dense<0.000000e+00> : vector<240x256xf32>
    %16 = tpu.matmul %6, %15, %cst_11 {dimension_numbers = #tpu.dot_dimension_numbers<[1], [0], [0], [1], [0, 0, 1, 1], [], []>} : vector<240x28xf32>, vector<28x256xf32>, vector<240x256xf32> -> vector<240x256xf32>
    %17 = arith.addf %13, %16 : vector<240x256xf32>
    %18 = vector.extract_strided_slice %17 {offsets = [0, 0], sizes = [240, 128], strides = [1, 1]} : vector<240x256xf32> to vector<240x128xf32>
    %19 = vector.extract_strided_slice %17 {offsets = [0, 128], sizes = [240, 128], strides = [1, 1]} : vector<240x256xf32> to vector<240x128xf32>
    %20 = arith.maximumf %18, %19 : vector<240x128xf32>
    %c0_12 = arith.constant 0 : index
    %c0_13 = arith.constant 0 : index
    %21 = vector.load %arg3[%c0_12, %c0_13] : memref<1x128xf32, #tpu.memory_space<vmem>>, vector<1x128xf32>
    %22 = vector.broadcast %21 : vector<1x128xf32> to vector<240x128xf32>
    %23 = arith.addf %20, %22 : vector<240x128xf32>
    %cst_14 = arith.constant 0.000000e+00 : f32
    %24 = vector.broadcast %cst_14 : f32 to vector<240x128xf32>
    %25 = arith.maximumf %23, %24 : vector<240x128xf32>
    %c0_15 = arith.constant 0 : index
    %c0_16 = arith.constant 0 : index
    %26 = vector.load %arg4[%c0_15, %c0_16] : memref<128x240xf32, #tpu.memory_space<vmem>>, vector<128x240xf32>
    %cst_17 = arith.constant dense<0.000000e+00> : vector<128x128xf32>
    %27 = tpu.matmul %26, %25, %cst_17 {dimension_numbers = #tpu.dot_dimension_numbers<[1], [0], [0], [1], [0, 0, 1, 1], [], []>} : vector<128x240xf32>, vector<240x128xf32>, vector<128x128xf32> -> vector<128x128xf32>
    %c0_18 = arith.constant 0 : index
    %c0_19 = arith.constant 0 : index
    %28 = vector.load %arg5[%c0_18, %c0_19] : memref<128x240xf32, #tpu.memory_space<vmem>>, vector<128x240xf32>
    %cst_20 = arith.constant dense<0.000000e+00> : vector<128x128xf32>
    %29 = tpu.matmul %28, %25, %cst_20 {dimension_numbers = #tpu.dot_dimension_numbers<[1], [0], [0], [1], [0, 0, 1, 1], [], []>} : vector<128x240xf32>, vector<240x128xf32>, vector<128x128xf32> -> vector<128x128xf32>
    %30 = arith.maximumf %27, %29 : vector<128x128xf32>
    %cst_21 = arith.constant 0.000000e+00 : f32
    %31 = vector.broadcast %cst_21 : f32 to vector<1x128xf32>
    %32 = vector.extract_strided_slice %30 {offsets = [0, 0], sizes = [127, 128], strides = [1, 1]} : vector<128x128xf32> to vector<127x128xf32>
    %33 = tpu.concatenate %31, %32 in 0 : vector<1x128xf32>, vector<127x128xf32> -> vector<128x128xf32>
    %34 = vector.extract_strided_slice %30 {offsets = [1, 0], sizes = [127, 128], strides = [1, 1]} : vector<128x128xf32> to vector<127x128xf32>
    %cst_22 = arith.constant 0.000000e+00 : f32
    %35 = vector.broadcast %cst_22 : f32 to vector<1x128xf32>
    %36 = tpu.concatenate %34, %35 in 0 : vector<127x128xf32>, vector<1x128xf32> -> vector<128x128xf32>
    %c0_23 = arith.constant 0 : index
    %c0_24 = arith.constant 0 : index
    %c0_25 = arith.constant 0 : index
    %37 = vector.load %arg6[%c0_23, %c0_24, %c0_25] : memref<3x128x256xf32, #tpu.memory_space<vmem>>, vector<1x128x256xf32>
    %38 = vector.shape_cast %37 : vector<1x128x256xf32> to vector<128x256xf32>
    %cst_26 = arith.constant dense<0.000000e+00> : vector<128x256xf32>
    %39 = tpu.matmul %33, %38, %cst_26 {dimension_numbers = #tpu.dot_dimension_numbers<[1], [0], [0], [1], [0, 0, 1, 1], [], []>} : vector<128x128xf32>, vector<128x256xf32>, vector<128x256xf32> -> vector<128x256xf32>
    %c1_27 = arith.constant 1 : index
    %c0_28 = arith.constant 0 : index
    %c0_29 = arith.constant 0 : index
    %40 = vector.load %arg6[%c1_27, %c0_28, %c0_29] : memref<3x128x256xf32, #tpu.memory_space<vmem>>, vector<1x128x256xf32>
    %41 = vector.shape_cast %40 : vector<1x128x256xf32> to vector<128x256xf32>
    %cst_30 = arith.constant dense<0.000000e+00> : vector<128x256xf32>
    %42 = tpu.matmul %30, %41, %cst_30 {dimension_numbers = #tpu.dot_dimension_numbers<[1], [0], [0], [1], [0, 0, 1, 1], [], []>} : vector<128x128xf32>, vector<128x256xf32>, vector<128x256xf32> -> vector<128x256xf32>
    %43 = arith.addf %39, %42 : vector<128x256xf32>
    %c2_31 = arith.constant 2 : index
    %c0_32 = arith.constant 0 : index
    %c0_33 = arith.constant 0 : index
    %44 = vector.load %arg6[%c2_31, %c0_32, %c0_33] : memref<3x128x256xf32, #tpu.memory_space<vmem>>, vector<1x128x256xf32>
    %45 = vector.shape_cast %44 : vector<1x128x256xf32> to vector<128x256xf32>
    %cst_34 = arith.constant dense<0.000000e+00> : vector<128x256xf32>
    %46 = tpu.matmul %36, %45, %cst_34 {dimension_numbers = #tpu.dot_dimension_numbers<[1], [0], [0], [1], [0, 0, 1, 1], [], []>} : vector<128x128xf32>, vector<128x256xf32>, vector<128x256xf32> -> vector<128x256xf32>
    %47 = arith.addf %43, %46 : vector<128x256xf32>
    %48 = vector.extract_strided_slice %47 {offsets = [0, 0], sizes = [128, 128], strides = [1, 1]} : vector<128x256xf32> to vector<128x128xf32>
    %49 = vector.extract_strided_slice %47 {offsets = [0, 128], sizes = [128, 128], strides = [1, 1]} : vector<128x256xf32> to vector<128x128xf32>
    %50 = arith.maximumf %48, %49 : vector<128x128xf32>
    %c0_35 = arith.constant 0 : index
    %c0_36 = arith.constant 0 : index
    %51 = vector.load %arg7[%c0_35, %c0_36] : memref<1x128xf32, #tpu.memory_space<vmem>>, vector<1x128xf32>
    %52 = vector.broadcast %51 : vector<1x128xf32> to vector<128x128xf32>
    %53 = arith.addf %50, %52 : vector<128x128xf32>
    %cst_37 = arith.constant 0.000000e+00 : f32
    %54 = vector.broadcast %cst_37 : f32 to vector<128x128xf32>
    %55 = arith.maximumf %53, %54 : vector<128x128xf32>
    %c0_38 = arith.constant 0 : index
    %c0_39 = arith.constant 0 : index
    %56 = vector.load %arg8[%c0_38, %c0_39] : memref<56x128xf32, #tpu.memory_space<vmem>>, vector<56x128xf32>
    %cst_40 = arith.constant dense<0.000000e+00> : vector<56x128xf32>
    %57 = tpu.matmul %56, %55, %cst_40 {dimension_numbers = #tpu.dot_dimension_numbers<[1], [0], [0], [1], [0, 0, 1, 1], [], []>} : vector<56x128xf32>, vector<128x128xf32>, vector<56x128xf32> -> vector<56x128xf32>
    %c0_41 = arith.constant 0 : index
    %c0_42 = arith.constant 0 : index
    %58 = vector.load %arg9[%c0_41, %c0_42] : memref<56x128xf32, #tpu.memory_space<vmem>>, vector<56x128xf32>
    %cst_43 = arith.constant dense<0.000000e+00> : vector<56x128xf32>
    %59 = tpu.matmul %58, %55, %cst_43 {dimension_numbers = #tpu.dot_dimension_numbers<[1], [0], [0], [1], [0, 0, 1, 1], [], []>} : vector<56x128xf32>, vector<128x128xf32>, vector<56x128xf32> -> vector<56x128xf32>
    %60 = arith.maximumf %57, %59 : vector<56x128xf32>
    %61 = vector.extract_strided_slice %60 {offsets = [0, 0], sizes = [8, 128], strides = [1, 1]} : vector<56x128xf32> to vector<8x128xf32>
    %62 = vector.extract_strided_slice %60 {offsets = [8, 0], sizes = [8, 128], strides = [1, 1]} : vector<56x128xf32> to vector<8x128xf32>
    %63 = vector.extract_strided_slice %60 {offsets = [16, 0], sizes = [8, 128], strides = [1, 1]} : vector<56x128xf32> to vector<8x128xf32>
    %64 = vector.extract_strided_slice %60 {offsets = [24, 0], sizes = [8, 128], strides = [1, 1]} : vector<56x128xf32> to vector<8x128xf32>
    %65 = vector.extract_strided_slice %60 {offsets = [32, 0], sizes = [8, 128], strides = [1, 1]} : vector<56x128xf32> to vector<8x128xf32>
    %66 = vector.extract_strided_slice %60 {offsets = [40, 0], sizes = [8, 128], strides = [1, 1]} : vector<56x128xf32> to vector<8x128xf32>
    %67 = vector.extract_strided_slice %60 {offsets = [48, 0], sizes = [8, 128], strides = [1, 1]} : vector<56x128xf32> to vector<8x128xf32>
    %68 = tpu.concatenate %61, %62, %63, %64, %65, %66, %67 in 1 : vector<8x128xf32>, vector<8x128xf32>, vector<8x128xf32>, vector<8x128xf32>, vector<8x128xf32>, vector<8x128xf32>, vector<8x128xf32> -> vector<8x896xf32>
    %c0_44 = arith.constant 0 : index
    %c0_45 = arith.constant 0 : index
    %69 = vector.load %arg10[%c0_44, %c0_45] : memref<896x64xf32, #tpu.memory_space<vmem>>, vector<896x64xf32>
    %cst_46 = arith.constant dense<0.000000e+00> : vector<8x64xf32>
    %70 = tpu.matmul %68, %69, %cst_46 {dimension_numbers = #tpu.dot_dimension_numbers<[1], [0], [0], [1], [0, 0, 1, 1], [], []>} : vector<8x896xf32>, vector<896x64xf32>, vector<8x64xf32> -> vector<8x64xf32>
    %c0_47 = arith.constant 0 : index
    %c0_48 = arith.constant 0 : index
    %71 = vector.load %arg11[%c0_47, %c0_48] : memref<1x64xf32, #tpu.memory_space<vmem>>, vector<1x64xf32>
    %72 = vector.broadcast %71 : vector<1x64xf32> to vector<8x64xf32>
    %73 = arith.addf %70, %72 : vector<8x64xf32>
    %cst_49 = arith.constant 0.000000e+00 : f32
    %74 = vector.broadcast %cst_49 : f32 to vector<8x64xf32>
    %75 = arith.maximumf %73, %74 : vector<8x64xf32>
    %c0_50 = arith.constant 0 : index
    %c0_51 = arith.constant 0 : index
    %76 = vector.load %arg12[%c0_50, %c0_51] : memref<64x128xf32, #tpu.memory_space<vmem>>, vector<64x128xf32>
    %cst_52 = arith.constant dense<0.000000e+00> : vector<8x128xf32>
    %77 = tpu.matmul %75, %76, %cst_52 {dimension_numbers = #tpu.dot_dimension_numbers<[1], [0], [0], [1], [0, 0, 1, 1], [], []>} : vector<8x64xf32>, vector<64x128xf32>, vector<8x128xf32> -> vector<8x128xf32>
    %c0_53 = arith.constant 0 : index
    %c0_54 = arith.constant 0 : index
    %78 = vector.load %arg13[%c0_53, %c0_54] : memref<1x128xf32, #tpu.memory_space<vmem>>, vector<1x128xf32>
    %79 = vector.broadcast %78 : vector<1x128xf32> to vector<8x128xf32>
    %80 = arith.addf %77, %79 : vector<8x128xf32>
    %c0_55 = arith.constant 0 : index
    %c0_56 = arith.constant 0 : index
    %81 = vector.load %arg14[%c0_55, %c0_56] : memref<8x128xf32, #tpu.memory_space<vmem>>, vector<8x128xf32>
    tpu.vector_store %arg14[%c0_55, %c0_56], %80 {strides = array<i32>} : memref<8x128xf32, #tpu.memory_space<vmem>>, vector<8x128xf32>,
    return
  }
  func.func @transform_0(%arg0: i32) -> (i32, i32) {
    %c0_i32 = arith.constant 0 : i32
    %c0_i32_0 = arith.constant 0 : i32
    return %arg0, %c0_i32 : i32, i32
  }
  func.func @transform_1(%arg0: i32) -> (i32, i32, i32) {
    %c0_i32 = arith.constant 0 : i32
    %c0_i32_0 = arith.constant 0 : i32
    %c0_i32_1 = arith.constant 0 : i32
    %c0_i32_2 = arith.constant 0 : i32
    return %c0_i32, %c0_i32_0, %c0_i32_1 : i32, i32, i32
  }
  func.func @transform_2(%arg0: i32) -> (i32, i32) {
    %c0_i32 = arith.constant 0 : i32
    %c0_i32_0 = arith.constant 0 : i32
    %c0_i32_1 = arith.constant 0 : i32
    return %c0_i32, %c0_i32_0 : i32, i32
  }
  func.func @transform_3(%arg0: i32) -> (i32, i32) {
    %c0_i32 = arith.constant 0 : i32
    %c0_i32_0 = arith.constant 0 : i32
    %c0_i32_1 = arith.constant 0 : i32
    return %c0_i32, %c0_i32_0 : i32, i32
  }
  func.func @transform_4(%arg0: i32) -> (i32, i32) {
    %c0_i32 = arith.constant 0 : i32
    %c0_i32_0 = arith.constant 0 : i32
    %c0_i32_1 = arith.constant 0 : i32
    return %c0_i32, %c0_i32_0 : i32, i32
  }
  func.func @transform_5(%arg0: i32) -> (i32, i32, i32) {
    %c0_i32 = arith.constant 0 : i32
    %c0_i32_0 = arith.constant 0 : i32
    %c0_i32_1 = arith.constant 0 : i32
    %c0_i32_2 = arith.constant 0 : i32
    return %c0_i32, %c0_i32_0, %c0_i32_1 : i32, i32, i32
  }
  func.func @transform_6(%arg0: i32) -> (i32, i32) {
    %c0_i32 = arith.constant 0 : i32
    %c0_i32_0 = arith.constant 0 : i32
    %c0_i32_1 = arith.constant 0 : i32
    return %c0_i32, %c0_i32_0 : i32, i32
  }
  func.func @transform_7(%arg0: i32) -> (i32, i32) {
    %c0_i32 = arith.constant 0 : i32
    %c0_i32_0 = arith.constant 0 : i32
    %c0_i32_1 = arith.constant 0 : i32
    return %c0_i32, %c0_i32_0 : i32, i32
  }
  func.func @transform_8(%arg0: i32) -> (i32, i32) {
    %c0_i32 = arith.constant 0 : i32
    %c0_i32_0 = arith.constant 0 : i32
    %c0_i32_1 = arith.constant 0 : i32
    return %c0_i32, %c0_i32_0 : i32, i32
  }
  func.func @transform_9(%arg0: i32) -> (i32, i32) {
    %c0_i32 = arith.constant 0 : i32
    %c0_i32_0 = arith.constant 0 : i32
    %c0_i32_1 = arith.constant 0 : i32
    return %c0_i32, %c0_i32_0 : i32, i32
  }
  func.func @transform_10(%arg0: i32) -> (i32, i32) {
    %c0_i32 = arith.constant 0 : i32
    %c0_i32_0 = arith.constant 0 : i32
    %c0_i32_1 = arith.constant 0 : i32
    return %c0_i32, %c0_i32_0 : i32, i32
  }
  func.func @transform_11(%arg0: i32) -> (i32, i32) {
    %c0_i32 = arith.constant 0 : i32
    %c0_i32_0 = arith.constant 0 : i32
    %c0_i32_1 = arith.constant 0 : i32
    return %c0_i32, %c0_i32_0 : i32, i32
  }
  func.func @transform_12(%arg0: i32) -> (i32, i32) {
    %c0_i32 = arith.constant 0 : i32
    %c0_i32_0 = arith.constant 0 : i32
    %c0_i32_1 = arith.constant 0 : i32
    return %c0_i32, %c0_i32_0 : i32, i32
  }
  func.func @transform_13(%arg0: i32) -> (i32, i32) {
    %c0_i32 = arith.constant 0 : i32
    %c0_i32_0 = arith.constant 0 : i32
    return %arg0, %c0_i32 : i32, i32
  }
}

</mosaic_0001>

<llo_original>
// kernel: digit_classifier_forward.1
$region0: #{digit_classifier_forward.1}
  #allocation0 [shape = 'u32[]', space=smem, size = 0x4, offset = 0x4, fixed_abs, tag = 'smem constant byte address 0x4 - core index']
  #allocation1 [shape = 'u32[144,128]{1,0:T(1,128)}', space=vmem, size = 0x12000, scoped, tag = 'internal scratch']
  %s0 = inlined_call_operand.vmem [shape: f32[240,28], index: 0, kind: input, shape index: {}]
  %s1 = inlined_call_operand.vmem [shape: f32[3,28,256], index: 1, kind: input, shape index: {}]
  %s2 = inlined_call_operand.vmem [shape: f32[1,128], index: 2, kind: input, shape index: {}]
  %s3 = inlined_call_operand.vmem [shape: f32[128,240], index: 3, kind: input, shape index: {}]
  %s4 = inlined_call_operand.vmem [shape: f32[128,240], index: 4, kind: input, shape index: {}]
  %s5 = inlined_call_operand.vmem [shape: f32[3,128,256], index: 5, kind: input, shape index: {}]
  %s6 = inlined_call_operand.vmem [shape: f32[1,128], index: 6, kind: input, shape index: {}]
  %s7 = inlined_call_operand.vmem [shape: f32[56,128], index: 7, kind: input, shape index: {}]
  %s8 = inlined_call_operand.vmem [shape: f32[56,128], index: 8, kind: input, shape index: {}]
  %s9 = inlined_call_operand.vmem [shape: f32[896,64], index: 9, kind: input, shape index: {}]
  %s10 = inlined_call_operand.vmem [shape: f32[1,64], index: 10, kind: input, shape index: {}]
  %s11 = inlined_call_operand.vmem [shape: f32[64,128], index: 11, kind: input, shape index: {}]
  %s12 = inlined_call_operand.vmem [shape: f32[1,128], index: 12, kind: input, shape index: {}]
  %s13 = inlined_call_operand.vmem [shape: f32[8,128], index: 13, kind: output, shape index: {}]
  %s14 = sld [smem:[#allocation0]]
  $region62: #{digit_classifier_forward.1} parent=0
    _
  %s16 = ssub.s32 1, %s14
  %s17 = scalar_select 0, %s16, %s14
  // Predicated region
  $region2: #{digit_classifier_forward.1} parent=0 // pred_check
    _
  $region3: #{digit_classifier_forward.1} parent=0 // pred_check_branch
    %19 = sbr.rel (0) target = $region5
  $region4: #{digit_classifier_forward.1} parent=0 // pred_region
    _
  $region5: #{digit_classifier_forward.1} parent=0 // pred_fallthru
    _
  // Predicated region
  $region6: #{digit_classifier_forward.1} parent=0 // pred_check
    _
  $region7: #{digit_classifier_forward.1} parent=0 // pred_check_branch
    %21 = sbr.rel (0) target = $region9
  $region8: #{digit_classifier_forward.1} parent=0 // pred_region
    _
  $region9: #{digit_classifier_forward.1} parent=0 // pred_fallthru
    _
  // Predicated region
  $region10: #{digit_classifier_forward.1} parent=0 // pred_check
    _
  $region11: #{digit_classifier_forward.1} parent=0 // pred_check_branch
    %23 = sbr.rel (0) target = $region13
  $region12: #{digit_classifier_forward.1} parent=0 // pred_region
    _
  $region13: #{digit_classifier_forward.1} parent=0 // pred_fallthru
    _
  // Predicated region
  $region14: #{digit_classifier_forward.1} parent=0 // pred_check
    _
  $region15: #{digit_classifier_forward.1} parent=0 // pred_check_branch
    %25 = sbr.rel (0) target = $region17
  $region16: #{digit_classifier_forward.1} parent=0 // pred_region
    _
  $region17: #{digit_classifier_forward.1} parent=0 // pred_fallthru
    _
  // Predicated region
  $region18: #{digit_classifier_forward.1} parent=0 // pred_check
    _
  $region19: #{digit_classifier_forward.1} parent=0 // pred_check_branch
    %27 = sbr.rel (0) target = $region21
  $region20: #{digit_classifier_forward.1} parent=0 // pred_region
    _
  $region21: #{digit_classifier_forward.1} parent=0 // pred_fallthru
    _
  // Predicated region
  $region22: #{digit_classifier_forward.1} parent=0 // pred_check
    _
  $region23: #{digit_classifier_forward.1} parent=0 // pred_check_branch
    %29 = sbr.rel (0) target = $region25
  $region24: #{digit_classifier_forward.1} parent=0 // pred_region
    _
  $region25: #{digit_classifier_forward.1} parent=0 // pred_fallthru
    _
  // Predicated region
  $region26: #{digit_classifier_forward.1} parent=0 // pred_check
    _
  $region27: #{digit_classifier_forward.1} parent=0 // pred_check_branch
    %31 = sbr.rel (0) target = $region29
  $region28: #{digit_classifier_forward.1} parent=0 // pred_region
    _
  $region29: #{digit_classifier_forward.1} parent=0 // pred_fallthru
    _
  // Predicated region
  $region30: #{digit_classifier_forward.1} parent=0 // pred_check
    _
  $region31: #{digit_classifier_forward.1} parent=0 // pred_check_branch
    %33 = sbr.rel (0) target = $region33
  $region32: #{digit_classifier_forward.1} parent=0 // pred_region
    _
  $region33: #{digit_classifier_forward.1} parent=0 // pred_fallthru
    _
  // Predicated region
  $region34: #{digit_classifier_forward.1} parent=0 // pred_check
    _
  $region35: #{digit_classifier_forward.1} parent=0 // pred_check_branch
    %35 = sbr.rel (0) target = $region37
  $region36: #{digit_classifier_forward.1} parent=0 // pred_region
    _
  $region37: #{digit_classifier_forward.1} parent=0 // pred_fallthru
    _
  // Predicated region
  $region38: #{digit_classifier_forward.1} parent=0 // pred_check
    _
  $region39: #{digit_classifier_forward.1} parent=0 // pred_check_branch
    %37 = sbr.rel (0) target = $region41
  $region40: #{digit_classifier_forward.1} parent=0 // pred_region
    _
  $region41: #{digit_classifier_forward.1} parent=0 // pred_fallthru
    _
  // Predicated region
  $region42: #{digit_classifier_forward.1} parent=0 // pred_check
    _
  $region43: #{digit_classifier_forward.1} parent=0 // pred_check_branch
    %39 = sbr.rel (0) target = $region45
  $region44: #{digit_classifier_forward.1} parent=0 // pred_region
    _
  $region45: #{digit_classifier_forward.1} parent=0 // pred_fallthru
    _
  // Predicated region
  $region46: #{digit_classifier_forward.1} parent=0 // pred_check
    _
  $region47: #{digit_classifier_forward.1} parent=0 // pred_check_branch
    %41 = sbr.rel (0) target = $region49
  $region48: #{digit_classifier_forward.1} parent=0 // pred_region
    _
  $region49: #{digit_classifier_forward.1} parent=0 // pred_fallthru
    _
  // Predicated region
  $region50: #{digit_classifier_forward.1} parent=0 // pred_check
    _
  $region51: #{digit_classifier_forward.1} parent=0 // pred_check_branch
    %43 = sbr.rel (0) target = $region53
  $region52: #{digit_classifier_forward.1} parent=0 // pred_region
    _
  $region53: #{digit_classifier_forward.1} parent=0 // pred_fallthru
    _
  %v44 = vld [vmem:[%s0] sm:$0xff]
  %v45 = vld [vmem:[%s0 + $0x8] sm:$0xff]
  %v46 = vld [vmem:[%s0 + $0x10] sm:$0xff]
  %v47 = vld [vmem:[%s0 + $0x18] sm:$0xff]
  %v48 = vld [vmem:[%s0 + $0x20] sm:$0xff]
  %v49 = vld [vmem:[%s0 + $0x28] sm:$0xff]
  %v50 = vld [vmem:[%s0 + $0x30] sm:$0xff]
  %v51 = vld [vmem:[%s0 + $0x38] sm:$0xff]
  %v52 = vld [vmem:[%s0 + $0x40] sm:$0xff]
  %v53 = vld [vmem:[%s0 + $0x48] sm:$0xff]
  %v54 = vld [vmem:[%s0 + $0x50] sm:$0xff]
  %v55 = vld [vmem:[%s0 + $0x58] sm:$0xff]
  %v56 = vld [vmem:[%s0 + $0x60] sm:$0xff]
  %v57 = vld [vmem:[%s0 + $0x68] sm:$0xff]
  %v58 = vld [vmem:[%s0 + $0x70] sm:$0xff]
  %v59 = vld [vmem:[%s0 + $0x78] sm:$0xff]
  %v60 = vld [vmem:[%s0 + $0x80] sm:$0xff]
  %v61 = vld [vmem:[%s0 + $0x88] sm:$0xff]
  %v62 = vld [vmem:[%s0 + $0x90] sm:$0xff]
  %v63 = vld [vmem:[%s0 + $0x98] sm:$0xff]
  %v64 = vld [vmem:[%s0 + $0xa0] sm:$0xff]
  %v65 = vld [vmem:[%s0 + $0xa8] sm:$0xff]
  %v66 = vld [vmem:[%s0 + $0xb0] sm:$0xff]
  %v67 = vld [vmem:[%s0 + $0xb8] sm:$0xff]
  %v68 = vld [vmem:[%s0 + $0xc0] sm:$0xff]
  %v69 = vld [vmem:[%s0 + $0xc8] sm:$0xff]
  %v70 = vld [vmem:[%s0 + $0xd0] sm:$0xff]
  %v71 = vld [vmem:[%s0 + $0xd8] sm:$0xff]
  %v72 = vld [vmem:[%s0 + $0xe0] sm:$0xff]
  %v73 = vld [vmem:[%s0 + $0xe8] sm:$0xff]
  %vm104 = vcmask 1040384
  %v105 = vrot.slane %v44, 7
  %v106 = vrot.slane %v45, 7
  %v107 = vsel %vm104, %v105, %v106
  %v108 = vrot.slane %v46, 7
  %v109 = vsel %vm104, %v106, %v108
  %v110 = vrot.slane %v47, 7
  %v111 = vsel %vm104, %v108, %v110
  %v112 = vrot.slane %v48, 7
  %v113 = vsel %vm104, %v110, %v112
  %v114 = vrot.slane %v49, 7
  %v115 = vsel %vm104, %v112, %v114
  %v116 = vrot.slane %v50, 7
  %v117 = vsel %vm104, %v114, %v116
  %v118 = vrot.slane %v51, 7
  %v119 = vsel %vm104, %v116, %v118
  %v120 = vrot.slane %v52, 7
  %v121 = vsel %vm104, %v118, %v120
  %v122 = vrot.slane %v53, 7
  %v123 = vsel %vm104, %v120, %v122
  %v124 = vrot.slane %v54, 7
  %v125 = vsel %vm104, %v122, %v124
  %v126 = vrot.slane %v55, 7
  %v127 = vsel %vm104, %v124, %v126
  %v128 = vrot.slane %v56, 7
  %v129 = vsel %vm104, %v126, %v128
  %v130 = vrot.slane %v57, 7
  %v131 = vsel %vm104, %v128, %v130
  %v132 = vrot.slane %v58, 7
  %v133 = vsel %vm104, %v130, %v132
  %v134 = vrot.slane %v59, 7
  %v135 = vsel %vm104, %v132, %v134
  %v136 = vrot.slane %v60, 7
  %v137 = vsel %vm104, %v134, %v136
  %v138 = vrot.slane %v61, 7
  %v139 = vsel %vm104, %v136, %v138
  %v140 = vrot.slane %v62, 7
  %v141 = vsel %vm104, %v138, %v140
  %v142 = vrot.slane %v63, 7
  %v143 = vsel %vm104, %v140, %v142
  %v144 = vrot.slane %v64, 7
  %v145 = vsel %vm104, %v142, %v144
  %v146 = vrot.slane %v65, 7
  %v147 = vsel %vm104, %v144, %v146
  %v148 = vrot.slane %v66, 7
  %v149 = vsel %vm104, %v146, %v148
  %v150 = vrot.slane %v67, 7
  %v151 = vsel %vm104, %v148, %v150
  %v152 = vrot.slane %v68, 7
  %v153 = vsel %vm104, %v150, %v152
  %v154 = vrot.slane %v69, 7
  %v155 = vsel %vm104, %v152, %v154
  %v156 = vrot.slane %v70, 7
  %v157 = vsel %vm104, %v154, %v156
  %v158 = vrot.slane %v71, 7
  %v159 = vsel %vm104, %v156, %v158
  %v160 = vrot.slane %v72, 7
  %v161 = vsel %vm104, %v158, %v160
  %v162 = vrot.slane %v73, 7
  %v163 = vsel %vm104, %v160, %v162
  %v165 = vsel %vm104, 0.0, %v105
  %vm166 = vcmask 1046528
  %v167 = vrot.slane %v44, 1
  %v168 = vrot.slane %v45, 1
  %v169 = vsel %vm166, %v167, %v168
  %v170 = vrot.slane %v46, 1
  %v171 = vsel %vm166, %v168, %v170
  %v172 = vrot.slane %v47, 1
  %v173 = vsel %vm166, %v170, %v172
  %v174 = vrot.slane %v48, 1
  %v175 = vsel %vm166, %v172, %v174
  %v176 = vrot.slane %v49, 1
  %v177 = vsel %vm166, %v174, %v176
  %v178 = vrot.slane %v50, 1
  %v179 = vsel %vm166, %v176, %v178
  %v180 = vrot.slane %v51, 1
  %v181 = vsel %vm166, %v178, %v180
  %v182 = vrot.slane %v52, 1
  %v183 = vsel %vm166, %v180, %v182
  %v184 = vrot.slane %v53, 1
  %v185 = vsel %vm166, %v182, %v184
  %v186 = vrot.slane %v54, 1
  %v187 = vsel %vm166, %v184, %v186
  %v188 = vrot.slane %v55, 1
  %v189 = vsel %vm166, %v186, %v188
  %v190 = vrot.slane %v56, 1
  %v191 = vsel %vm166, %v188, %v190
  %v192 = vrot.slane %v57, 1
  %v193 = vsel %vm166, %v190, %v192
  %v194 = vrot.slane %v58, 1
  %v195 = vsel %vm166, %v192, %v194
  %v196 = vrot.slane %v59, 1
  %v197 = vsel %vm166, %v194, %v196
  %v198 = vrot.slane %v60, 1
  %v199 = vsel %vm166, %v196, %v198
  %v200 = vrot.slane %v61, 1
  %v201 = vsel %vm166, %v198, %v200
  %v202 = vrot.slane %v62, 1
  %v203 = vsel %vm166, %v200, %v202
  %v204 = vrot.slane %v63, 1
  %v205 = vsel %vm166, %v202, %v204
  %v206 = vrot.slane %v64, 1
  %v207 = vsel %vm166, %v204, %v206
  %v208 = vrot.slane %v65, 1
  %v209 = vsel %vm166, %v206, %v208
  %v210 = vrot.slane %v66, 1
  %v211 = vsel %vm166, %v208, %v210
  %v212 = vrot.slane %v67, 1
  %v213 = vsel %vm166, %v210, %v212
  %v214 = vrot.slane %v68, 1
  %v215 = vsel %vm166, %v212, %v214
  %v216 = vrot.slane %v69, 1
  %v217 = vsel %vm166, %v214, %v216
  %v218 = vrot.slane %v70, 1
  %v219 = vsel %vm166, %v216, %v218
  %v220 = vrot.slane %v71, 1
  %v221 = vsel %vm166, %v218, %v220
  %v222 = vrot.slane %v72, 1
  %v223 = vsel %vm166, %v220, %v222
  %v224 = vrot.slane %v73, 1
  %v225 = vsel %vm166, %v222, %v224
  %v227 = vsel %vm166, %v224, 0.0
  %v228 = vld [vmem:[%s1] sm:$0xff]
  %v229 = vld [vmem:[%s1 + $0x8] sm:$0xff]
  %v230 = vld [vmem:[%s1 + $0x10] sm:$0xff]
  %v231 = vld [vmem:[%s1 + $0x18] sm:$0xff]
  %v232 = vld [vmem:[%s1 + $0x20] sm:$0xff]
  %v233 = vld [vmem:[%s1 + $0x28] sm:$0xff]
  %v234 = vld [vmem:[%s1 + $0x30] sm:$0xf]
  %v235 = vld [vmem:[%s1 + $0x38] sm:$0xf]
  %s236 = scalar_lea.vmem %s1, 64
  %v237 = vld [vmem:[%s236] sm:$0xff]
  %v238 = vld [vmem:[%s236 + $0x8] sm:$0xff]
  %v239 = vld [vmem:[%s236 + $0x10] sm:$0xff]
  %v240 = vld [vmem:[%s236 + $0x18] sm:$0xff]
  %v241 = vld [vmem:[%s236 + $0x20] sm:$0xff]
  %v242 = vld [vmem:[%s236 + $0x28] sm:$0xff]
  %v243 = vld [vmem:[%s236 + $0x30] sm:$0xf]
  %v244 = vld [vmem:[%s236 + $0x38] sm:$0xf]
  %vm245 = vcmask 228352
  %v246 = vsel %vm245, %v44, 0
  %v248 = vsel %vm245, %v45, 0
  %v250 = vsel %vm245, %v46, 0
  %v252 = vsel %vm245, %v47, 0
  %v254 = vsel %vm245, %v48, 0
  %v256 = vsel %vm245, %v49, 0
  %v258 = vsel %vm245, %v50, 0
  %v260 = vsel %vm245, %v51, 0
  %v262 = vsel %vm245, %v52, 0
  %v264 = vsel %vm245, %v53, 0
  %v266 = vsel %vm245, %v54, 0
  %v268 = vsel %vm245, %v55, 0
  %v270 = vsel %vm245, %v56, 0
  %v272 = vsel %vm245, %v57, 0
  %v274 = vsel %vm245, %v58, 0
  %v276 = vsel %vm245, %v59, 0
  %v278 = vsel %vm245, %v60, 0
  %v280 = vsel %vm245, %v61, 0
  %v282 = vsel %vm245, %v62, 0
  %v284 = vsel %vm245, %v63, 0
  %v286 = vsel %vm245, %v64, 0
  %v288 = vsel %vm245, %v65, 0
  %v290 = vsel %vm245, %v66, 0
  %v292 = vsel %vm245, %v67, 0
  %v294 = vsel %vm245, %v68, 0
  %v296 = vsel %vm245, %v69, 0
  %v298 = vsel %vm245, %v70, 0
  %v300 = vsel %vm245, %v71, 0
  %v302 = vsel %vm245, %v72, 0
  %v304 = vsel %vm245, %v73, 0
  %vm306 = vcmask 1043456
  %v308 = vsel %vm306, %v243, 0
  %v311 = vsel %vm306, %v244, 0
  %313 = vmatprep.subr.mxu0 0.0
  %314 = vmatpush1.msra.mxu0 0.0
  %315 = vmatprep.subr.mxu0 0.0
  %316 = vmatpush1.msra.mxu0 0.0
  %317 = vmatprep.subr.mxu0 0.0
  %318 = vmatpush1.msra.mxu0 0.0
  %319 = vmatprep.subr.mxu0 0.0
  %320 = vmatpush1.msra.mxu0 0.0
  %321 = vmatprep.subr.mxu0 0.0
  %322 = vmatpush1.msra.mxu0 0.0
  %323 = vmatprep.subr.mxu0 0.0
  %324 = vmatpush1.msra.mxu0 0.0
  %325 = vmatprep.subr.mxu0 0.0
  %326 = vmatpush1.msra.mxu0 0.0
  %327 = vmatprep.subr.mxu0 0.0
  %328 = vmatpush1.msra.mxu0 0.0
  %329 = vmatprep.subr.mxu0 0.0
  %330 = vmatpush1.msra.mxu0 0.0
  %331 = vmatprep.subr.mxu0 0.0
  %332 = vmatpush1.msra.mxu0 0.0
  %333 = vmatprep.subr.mxu0 0.0
  %334 = vmatpush1.msra.mxu0 0.0
  %335 = vmatprep.subr.mxu0 0.0
  %336 = vmatpush1.msra.mxu0 0.0
  %337 = vmatprep.subr.mxu0 %v311
  %338 = vmatpush1.msra.mxu0 %v308
  %339 = vmatprep.subr.mxu0 %v242
  %340 = vmatpush1.msra.mxu0 %v241
  %341 = vmatprep.subr.mxu0 %v240
  %342 = vmatpush1.msra.mxu0 %v239
  %343 = vmatprep.subr.mxu0 %v238
  %344 = vmatpush1.msra.mxu0 %v237
  %345 = vmatprep.subr.mxu0 0.0
  %346 = vmatpush2.msra.mxu0 0.0
  %347 = vmatprep.subr.mxu0 0.0
  %348 = vmatpush2.msra.mxu0 0.0
  %349 = vmatprep.subr.mxu0 0.0
  %350 = vmatpush2.msra.mxu0 0.0
  %351 = vmatprep.subr.mxu0 0.0
  %352 = vmatpush2.msra.mxu0 0.0
  %353 = vmatprep.subr.mxu0 0.0
  %354 = vmatpush2.msra.mxu0 0.0
  %355 = vmatprep.subr.mxu0 0.0
  %356 = vmatpush2.msra.mxu0 0.0
  %357 = vmatprep.subr.mxu0 0.0
  %358 = vmatpush2.msra.mxu0 0.0
  %359 = vmatprep.subr.mxu0 0.0
  %360 = vmatpush2.msra.mxu0 0.0
  %361 = vmatprep.subr.mxu0 0.0
  %362 = vmatpush2.msra.mxu0 0.0
  %363 = vmatprep.subr.mxu0 0.0
  %364 = vmatpush2.msra.mxu0 0.0
  %365 = vmatprep.subr.mxu0 0.0
  %366 = vmatpush2.msra.mxu0 0.0
  %367 = vmatprep.subr.mxu0 0.0
  %368 = vmatpush2.msra.mxu0 0.0
  %369 = vmatprep.subr.mxu0 0.0
  %370 = vmatpush2.msra.mxu0 0.0
  %371 = vmatprep.subr.mxu0 0.0
  %372 = vmatpush2.msra.mxu0 0.0
  %373 = vmatprep.subr.mxu0 0.0
  %374 = vmatpush2.msra.mxu0 0.0
  %375 = vmatprep.subr.mxu0 0.0
  %376 = vmatpush2.msra.mxu0 0.0
  %377 = vmatprep.mubr.f32.mxu0 0.0
  %378 = vmatmul.mubr.f32.gmra.mxu0 %v246
  %v379 = vpop.f32.mrf.mxu0
  %v380 = vadd.f32 0.0, %v379
  %v381 = vpop.f32.mrf.mxu0
  %v382 = vadd.f32 0.0, %v381
  %383 = vmatprep.mubr.f32.mxu0 0.0
  %384 = vmatmul.mubr.f32.gmra.mxu0 %v248
  %v385 = vpop.f32.mrf.mxu0
  %v386 = vadd.f32 0.0, %v385
  %v387 = vpop.f32.mrf.mxu0
  %v388 = vadd.f32 0.0, %v387
  %389 = vmatprep.mubr.f32.mxu0 0.0
  %390 = vmatmul.mubr.f32.gmra.mxu0 %v250
  %v391 = vpop.f32.mrf.mxu0
  %v392 = vadd.f32 0.0, %v391
  %v393 = vpop.f32.mrf.mxu0
  %v394 = vadd.f32 0.0, %v393
  %395 = vmatprep.mubr.f32.mxu0 0.0
  %396 = vmatmul.mubr.f32.gmra.mxu0 %v252
  %v397 = vpop.f32.mrf.mxu0
  %v398 = vadd.f32 0.0, %v397
  %v399 = vpop.f32.mrf.mxu0
  %v400 = vadd.f32 0.0, %v399
  %401 = vmatprep.mubr.f32.mxu0 0.0
  %402 = vmatmul.mubr.f32.gmra.mxu0 %v254
  %v403 = vpop.f32.mrf.mxu0
  %v404 = vadd.f32 0.0, %v403
  %v405 = vpop.f32.mrf.mxu0
  %v406 = vadd.f32 0.0, %v405
  %407 = vmatprep.mubr.f32.mxu0 0.0
  %408 = vmatmul.mubr.f32.gmra.mxu0 %v256
  %v409 = vpop.f32.mrf.mxu0
  %v410 = vadd.f32 0.0, %v409
  %v411 = vpop.f32.mrf.mxu0
  %v412 = vadd.f32 0.0, %v411
  %413 = vmatprep.mubr.f32.mxu0 0.0
  %414 = vmatmul.mubr.f32.gmra.mxu0 %v258
  %v415 = vpop.f32.mrf.mxu0
  %v416 = vadd.f32 0.0, %v415
  %v417 = vpop.f32.mrf.mxu0
  %v418 = vadd.f32 0.0, %v417
  %419 = vmatprep.mubr.f32.mxu0 0.0
  %420 = vmatmul.mubr.f32.gmra.mxu0 %v260
  %v421 = vpop.f32.mrf.mxu0
  %v422 = vadd.f32 0.0, %v421
  %v423 = vpop.f32.mrf.mxu0
  %v424 = vadd.f32 0.0, %v423
  %425 = vmatprep.mubr.f32.mxu0 0.0
  %426 = vmatmul.mubr.f32.gmra.mxu0 %v262
  %v427 = vpop.f32.mrf.mxu0
  %v428 = vadd.f32 0.0, %v427
  %v429 = vpop.f32.mrf.mxu0
  %v430 = vadd.f32 0.0, %v429
  %431 = vmatprep.mubr.f32.mxu0 0.0
  %432 = vmatmul.mubr.f32.gmra.mxu0 %v264
  %v433 = vpop.f32.mrf.mxu0
  %v434 = vadd.f32 0.0, %v433
  %v435 = vpop.f32.mrf.mxu0
  %v436 = vadd.f32 0.0, %v435
  %437 = vmatprep.mubr.f32.mxu0 0.0
  %438 = vmatmul.mubr.f32.gmra.mxu0 %v266
  %v439 = vpop.f32.mrf.mxu0
  %v440 = vadd.f32 0.0, %v439
  %v441 = vpop.f32.mrf.mxu0
  %v442 = vadd.f32 0.0, %v441
  %443 = vmatprep.mubr.f32.mxu0 0.0
  %444 = vmatmul.mubr.f32.gmra.mxu0 %v268
  %v445 = vpop.f32.mrf.mxu0
  %v446 = vadd.f32 0.0, %v445
  %v447 = vpop.f32.mrf.mxu0
  %v448 = vadd.f32 0.0, %v447
  %449 = vmatprep.mubr.f32.mxu0 0.0
  %450 = vmatmul.mubr.f32.gmra.mxu0 %v270
  %v451 = vpop.f32.mrf.mxu0
  %v452 = vadd.f32 0.0, %v451
  %v453 = vpop.f32.mrf.mxu0
  %v454 = vadd.f32 0.0, %v453
  %455 = vmatprep.mubr.f32.mxu0 0.0
  %456 = vmatmul.mubr.f32.gmra.mxu0 %v272
  %v457 = vpop.f32.mrf.mxu0
  %v458 = vadd.f32 0.0, %v457
  %v459 = vpop.f32.mrf.mxu0
  %v460 = vadd.f32 0.0, %v459
  %461 = vmatprep.mubr.f32.mxu0 0.0
  %462 = vmatmul.mubr.f32.gmra.mxu0 %v274
  %v463 = vpop.f32.mrf.mxu0
  %v464 = vadd.f32 0.0, %v463
  %v465 = vpop.f32.mrf.mxu0
  %v466 = vadd.f32 0.0, %v465
  %467 = vmatprep.mubr.f32.mxu0 0.0
  %468 = vmatmul.mubr.f32.gmra.mxu0 %v276
  %v469 = vpop.f32.mrf.mxu0
  %v470 = vadd.f32 0.0, %v469
  %v471 = vpop.f32.mrf.mxu0
  %v472 = vadd.f32 0.0, %v471
  %473 = vmatprep.mubr.f32.mxu0 0.0
  %474 = vmatmul.mubr.f32.gmra.mxu0 %v278
  %v475 = vpop.f32.mrf.mxu0
  %v476 = vadd.f32 0.0, %v475
  %v477 = vpop.f32.mrf.mxu0
  %v478 = vadd.f32 0.0, %v477
  %479 = vmatprep.mubr.f32.mxu0 0.0
  %480 = vmatmul.mubr.f32.gmra.mxu0 %v280
  %v481 = vpop.f32.mrf.mxu0
  %v482 = vadd.f32 0.0, %v481
  %v483 = vpop.f32.mrf.mxu0
  %v484 = vadd.f32 0.0, %v483
  %485 = vmatprep.mubr.f32.mxu0 0.0
  %486 = vmatmul.mubr.f32.gmra.mxu0 %v282
  %v487 = vpop.f32.mrf.mxu0
  %v488 = vadd.f32 0.0, %v487
  %v489 = vpop.f32.mrf.mxu0
  %v490 = vadd.f32 0.0, %v489
  %491 = vmatprep.mubr.f32.mxu0 0.0
  %492 = vmatmul.mubr.f32.gmra.mxu0 %v284
  %v493 = vpop.f32.mrf.mxu0
  %v494 = vadd.f32 0.0, %v493
  %v495 = vpop.f32.mrf.mxu0
  %v496 = vadd.f32 0.0, %v495
  %497 = vmatprep.mubr.f32.mxu0 0.0
  %498 = vmatmul.mubr.f32.gmra.mxu0 %v286
  %v499 = vpop.f32.mrf.mxu0
  %v500 = vadd.f32 0.0, %v499
  %v501 = vpop.f32.mrf.mxu0
  %v502 = vadd.f32 0.0, %v501
  %503 = vmatprep.mubr.f32.mxu0 0.0
  %504 = vmatmul.mubr.f32.gmra.mxu0 %v288
  %v505 = vpop.f32.mrf.mxu0
  %v506 = vadd.f32 0.0, %v505
  %v507 = vpop.f32.mrf.mxu0
  %v508 = vadd.f32 0.0, %v507
  %509 = vmatprep.mubr.f32.mxu0 0.0
  %510 = vmatmul.mubr.f32.gmra.mxu0 %v290
  %v511 = vpop.f32.mrf.mxu0
  %v512 = vadd.f32 0.0, %v511
  %v513 = vpop.f32.mrf.mxu0
  %v514 = vadd.f32 0.0, %v513
  %515 = vmatprep.mubr.f32.mxu0 0.0
  %516 = vmatmul.mubr.f32.gmra.mxu0 %v292
  %v517 = vpop.f32.mrf.mxu0
  %v518 = vadd.f32 0.0, %v517
  %v519 = vpop.f32.mrf.mxu0
  %v520 = vadd.f32 0.0, %v519
  %521 = vmatprep.mubr.f32.mxu0 0.0
  %522 = vmatmul.mubr.f32.gmra.mxu0 %v294
  %v523 = vpop.f32.mrf.mxu0
  %v524 = vadd.f32 0.0, %v523
  %v525 = vpop.f32.mrf.mxu0
  %v526 = vadd.f32 0.0, %v525
  %527 = vmatprep.mubr.f32.mxu0 0.0
  %528 = vmatmul.mubr.f32.gmra.mxu0 %v296
  %v529 = vpop.f32.mrf.mxu0
  %v530 = vadd.f32 0.0, %v529
  %v531 = vpop.f32.mrf.mxu0
  %v532 = vadd.f32 0.0, %v531
  %533 = vmatprep.mubr.f32.mxu0 0.0
  %534 = vmatmul.mubr.f32.gmra.mxu0 %v298
  %v535 = vpop.f32.mrf.mxu0
  %v536 = vadd.f32 0.0, %v535
  %v537 = vpop.f32.mrf.mxu0
  %v538 = vadd.f32 0.0, %v537
  %539 = vmatprep.mubr.f32.mxu0 0.0
  %540 = vmatmul.mubr.f32.gmra.mxu0 %v300
  %v541 = vpop.f32.mrf.mxu0
  %v542 = vadd.f32 0.0, %v541
  %v543 = vpop.f32.mrf.mxu0
  %v544 = vadd.f32 0.0, %v543
  %545 = vmatprep.mubr.f32.mxu0 0.0
  %546 = vmatmul.mubr.f32.gmra.mxu0 %v302
  %v547 = vpop.f32.mrf.mxu0
  %v548 = vadd.f32 0.0, %v547
  %v549 = vpop.f32.mrf.mxu0
  %v550 = vadd.f32 0.0, %v549
  %551 = vmatprep.mubr.f32.mxu0 0.0
  %552 = vmatmul.mubr.f32.gmra.mxu0 %v304
  %v553 = vpop.f32.mrf.mxu0
  %v554 = vadd.f32 0.0, %v553
  %v555 = vpop.f32.mrf.mxu0
  %v556 = vadd.f32 0.0, %v555
  %557 = vdwg.mxu0
  %v559 = vsel %vm245, %v165, 0
  %v561 = vsel %vm245, %v107, 0
  %v563 = vsel %vm245, %v109, 0
  %v565 = vsel %vm245, %v111, 0
  %v567 = vsel %vm245, %v113, 0
  %v569 = vsel %vm245, %v115, 0
  %v571 = vsel %vm245, %v117, 0
  %v573 = vsel %vm245, %v119, 0
  %v575 = vsel %vm245, %v121, 0
  %v577 = vsel %vm245, %v123, 0
  %v579 = vsel %vm245, %v125, 0
  %v581 = vsel %vm245, %v127, 0
  %v583 = vsel %vm245, %v129, 0
  %v585 = vsel %vm245, %v131, 0
  %v587 = vsel %vm245, %v133, 0
  %v589 = vsel %vm245, %v135, 0
  %v591 = vsel %vm245, %v137, 0
  %v593 = vsel %vm245, %v139, 0
  %v595 = vsel %vm245, %v141, 0
  %v597 = vsel %vm245, %v143, 0
  %v599 = vsel %vm245, %v145, 0
  %v601 = vsel %vm245, %v147, 0
  %v603 = vsel %vm245, %v149, 0
  %v605 = vsel %vm245, %v151, 0
  %v607 = vsel %vm245, %v153, 0
  %v609 = vsel %vm245, %v155, 0
  %v611 = vsel %vm245, %v157, 0
  %v613 = vsel %vm245, %v159, 0
  %v615 = vsel %vm245, %v161, 0
  %v617 = vsel %vm245, %v163, 0
  %v620 = vsel %vm306, %v234, 0
  %v623 = vsel %vm306, %v235, 0
  %625 = vmatprep.subr.mxu0 0.0
  %626 = vmatpush1.msra.mxu0 0.0
  %627 = vmatprep.subr.mxu0 0.0
  %628 = vmatpush1.msra.mxu0 0.0
  %629 = vmatprep.subr.mxu0 0.0
  %630 = vmatpush1.msra.mxu0 0.0
  %631 = vmatprep.subr.mxu0 0.0
  %632 = vmatpush1.msra.mxu0 0.0
  %633 = vmatprep.subr.mxu0 0.0
  %634 = vmatpush1.msra.mxu0 0.0
  %635 = vmatprep.subr.mxu0 0.0
  %636 = vmatpush1.msra.mxu0 0.0
  %637 = vmatprep.subr.mxu0 0.0
  %638 = vmatpush1.msra.mxu0 0.0
  %639 = vmatprep.subr.mxu0 0.0
  %640 = vmatpush1.msra.mxu0 0.0
  %641 = vmatprep.subr.mxu0 0.0
  %642 = vmatpush1.msra.mxu0 0.0
  %643 = vmatprep.subr.mxu0 0.0
  %644 = vmatpush1.msra.mxu0 0.0
  %645 = vmatprep.subr.mxu0 0.0
  %646 = vmatpush1.msra.mxu0 0.0
  %647 = vmatprep.subr.mxu0 0.0
  %648 = vmatpush1.msra.mxu0 0.0
  %649 = vmatprep.subr.mxu0 %v623
  %650 = vmatpush1.msra.mxu0 %v620
  %651 = vmatprep.subr.mxu0 %v233
  %652 = vmatpush1.msra.mxu0 %v232
  %653 = vmatprep.subr.mxu0 %v231
  %654 = vmatpush1.msra.mxu0 %v230
  %655 = vmatprep.subr.mxu0 %v229
  %656 = vmatpush1.msra.mxu0 %v228
  %657 = vmatprep.subr.mxu0 0.0
  %658 = vmatpush2.msra.mxu0 0.0
  %659 = vmatprep.subr.mxu0 0.0
  %660 = vmatpush2.msra.mxu0 0.0
  %661 = vmatprep.subr.mxu0 0.0
  %662 = vmatpush2.msra.mxu0 0.0
  %663 = vmatprep.subr.mxu0 0.0
  %664 = vmatpush2.msra.mxu0 0.0
  %665 = vmatprep.subr.mxu0 0.0
  %666 = vmatpush2.msra.mxu0 0.0
  %667 = vmatprep.subr.mxu0 0.0
  %668 = vmatpush2.msra.mxu0 0.0
  %669 = vmatprep.subr.mxu0 0.0
  %670 = vmatpush2.msra.mxu0 0.0
  %671 = vmatprep.subr.mxu0 0.0
  %672 = vmatpush2.msra.mxu0 0.0
  %673 = vmatprep.subr.mxu0 0.0
  %674 = vmatpush2.msra.mxu0 0.0
  %675 = vmatprep.subr.mxu0 0.0
  %676 = vmatpush2.msra.mxu0 0.0
  %677 = vmatprep.subr.mxu0 0.0
  %678 = vmatpush2.msra.mxu0 0.0
  %679 = vmatprep.subr.mxu0 0.0
  %680 = vmatpush2.msra.mxu0 0.0
  %681 = vmatprep.subr.mxu0 0.0
  %682 = vmatpush2.msra.mxu0 0.0
  %683 = vmatprep.subr.mxu0 0.0
  %684 = vmatpush2.msra.mxu0 0.0
  %685 = vmatprep.subr.mxu0 0.0
  %686 = vmatpush2.msra.mxu0 0.0
  %687 = vmatprep.subr.mxu0 0.0
  %688 = vmatpush2.msra.mxu0 0.0
  %689 = vmatprep.mubr.f32.mxu0 0.0
  %690 = vmatmul.mubr.f32.gmra.mxu0 %v559
  %v691 = vpop.f32.mrf.mxu0
  %v692 = vadd.f32 %v380, %v691
  %v693 = vpop.f32.mrf.mxu0
  %v694 = vadd.f32 %v382, %v693
  %695 = vmatprep.mubr.f32.mxu0 0.0
  %696 = vmatmul.mubr.f32.gmra.mxu0 %v561
  %v697 = vpop.f32.mrf.mxu0
  %v698 = vadd.f32 %v386, %v697
  %v699 = vpop.f32.mrf.mxu0
  %v700 = vadd.f32 %v388, %v699
  %701 = vmatprep.mubr.f32.mxu0 0.0
  %702 = vmatmul.mubr.f32.gmra.mxu0 %v563
  %v703 = vpop.f32.mrf.mxu0
  %v704 = vadd.f32 %v392, %v703
  %v705 = vpop.f32.mrf.mxu0
  %v706 = vadd.f32 %v394, %v705
  %707 = vmatprep.mubr.f32.mxu0 0.0
  %708 = vmatmul.mubr.f32.gmra.mxu0 %v565
  %v709 = vpop.f32.mrf.mxu0
  %v710 = vadd.f32 %v398, %v709
  %v711 = vpop.f32.mrf.mxu0
  %v712 = vadd.f32 %v400, %v711
  %713 = vmatprep.mubr.f32.mxu0 0.0
  %714 = vmatmul.mubr.f32.gmra.mxu0 %v567
  %v715 = vpop.f32.mrf.mxu0
  %v716 = vadd.f32 %v404, %v715
  %v717 = vpop.f32.mrf.mxu0
  %v718 = vadd.f32 %v406, %v717
  %719 = vmatprep.mubr.f32.mxu0 0.0
  %720 = vmatmul.mubr.f32.gmra.mxu0 %v569
  %v721 = vpop.f32.mrf.mxu0
  %v722 = vadd.f32 %v410, %v721
  %v723 = vpop.f32.mrf.mxu0
  %v724 = vadd.f32 %v412, %v723
  %725 = vmatprep.mubr.f32.mxu0 0.0
  %726 = vmatmul.mubr.f32.gmra.mxu0 %v571
  %v727 = vpop.f32.mrf.mxu0
  %v728 = vadd.f32 %v416, %v727
  %v729 = vpop.f32.mrf.mxu0
  %v730 = vadd.f32 %v418, %v729
  %731 = vmatprep.mubr.f32.mxu0 0.0
  %732 = vmatmul.mubr.f32.gmra.mxu0 %v573
  %v733 = vpop.f32.mrf.mxu0
  %v734 = vadd.f32 %v422, %v733
  %v735 = vpop.f32.mrf.mxu0
  %v736 = vadd.f32 %v424, %v735
  %737 = vmatprep.mubr.f32.mxu0 0.0
  %738 = vmatmul.mubr.f32.gmra.mxu0 %v575
  %v739 = vpop.f32.mrf.mxu0
  %v740 = vadd.f32 %v428, %v739
  %v741 = vpop.f32.mrf.mxu0
  %v742 = vadd.f32 %v430, %v741
  %743 = vmatprep.mubr.f32.mxu0 0.0
  %744 = vmatmul.mubr.f32.gmra.mxu0 %v577
  %v745 = vpop.f32.mrf.mxu0
  %v746 = vadd.f32 %v434, %v745
  %v747 = vpop.f32.mrf.mxu0
  %v748 = vadd.f32 %v436, %v747
  %749 = vmatprep.mubr.f32.mxu0 0.0
  %750 = vmatmul.mubr.f32.gmra.mxu0 %v579
  %v751 = vpop.f32.mrf.mxu0
  %v752 = vadd.f32 %v440, %v751
  %v753 = vpop.f32.mrf.mxu0
  %v754 = vadd.f32 %v442, %v753
  %755 = vmatprep.mubr.f32.mxu0 0.0
  %756 = vmatmul.mubr.f32.gmra.mxu0 %v581
  %v757 = vpop.f32.mrf.mxu0
  %v758 = vadd.f32 %v446, %v757
  %v759 = vpop.f32.mrf.mxu0
  %v760 = vadd.f32 %v448, %v759
  %761 = vmatprep.mubr.f32.mxu0 0.0
  %762 = vmatmul.mubr.f32.gmra.mxu0 %v583
  %v763 = vpop.f32.mrf.mxu0
  %v764 = vadd.f32 %v452, %v763
  %v765 = vpop.f32.mrf.mxu0
  %v766 = vadd.f32 %v454, %v765
  %767 = vmatprep.mubr.f32.mxu0 0.0
  %768 = vmatmul.mubr.f32.gmra.mxu0 %v585
  %v769 = vpop.f32.mrf.mxu0
  %v770 = vadd.f32 %v458, %v769
  %v771 = vpop.f32.mrf.mxu0
  %v772 = vadd.f32 %v460, %v771
  %773 = vmatprep.mubr.f32.mxu0 0.0
  %774 = vmatmul.mubr.f32.gmra.mxu0 %v587
  %v775 = vpop.f32.mrf.mxu0
  %v776 = vadd.f32 %v464, %v775
  %v777 = vpop.f32.mrf.mxu0
  %v778 = vadd.f32 %v466, %v777
  %779 = vmatprep.mubr.f32.mxu0 0.0
  %780 = vmatmul.mubr.f32.gmra.mxu0 %v589
  %v781 = vpop.f32.mrf.mxu0
  %v782 = vadd.f32 %v470, %v781
  %v783 = vpop.f32.mrf.mxu0
  %v784 = vadd.f32 %v472, %v783
  %785 = vmatprep.mubr.f32.mxu0 0.0
  %786 = vmatmul.mubr.f32.gmra.mxu0 %v591
  %v787 = vpop.f32.mrf.mxu0
  %v788 = vadd.f32 %v476, %v787
  %v789 = vpop.f32.mrf.mxu0
  %v790 = vadd.f32 %v478, %v789
  %791 = vmatprep.mubr.f32.mxu0 0.0
  %792 = vmatmul.mubr.f32.gmra.mxu0 %v593
  %v793 = vpop.f32.mrf.mxu0
  %v794 = vadd.f32 %v482, %v793
  %v795 = vpop.f32.mrf.mxu0
  %v796 = vadd.f32 %v484, %v795
  %797 = vmatprep.mubr.f32.mxu0 0.0
  %798 = vmatmul.mubr.f32.gmra.mxu0 %v595
  %v799 = vpop.f32.mrf.mxu0
  %v800 = vadd.f32 %v488, %v799
  %v801 = vpop.f32.mrf.mxu0
  %v802 = vadd.f32 %v490, %v801
  %803 = vmatprep.mubr.f32.mxu0 0.0
  %804 = vmatmul.mubr.f32.gmra.mxu0 %v597
  %v805 = vpop.f32.mrf.mxu0
  %v806 = vadd.f32 %v494, %v805
  %v807 = vpop.f32.mrf.mxu0
  %v808 = vadd.f32 %v496, %v807
  %809 = vmatprep.mubr.f32.mxu0 0.0
  %810 = vmatmul.mubr.f32.gmra.mxu0 %v599
  %v811 = vpop.f32.mrf.mxu0
  %v812 = vadd.f32 %v500, %v811
  %v813 = vpop.f32.mrf.mxu0
  %v814 = vadd.f32 %v502, %v813
  %815 = vmatprep.mubr.f32.mxu0 0.0
  %816 = vmatmul.mubr.f32.gmra.mxu0 %v601
  %v817 = vpop.f32.mrf.mxu0
  %v818 = vadd.f32 %v506, %v817
  %v819 = vpop.f32.mrf.mxu0
  %v820 = vadd.f32 %v508, %v819
  %821 = vmatprep.mubr.f32.mxu0 0.0
  %822 = vmatmul.mubr.f32.gmra.mxu0 %v603
  %v823 = vpop.f32.mrf.mxu0
  %v824 = vadd.f32 %v512, %v823
  %v825 = vpop.f32.mrf.mxu0
  %v826 = vadd.f32 %v514, %v825
  %827 = vmatprep.mubr.f32.mxu0 0.0
  %828 = vmatmul.mubr.f32.gmra.mxu0 %v605
  %v829 = vpop.f32.mrf.mxu0
  %v830 = vadd.f32 %v518, %v829
  %v831 = vpop.f32.mrf.mxu0
  %v832 = vadd.f32 %v520, %v831
  %833 = vmatprep.mubr.f32.mxu0 0.0
  %834 = vmatmul.mubr.f32.gmra.mxu0 %v607
  %v835 = vpop.f32.mrf.mxu0
  %v836 = vadd.f32 %v524, %v835
  %v837 = vpop.f32.mrf.mxu0
  %v838 = vadd.f32 %v526, %v837
  %839 = vmatprep.mubr.f32.mxu0 0.0
  %840 = vmatmul.mubr.f32.gmra.mxu0 %v609
  %v841 = vpop.f32.mrf.mxu0
  %v842 = vadd.f32 %v530, %v841
  %v843 = vpop.f32.mrf.mxu0
  %v844 = vadd.f32 %v532, %v843
  %845 = vmatprep.mubr.f32.mxu0 0.0
  %846 = vmatmul.mubr.f32.gmra.mxu0 %v611
  %v847 = vpop.f32.mrf.mxu0
  %v848 = vadd.f32 %v536, %v847
  %v849 = vpop.f32.mrf.mxu0
  %v850 = vadd.f32 %v538, %v849
  %851 = vmatprep.mubr.f32.mxu0 0.0
  %852 = vmatmul.mubr.f32.gmra.mxu0 %v613
  %v853 = vpop.f32.mrf.mxu0
  %v854 = vadd.f32 %v542, %v853
  %v855 = vpop.f32.mrf.mxu0
  %v856 = vadd.f32 %v544, %v855
  %857 = vmatprep.mubr.f32.mxu0 0.0
  %858 = vmatmul.mubr.f32.gmra.mxu0 %v615
  %v859 = vpop.f32.mrf.mxu0
  %v860 = vadd.f32 %v548, %v859
  %v861 = vpop.f32.mrf.mxu0
  %v862 = vadd.f32 %v550, %v861
  %863 = vmatprep.mubr.f32.mxu0 0.0
  %864 = vmatmul.mubr.f32.gmra.mxu0 %v617
  %v865 = vpop.f32.mrf.mxu0
  %v866 = vadd.f32 %v554, %v865
  %v867 = vpop.f32.mrf.mxu0
  %v868 = vadd.f32 %v556, %v867
  %869 = vdwg.mxu0
  %s870 = scalar_lea.vmem %s1, 128
  %v871 = vld [vmem:[%s870] sm:$0xff]
  %v872 = vld [vmem:[%s870 + $0x8] sm:$0xff]
  %v873 = vld [vmem:[%s870 + $0x10] sm:$0xff]
  %v874 = vld [vmem:[%s870 + $0x18] sm:$0xff]
  %v875 = vld [vmem:[%s870 + $0x20] sm:$0xff]
  %v876 = vld [vmem:[%s870 + $0x28] sm:$0xff]
  %v877 = vld [vmem:[%s870 + $0x30] sm:$0xf]
  %v878 = vld [vmem:[%s870 + $0x38] sm:$0xf]
  %v879 = vsel %vm245, %v169, 0
  %v881 = vsel %vm245, %v171, 0
  %v883 = vsel %vm245, %v173, 0
  %v885 = vsel %vm245, %v175, 0
  %v887 = vsel %vm245, %v177, 0
  %v889 = vsel %vm245, %v179, 0
  %v891 = vsel %vm245, %v181, 0
  %v893 = vsel %vm245, %v183, 0
  %v895 = vsel %vm245, %v185, 0
  %v897 = vsel %vm245, %v187, 0
  %v899 = vsel %vm245, %v189, 0
  %v901 = vsel %vm245, %v191, 0
  %v903 = vsel %vm245, %v193, 0
  %v905 = vsel %vm245, %v195, 0
  %v907 = vsel %vm245, %v197, 0
  %v909 = vsel %vm245, %v199, 0
  %v911 = vsel %vm245, %v201, 0
  %v913 = vsel %vm245, %v203, 0
  %v915 = vsel %vm245, %v205, 0
  %v917 = vsel %vm245, %v207, 0
  %v919 = vsel %vm245, %v209, 0
  %v921 = vsel %vm245, %v211, 0
  %v923 = vsel %vm245, %v213, 0
  %v925 = vsel %vm245, %v215, 0
  %v927 = vsel %vm245, %v217, 0
  %v929 = vsel %vm245, %v219, 0
  %v931 = vsel %vm245, %v221, 0
  %v933 = vsel %vm245, %v223, 0
  %v935 = vsel %vm245, %v225, 0
  %v938 = vsel %vm245, %v227, 0
  %v941 = vsel %vm306, %v877, 0
  %v944 = vsel %vm306, %v878, 0
  %946 = vmatprep.subr.mxu0 0.0
  %947 = vmatpush1.msra.mxu0 0.0
  %948 = vmatprep.subr.mxu0 0.0
  %949 = vmatpush1.msra.mxu0 0.0
  %950 = vmatprep.subr.mxu0 0.0
  %951 = vmatpush1.msra.mxu0 0.0
  %952 = vmatprep.subr.mxu0 0.0
  %953 = vmatpush1.msra.mxu0 0.0
  %954 = vmatprep.subr.mxu0 0.0
  %955 = vmatpush1.msra.mxu0 0.0
  %956 = vmatprep.subr.mxu0 0.0
  %957 = vmatpush1.msra.mxu0 0.0
  %958 = vmatprep.subr.mxu0 0.0
  %959 = vmatpush1.msra.mxu0 0.0
  %960 = vmatprep.subr.mxu0 0.0
  %961 = vmatpush1.msra.mxu0 0.0
  %962 = vmatprep.subr.mxu0 0.0
  %963 = vmatpush1.msra.mxu0 0.0
  %964 = vmatprep.subr.mxu0 0.0
  %965 = vmatpush1.msra.mxu0 0.0
  %966 = vmatprep.subr.mxu0 0.0
  %967 = vmatpush1.msra.mxu0 0.0
  %968 = vmatprep.subr.mxu0 0.0
  %969 = vmatpush1.msra.mxu0 0.0
  %970 = vmatprep.subr.mxu0 %v944
  %971 = vmatpush1.msra.mxu0 %v941
  %972 = vmatprep.subr.mxu0 %v876
  %973 = vmatpush1.msra.mxu0 %v875
  %974 = vmatprep.subr.mxu0 %v874
  %975 = vmatpush1.msra.mxu0 %v873
  %976 = vmatprep.subr.mxu0 %v872
  %977 = vmatpush1.msra.mxu0 %v871
  %978 = vmatprep.subr.mxu0 0.0
  %979 = vmatpush2.msra.mxu0 0.0
  %980 = vmatprep.subr.mxu0 0.0
  %981 = vmatpush2.msra.mxu0 0.0
  %982 = vmatprep.subr.mxu0 0.0
  %983 = vmatpush2.msra.mxu0 0.0
  %984 = vmatprep.subr.mxu0 0.0
  %985 = vmatpush2.msra.mxu0 0.0
  %986 = vmatprep.subr.mxu0 0.0
  %987 = vmatpush2.msra.mxu0 0.0
  %988 = vmatprep.subr.mxu0 0.0
  %989 = vmatpush2.msra.mxu0 0.0
  %990 = vmatprep.subr.mxu0 0.0
  %991 = vmatpush2.msra.mxu0 0.0
  %992 = vmatprep.subr.mxu0 0.0
  %993 = vmatpush2.msra.mxu0 0.0
  %994 = vmatprep.subr.mxu0 0.0
  %995 = vmatpush2.msra.mxu0 0.0
  %996 = vmatprep.subr.mxu0 0.0
  %997 = vmatpush2.msra.mxu0 0.0
  %998 = vmatprep.subr.mxu0 0.0
  %999 = vmatpush2.msra.mxu0 0.0
  %1000 = vmatprep.subr.mxu0 0.0
  %1001 = vmatpush2.msra.mxu0 0.0
  %1002 = vmatprep.subr.mxu0 0.0
  %1003 = vmatpush2.msra.mxu0 0.0
  %1004 = vmatprep.subr.mxu0 0.0
  %1005 = vmatpush2.msra.mxu0 0.0
  %1006 = vmatprep.subr.mxu0 0.0
  %1007 = vmatpush2.msra.mxu0 0.0
  %1008 = vmatprep.subr.mxu0 0.0
  %1009 = vmatpush2.msra.mxu0 0.0
  %1010 = vmatprep.mubr.f32.mxu0 0.0
  %1011 = vmatmul.mubr.f32.gmra.mxu0 %v879
  %v1012 = vpop.f32.mrf.mxu0
  %v1013 = vadd.f32 0.0, %v1012
  %v1014 = vpop.f32.mrf.mxu0
  %v1015 = vadd.f32 0.0, %v1014
  %1016 = vmatprep.mubr.f32.mxu0 0.0
  %1017 = vmatmul.mubr.f32.gmra.mxu0 %v881
  %v1018 = vpop.f32.mrf.mxu0
  %v1019 = vadd.f32 0.0, %v1018
  %v1020 = vpop.f32.mrf.mxu0
  %v1021 = vadd.f32 0.0, %v1020
  %1022 = vmatprep.mubr.f32.mxu0 0.0
  %1023 = vmatmul.mubr.f32.gmra.mxu0 %v883
  %v1024 = vpop.f32.mrf.mxu0
  %v1025 = vadd.f32 0.0, %v1024
  %v1026 = vpop.f32.mrf.mxu0
  %v1027 = vadd.f32 0.0, %v1026
  %1028 = vmatprep.mubr.f32.mxu0 0.0
  %1029 = vmatmul.mubr.f32.gmra.mxu0 %v885
  %v1030 = vpop.f32.mrf.mxu0
  %v1031 = vadd.f32 0.0, %v1030
  %v1032 = vpop.f32.mrf.mxu0
  %v1033 = vadd.f32 0.0, %v1032
  %1034 = vmatprep.mubr.f32.mxu0 0.0
  %1035 = vmatmul.mubr.f32.gmra.mxu0 %v887
  %v1036 = vpop.f32.mrf.mxu0
  %v1037 = vadd.f32 0.0, %v1036
  %v1038 = vpop.f32.mrf.mxu0
  %v1039 = vadd.f32 0.0, %v1038
  %1040 = vmatprep.mubr.f32.mxu0 0.0
  %1041 = vmatmul.mubr.f32.gmra.mxu0 %v889
  %v1042 = vpop.f32.mrf.mxu0
  %v1043 = vadd.f32 0.0, %v1042
  %v1044 = vpop.f32.mrf.mxu0
  %v1045 = vadd.f32 0.0, %v1044
  %1046 = vmatprep.mubr.f32.mxu0 0.0
  %1047 = vmatmul.mubr.f32.gmra.mxu0 %v891
  %v1048 = vpop.f32.mrf.mxu0
  %v1049 = vadd.f32 0.0, %v1048
  %v1050 = vpop.f32.mrf.mxu0
  %v1051 = vadd.f32 0.0, %v1050
  %1052 = vmatprep.mubr.f32.mxu0 0.0
  %1053 = vmatmul.mubr.f32.gmra.mxu0 %v893
  %v1054 = vpop.f32.mrf.mxu0
  %v1055 = vadd.f32 0.0, %v1054
  %v1056 = vpop.f32.mrf.mxu0
  %v1057 = vadd.f32 0.0, %v1056
  %1058 = vmatprep.mubr.f32.mxu0 0.0
  %1059 = vmatmul.mubr.f32.gmra.mxu0 %v895
  %v1060 = vpop.f32.mrf.mxu0
  %v1061 = vadd.f32 0.0, %v1060
  %v1062 = vpop.f32.mrf.mxu0
  %v1063 = vadd.f32 0.0, %v1062
  %1064 = vmatprep.mubr.f32.mxu0 0.0
  %1065 = vmatmul.mubr.f32.gmra.mxu0 %v897
  %v1066 = vpop.f32.mrf.mxu0
  %v1067 = vadd.f32 0.0, %v1066
  %v1068 = vpop.f32.mrf.mxu0
  %v1069 = vadd.f32 0.0, %v1068
  %1070 = vmatprep.mubr.f32.mxu0 0.0
  %1071 = vmatmul.mubr.f32.gmra.mxu0 %v899
  %v1072 = vpop.f32.mrf.mxu0
  %v1073 = vadd.f32 0.0, %v1072
  %v1074 = vpop.f32.mrf.mxu0
  %v1075 = vadd.f32 0.0, %v1074
  %1076 = vmatprep.mubr.f32.mxu0 0.0
  %1077 = vmatmul.mubr.f32.gmra.mxu0 %v901
  %v1078 = vpop.f32.mrf.mxu0
  %v1079 = vadd.f32 0.0, %v1078
  %v1080 = vpop.f32.mrf.mxu0
  %v1081 = vadd.f32 0.0, %v1080
  %1082 = vmatprep.mubr.f32.mxu0 0.0
  %1083 = vmatmul.mubr.f32.gmra.mxu0 %v903
  %v1084 = vpop.f32.mrf.mxu0
  %v1085 = vadd.f32 0.0, %v1084
  %v1086 = vpop.f32.mrf.mxu0
  %v1087 = vadd.f32 0.0, %v1086
  %1088 = vmatprep.mubr.f32.mxu0 0.0
  %1089 = vmatmul.mubr.f32.gmra.mxu0 %v905
  %v1090 = vpop.f32.mrf.mxu0
  %v1091 = vadd.f32 0.0, %v1090
  %v1092 = vpop.f32.mrf.mxu0
  %v1093 = vadd.f32 0.0, %v1092
  %1094 = vmatprep.mubr.f32.mxu0 0.0
  %1095 = vmatmul.mubr.f32.gmra.mxu0 %v907
  %v1096 = vpop.f32.mrf.mxu0
  %v1097 = vadd.f32 0.0, %v1096
  %v1098 = vpop.f32.mrf.mxu0
  %v1099 = vadd.f32 0.0, %v1098
  %1100 = vmatprep.mubr.f32.mxu0 0.0
  %1101 = vmatmul.mubr.f32.gmra.mxu0 %v909
  %v1102 = vpop.f32.mrf.mxu0
  %v1103 = vadd.f32 0.0, %v1102
  %v1104 = vpop.f32.mrf.mxu0
  %v1105 = vadd.f32 0.0, %v1104
  %1106 = vmatprep.mubr.f32.mxu0 0.0
  %1107 = vmatmul.mubr.f32.gmra.mxu0 %v911
  %v1108 = vpop.f32.mrf.mxu0
  %v1109 = vadd.f32 0.0, %v1108
  %v1110 = vpop.f32.mrf.mxu0
  %v1111 = vadd.f32 0.0, %v1110
  %1112 = vmatprep.mubr.f32.mxu0 0.0
  %1113 = vmatmul.mubr.f32.gmra.mxu0 %v913
  %v1114 = vpop.f32.mrf.mxu0
  %v1115 = vadd.f32 0.0, %v1114
  %v1116 = vpop.f32.mrf.mxu0
  %v1117 = vadd.f32 0.0, %v1116
  %1118 = vmatprep.mubr.f32.mxu0 0.0
  %1119 = vmatmul.mubr.f32.gmra.mxu0 %v915
  %v1120 = vpop.f32.mrf.mxu0
  %v1121 = vadd.f32 0.0, %v1120
  %v1122 = vpop.f32.mrf.mxu0
  %v1123 = vadd.f32 0.0, %v1122
  %1124 = vmatprep.mubr.f32.mxu0 0.0
  %1125 = vmatmul.mubr.f32.gmra.mxu0 %v917
  %v1126 = vpop.f32.mrf.mxu0
  %v1127 = vadd.f32 0.0, %v1126
  %v1128 = vpop.f32.mrf.mxu0
  %v1129 = vadd.f32 0.0, %v1128
  %1130 = vmatprep.mubr.f32.mxu0 0.0
  %1131 = vmatmul.mubr.f32.gmra.mxu0 %v919
  %v1132 = vpop.f32.mrf.mxu0
  %v1133 = vadd.f32 0.0, %v1132
  %v1134 = vpop.f32.mrf.mxu0
  %v1135 = vadd.f32 0.0, %v1134
  %1136 = vmatprep.mubr.f32.mxu0 0.0
  %1137 = vmatmul.mubr.f32.gmra.mxu0 %v921
  %v1138 = vpop.f32.mrf.mxu0
  %v1139 = vadd.f32 0.0, %v1138
  %v1140 = vpop.f32.mrf.mxu0
  %v1141 = vadd.f32 0.0, %v1140
  %1142 = vmatprep.mubr.f32.mxu0 0.0
  %1143 = vmatmul.mubr.f32.gmra.mxu0 %v923
  %v1144 = vpop.f32.mrf.mxu0
  %v1145 = vadd.f32 0.0, %v1144
  %v1146 = vpop.f32.mrf.mxu0
  %v1147 = vadd.f32 0.0, %v1146
  %1148 = vmatprep.mubr.f32.mxu0 0.0
  %1149 = vmatmul.mubr.f32.gmra.mxu0 %v925
  %v1150 = vpop.f32.mrf.mxu0
  %v1151 = vadd.f32 0.0, %v1150
  %v1152 = vpop.f32.mrf.mxu0
  %v1153 = vadd.f32 0.0, %v1152
  %1154 = vmatprep.mubr.f32.mxu0 0.0
  %1155 = vmatmul.mubr.f32.gmra.mxu0 %v927
  %v1156 = vpop.f32.mrf.mxu0
  %v1157 = vadd.f32 0.0, %v1156
  %v1158 = vpop.f32.mrf.mxu0
  %v1159 = vadd.f32 0.0, %v1158
  %1160 = vmatprep.mubr.f32.mxu0 0.0
  %1161 = vmatmul.mubr.f32.gmra.mxu0 %v929
  %v1162 = vpop.f32.mrf.mxu0
  %v1163 = vadd.f32 0.0, %v1162
  %v1164 = vpop.f32.mrf.mxu0
  %v1165 = vadd.f32 0.0, %v1164
  %1166 = vmatprep.mubr.f32.mxu0 0.0
  %1167 = vmatmul.mubr.f32.gmra.mxu0 %v931
  %v1168 = vpop.f32.mrf.mxu0
  %v1169 = vadd.f32 0.0, %v1168
  %v1170 = vpop.f32.mrf.mxu0
  %v1171 = vadd.f32 0.0, %v1170
  %1172 = vmatprep.mubr.f32.mxu0 0.0
  %1173 = vmatmul.mubr.f32.gmra.mxu0 %v933
  %v1174 = vpop.f32.mrf.mxu0
  %v1175 = vadd.f32 0.0, %v1174
  %v1176 = vpop.f32.mrf.mxu0
  %v1177 = vadd.f32 0.0, %v1176
  %1178 = vmatprep.mubr.f32.mxu0 0.0
  %1179 = vmatmul.mubr.f32.gmra.mxu0 %v935
  %v1180 = vpop.f32.mrf.mxu0
  %v1181 = vadd.f32 0.0, %v1180
  %v1182 = vpop.f32.mrf.mxu0
  %v1183 = vadd.f32 0.0, %v1182
  %1184 = vmatprep.mubr.f32.mxu0 0.0
  %1185 = vmatmul.mubr.f32.gmra.mxu0 %v938
  %v1186 = vpop.f32.mrf.mxu0
  %v1187 = vadd.f32 0.0, %v1186
  %v1188 = vpop.f32.mrf.mxu0
  %v1189 = vadd.f32 0.0, %v1188
  %1190 = vdwg.mxu0
  %v1191 = vadd.f32 %v692, %v1013
  %v1192 = vadd.f32 %v694, %v1015
  %v1193 = vadd.f32 %v698, %v1019
  %v1194 = vadd.f32 %v700, %v1021
  %v1195 = vadd.f32 %v704, %v1025
  %v1196 = vadd.f32 %v706, %v1027
  %v1197 = vadd.f32 %v710, %v1031
  %v1198 = vadd.f32 %v712, %v1033
  %v1199 = vadd.f32 %v716, %v1037
  %v1200 = vadd.f32 %v718, %v1039
  %v1201 = vadd.f32 %v722, %v1043
  %v1202 = vadd.f32 %v724, %v1045
  %v1203 = vadd.f32 %v728, %v1049
  %v1204 = vadd.f32 %v730, %v1051
  %v1205 = vadd.f32 %v734, %v1055
  %v1206 = vadd.f32 %v736, %v1057
  %v1207 = vadd.f32 %v740, %v1061
  %v1208 = vadd.f32 %v742, %v1063
  %v1209 = vadd.f32 %v746, %v1067
  %v1210 = vadd.f32 %v748, %v1069
  %v1211 = vadd.f32 %v752, %v1073
  %v1212 = vadd.f32 %v754, %v1075
  %v1213 = vadd.f32 %v758, %v1079
  %v1214 = vadd.f32 %v760, %v1081
  %v1215 = vadd.f32 %v764, %v1085
  %v1216 = vadd.f32 %v766, %v1087
  %v1217 = vadd.f32 %v770, %v1091
  %v1218 = vadd.f32 %v772, %v1093
  %v1219 = vadd.f32 %v776, %v1097
  %v1220 = vadd.f32 %v778, %v1099
  %v1221 = vadd.f32 %v782, %v1103
  %v1222 = vadd.f32 %v784, %v1105
  %v1223 = vadd.f32 %v788, %v1109
  %v1224 = vadd.f32 %v790, %v1111
  %v1225 = vadd.f32 %v794, %v1115
  %v1226 = vadd.f32 %v796, %v1117
  %v1227 = vadd.f32 %v800, %v1121
  %v1228 = vadd.f32 %v802, %v1123
  %v1229 = vadd.f32 %v806, %v1127
  %v1230 = vadd.f32 %v808, %v1129
  %v1231 = vadd.f32 %v812, %v1133
  %v1232 = vadd.f32 %v814, %v1135
  %v1233 = vadd.f32 %v818, %v1139
  %v1234 = vadd.f32 %v820, %v1141
  %v1235 = vadd.f32 %v824, %v1145
  %v1236 = vadd.f32 %v826, %v1147
  %v1237 = vadd.f32 %v830, %v1151
  %v1238 = vadd.f32 %v832, %v1153
  %v1239 = vadd.f32 %v836, %v1157
  %v1240 = vadd.f32 %v838, %v1159
  %v1241 = vadd.f32 %v842, %v1163
  %v1242 = vadd.f32 %v844, %v1165
  %v1243 = vadd.f32 %v848, %v1169
  %v1244 = vadd.f32 %v850, %v1171
  %v1245 = vadd.f32 %v854, %v1175
  %v1246 = vadd.f32 %v856, %v1177
  %v1247 = vadd.f32 %v860, %v1181
  %v1248 = vadd.f32 %v862, %v1183
  %v1249 = vadd.f32 %v866, %v1187
  %v1250 = vadd.f32 %v868, %v1189
  %v1251 = vmax.f32 %v1191, %v1192
  %v1252 = vmax.f32 %v1193, %v1194
  %v1253 = vmax.f32 %v1195, %v1196
  %v1254 = vmax.f32 %v1197, %v1198
  %v1255 = vmax.f32 %v1199, %v1200
  %v1256 = vmax.f32 %v1201, %v1202
  %v1257 = vmax.f32 %v1203, %v1204
  %v1258 = vmax.f32 %v1205, %v1206
  %v1259 = vmax.f32 %v1207, %v1208
  %v1260 = vmax.f32 %v1209, %v1210
  %v1261 = vmax.f32 %v1211, %v1212
  %v1262 = vmax.f32 %v1213, %v1214
  %v1263 = vmax.f32 %v1215, %v1216
  %v1264 = vmax.f32 %v1217, %v1218
  %v1265 = vmax.f32 %v1219, %v1220
  %v1266 = vmax.f32 %v1221, %v1222
  %v1267 = vmax.f32 %v1223, %v1224
  %v1268 = vmax.f32 %v1225, %v1226
  %v1269 = vmax.f32 %v1227, %v1228
  %v1270 = vmax.f32 %v1229, %v1230
  %v1271 = vmax.f32 %v1231, %v1232
  %v1272 = vmax.f32 %v1233, %v1234
  %v1273 = vmax.f32 %v1235, %v1236
  %v1274 = vmax.f32 %v1237, %v1238
  %v1275 = vmax.f32 %v1239, %v1240
  %v1276 = vmax.f32 %v1241, %v1242
  %v1277 = vmax.f32 %v1243, %v1244
  %v1278 = vmax.f32 %v1245, %v1246
  %v1279 = vmax.f32 %v1247, %v1248
  %v1280 = vmax.f32 %v1249, %v1250
  %v1281 = vld [vmem:[%s2] sm:$0x1]
  %v1283 = vlaneseq
  %v1284 = vshrl.u32 %v1283, 7
  %v1285 = vsub.s32 0, %v1284
  %v1286 = vrot.slane %v1281, %v1285
  %v1288 = vadd.f32 %v1251, %v1286
  %v1289 = vadd.f32 %v1252, %v1286
  %v1290 = vadd.f32 %v1253, %v1286
  %v1291 = vadd.f32 %v1254, %v1286
  %v1292 = vadd.f32 %v1255, %v1286
  %v1293 = vadd.f32 %v1256, %v1286
  %v1294 = vadd.f32 %v1257, %v1286
  %v1295 = vadd.f32 %v1258, %v1286
  %v1296 = vadd.f32 %v1259, %v1286
  %v1297 = vadd.f32 %v1260, %v1286
  %v1298 = vadd.f32 %v1261, %v1286
  %v1299 = vadd.f32 %v1262, %v1286
  %v1300 = vadd.f32 %v1263, %v1286
  %v1301 = vadd.f32 %v1264, %v1286
  %v1302 = vadd.f32 %v1265, %v1286
  %v1303 = vadd.f32 %v1266, %v1286
  %v1304 = vadd.f32 %v1267, %v1286
  %v1305 = vadd.f32 %v1268, %v1286
  %v1306 = vadd.f32 %v1269, %v1286
  %v1307 = vadd.f32 %v1270, %v1286
  %v1308 = vadd.f32 %v1271, %v1286
  %v1309 = vadd.f32 %v1272, %v1286
  %v1310 = vadd.f32 %v1273, %v1286
  %v1311 = vadd.f32 %v1274, %v1286
  %v1312 = vadd.f32 %v1275, %v1286
  %v1313 = vadd.f32 %v1276, %v1286
  %v1314 = vadd.f32 %v1277, %v1286
  %v1315 = vadd.f32 %v1278, %v1286
  %v1316 = vadd.f32 %v1279, %v1286
  %v1317 = vadd.f32 %v1280, %v1286
  %v1318 = vmax.f32 %v1288, 0.0
  %v1319 = vmax.f32 %v1289, 0.0
  %v1320 = vmax.f32 %v1290, 0.0
  %v1321 = vmax.f32 %v1291, 0.0
  %v1322 = vmax.f32 %v1292, 0.0
  %v1323 = vmax.f32 %v1293, 0.0
  %v1324 = vmax.f32 %v1294, 0.0
  %v1325 = vmax.f32 %v1295, 0.0
  %v1326 = vmax.f32 %v1296, 0.0
  %v1327 = vmax.f32 %v1297, 0.0
  %v1328 = vmax.f32 %v1298, 0.0
  %v1329 = vmax.f32 %v1299, 0.0
  %v1330 = vmax.f32 %v1300, 0.0
  %v1331 = vmax.f32 %v1301, 0.0
  %v1332 = vmax.f32 %v1302, 0.0
  %v1333 = vmax.f32 %v1303, 0.0
  %v1334 = vmax.f32 %v1304, 0.0
  %v1335 = vmax.f32 %v1305, 0.0
  %v1336 = vmax.f32 %v1306, 0.0
  %v1337 = vmax.f32 %v1307, 0.0
  %v1338 = vmax.f32 %v1308, 0.0
  %v1339 = vmax.f32 %v1309, 0.0
  %v1340 = vmax.f32 %v1310, 0.0
  %v1341 = vmax.f32 %v1311, 0.0
  %v1342 = vmax.f32 %v1312, 0.0
  %v1343 = vmax.f32 %v1313, 0.0
  %v1344 = vmax.f32 %v1314, 0.0
  %v1345 = vmax.f32 %v1315, 0.0
  %v1346 = vmax.f32 %v1316, 0.0
  %v1347 = vmax.f32 %v1317, 0.0
  %v1348 = vld [vmem:[%s3] sm:$0xff]
  %v1349 = vld [vmem:[%s3 + $0x8] sm:$0xff]
  %v1350 = vld [vmem:[%s3 + $0x10] sm:$0xff]
  %v1351 = vld [vmem:[%s3 + $0x18] sm:$0xff]
  %v1352 = vld [vmem:[%s3 + $0x20] sm:$0xff]
  %v1353 = vld [vmem:[%s3 + $0x28] sm:$0xff]
  %v1354 = vld [vmem:[%s3 + $0x30] sm:$0xff]
  %v1355 = vld [vmem:[%s3 + $0x38] sm:$0xff]
  %v1356 = vld [vmem:[%s3 + $0x40] sm:$0xff]
  %v1357 = vld [vmem:[%s3 + $0x48] sm:$0xff]
  %v1358 = vld [vmem:[%s3 + $0x50] sm:$0xff]
  %v1359 = vld [vmem:[%s3 + $0x58] sm:$0xff]
  %v1360 = vld [vmem:[%s3 + $0x60] sm:$0xff]
  %v1361 = vld [vmem:[%s3 + $0x68] sm:$0xff]
  %v1362 = vld [vmem:[%s3 + $0x70] sm:$0xff]
  %v1363 = vld [vmem:[%s3 + $0x78] sm:$0xff]
  %v1364 = vld [vmem:[%s3 + $0x80] sm:$0xff]
  %v1365 = vld [vmem:[%s3 + $0x88] sm:$0xff]
  %v1366 = vld [vmem:[%s3 + $0x90] sm:$0xff]
  %v1367 = vld [vmem:[%s3 + $0x98] sm:$0xff]
  %v1368 = vld [vmem:[%s3 + $0xa0] sm:$0xff]
  %v1369 = vld [vmem:[%s3 + $0xa8] sm:$0xff]
  %v1370 = vld [vmem:[%s3 + $0xb0] sm:$0xff]
  %v1371 = vld [vmem:[%s3 + $0xb8] sm:$0xff]
  %v1372 = vld [vmem:[%s3 + $0xc0] sm:$0xff]
  %v1373 = vld [vmem:[%s3 + $0xc8] sm:$0xff]
  %v1374 = vld [vmem:[%s3 + $0xd0] sm:$0xff]
  %v1375 = vld [vmem:[%s3 + $0xd8] sm:$0xff]
  %v1376 = vld [vmem:[%s3 + $0xe0] sm:$0xff]
  %v1377 = vld [vmem:[%s3 + $0xe8] sm:$0xff]
  %v1378 = vld [vmem:[%s3 + $0xf0] sm:$0xff]
  %v1379 = vld [vmem:[%s3 + $0xf8] sm:$0xff]
  %vm1380 = vcmask 916480
  %v1382 = vsel %vm1380, %v1349, 0
  %v1385 = vsel %vm1380, %v1351, 0
  %v1388 = vsel %vm1380, %v1353, 0
  %v1391 = vsel %vm1380, %v1355, 0
  %v1394 = vsel %vm1380, %v1357, 0
  %v1397 = vsel %vm1380, %v1359, 0
  %v1400 = vsel %vm1380, %v1361, 0
  %v1403 = vsel %vm1380, %v1363, 0
  %v1406 = vsel %vm1380, %v1365, 0
  %v1409 = vsel %vm1380, %v1367, 0
  %v1412 = vsel %vm1380, %v1369, 0
  %v1415 = vsel %vm1380, %v1371, 0
  %v1418 = vsel %vm1380, %v1373, 0
  %v1421 = vsel %vm1380, %v1375, 0
  %v1424 = vsel %vm1380, %v1377, 0
  %v1427 = vsel %vm1380, %v1379, 0
  %1429 = vmatprep.subr.mxu0 0.0
  %1430 = vmatpush1.msra.mxu0 %v1333
  %1431 = vmatprep.subr.mxu0 0.0
  %1432 = vmatpush1.msra.mxu0 %v1332
  %1433 = vmatprep.subr.mxu0 0.0
  %1434 = vmatpush1.msra.mxu0 %v1331
  %1435 = vmatprep.subr.mxu0 0.0
  %1436 = vmatpush1.msra.mxu0 %v1330
  %1437 = vmatprep.subr.mxu0 0.0
  %1438 = vmatpush1.msra.mxu0 %v1329
  %1439 = vmatprep.subr.mxu0 0.0
  %1440 = vmatpush1.msra.mxu0 %v1328
  %1441 = vmatprep.subr.mxu0 0.0
  %1442 = vmatpush1.msra.mxu0 %v1327
  %1443 = vmatprep.subr.mxu0 0.0
  %1444 = vmatpush1.msra.mxu0 %v1326
  %1445 = vmatprep.subr.mxu0 0.0
  %1446 = vmatpush1.msra.mxu0 %v1325
  %1447 = vmatprep.subr.mxu0 0.0
  %1448 = vmatpush1.msra.mxu0 %v1324
  %1449 = vmatprep.subr.mxu0 0.0
  %1450 = vmatpush1.msra.mxu0 %v1323
  %1451 = vmatprep.subr.mxu0 0.0
  %1452 = vmatpush1.msra.mxu0 %v1322
  %1453 = vmatprep.subr.mxu0 0.0
  %1454 = vmatpush1.msra.mxu0 %v1321
  %1455 = vmatprep.subr.mxu0 0.0
  %1456 = vmatpush1.msra.mxu0 %v1320
  %1457 = vmatprep.subr.mxu0 0.0
  %1458 = vmatpush1.msra.mxu0 %v1319
  %1459 = vmatprep.subr.mxu0 0.0
  %1460 = vmatpush1.msra.mxu0 %v1318
  %1461 = vmatprep.subr.mxu0 0.0
  %1462 = vmatpush2.msra.mxu0 0.0
  %1463 = vmatprep.subr.mxu0 0.0
  %1464 = vmatpush2.msra.mxu0 0.0
  %1465 = vmatprep.subr.mxu0 0.0
  %1466 = vmatpush2.msra.mxu0 %v1347
  %1467 = vmatprep.subr.mxu0 0.0
  %1468 = vmatpush2.msra.mxu0 %v1346
  %1469 = vmatprep.subr.mxu0 0.0
  %1470 = vmatpush2.msra.mxu0 %v1345
  %1471 = vmatprep.subr.mxu0 0.0
  %1472 = vmatpush2.msra.mxu0 %v1344
  %1473 = vmatprep.subr.mxu0 0.0
  %1474 = vmatpush2.msra.mxu0 %v1343
  %1475 = vmatprep.subr.mxu0 0.0
  %1476 = vmatpush2.msra.mxu0 %v1342
  %1477 = vmatprep.subr.mxu0 0.0
  %1478 = vmatpush2.msra.mxu0 %v1341
  %1479 = vmatprep.subr.mxu0 0.0
  %1480 = vmatpush2.msra.mxu0 %v1340
  %1481 = vmatprep.subr.mxu0 0.0
  %1482 = vmatpush2.msra.mxu0 %v1339
  %1483 = vmatprep.subr.mxu0 0.0
  %1484 = vmatpush2.msra.mxu0 %v1338
  %1485 = vmatprep.subr.mxu0 0.0
  %1486 = vmatpush2.msra.mxu0 %v1337
  %1487 = vmatprep.subr.mxu0 0.0
  %1488 = vmatpush2.msra.mxu0 %v1336
  %1489 = vmatprep.subr.mxu0 0.0
  %1490 = vmatpush2.msra.mxu0 %v1335
  %1491 = vmatprep.subr.mxu0 0.0
  %1492 = vmatpush2.msra.mxu0 %v1334
  %1493 = vmatprep.mubr.f32.mxu0 %v1382
  %1494 = vmatmul.mubr.f32.gmra.mxu0 %v1348
  %v1495 = vpop.f32.mrf.mxu0
  %v1496 = vadd.f32 0.0, %v1495
  %v1497 = vpop.f32.mrf.mxu0
  %1498 = vmatprep.mubr.f32.mxu0 %v1385
  %1499 = vmatmul.mubr.f32.gmra.mxu0 %v1350
  %v1500 = vpop.f32.mrf.mxu0
  %v1501 = vadd.f32 0.0, %v1500
  %v1502 = vpop.f32.mrf.mxu0
  %1503 = vmatprep.mubr.f32.mxu0 %v1388
  %1504 = vmatmul.mubr.f32.gmra.mxu0 %v1352
  %v1505 = vpop.f32.mrf.mxu0
  %v1506 = vadd.f32 0.0, %v1505
  %v1507 = vpop.f32.mrf.mxu0
  %1508 = vmatprep.mubr.f32.mxu0 %v1391
  %1509 = vmatmul.mubr.f32.gmra.mxu0 %v1354
  %v1510 = vpop.f32.mrf.mxu0
  %v1511 = vadd.f32 0.0, %v1510
  %v1512 = vpop.f32.mrf.mxu0
  %1513 = vmatprep.mubr.f32.mxu0 %v1394
  %1514 = vmatmul.mubr.f32.gmra.mxu0 %v1356
  %v1515 = vpop.f32.mrf.mxu0
  %v1516 = vadd.f32 0.0, %v1515
  %v1517 = vpop.f32.mrf.mxu0
  %1518 = vmatprep.mubr.f32.mxu0 %v1397
  %1519 = vmatmul.mubr.f32.gmra.mxu0 %v1358
  %v1520 = vpop.f32.mrf.mxu0
  %v1521 = vadd.f32 0.0, %v1520
  %v1522 = vpop.f32.mrf.mxu0
  %1523 = vmatprep.mubr.f32.mxu0 %v1400
  %1524 = vmatmul.mubr.f32.gmra.mxu0 %v1360
  %v1525 = vpop.f32.mrf.mxu0
  %v1526 = vadd.f32 0.0, %v1525
  %v1527 = vpop.f32.mrf.mxu0
  %1528 = vmatprep.mubr.f32.mxu0 %v1403
  %1529 = vmatmul.mubr.f32.gmra.mxu0 %v1362
  %v1530 = vpop.f32.mrf.mxu0
  %v1531 = vadd.f32 0.0, %v1530
  %v1532 = vpop.f32.mrf.mxu0
  %1533 = vmatprep.mubr.f32.mxu0 %v1406
  %1534 = vmatmul.mubr.f32.gmra.mxu0 %v1364
  %v1535 = vpop.f32.mrf.mxu0
  %v1536 = vadd.f32 0.0, %v1535
  %v1537 = vpop.f32.mrf.mxu0
  %1538 = vmatprep.mubr.f32.mxu0 %v1409
  %1539 = vmatmul.mubr.f32.gmra.mxu0 %v1366
  %v1540 = vpop.f32.mrf.mxu0
  %v1541 = vadd.f32 0.0, %v1540
  %v1542 = vpop.f32.mrf.mxu0
  %1543 = vmatprep.mubr.f32.mxu0 %v1412
  %1544 = vmatmul.mubr.f32.gmra.mxu0 %v1368
  %v1545 = vpop.f32.mrf.mxu0
  %v1546 = vadd.f32 0.0, %v1545
  %v1547 = vpop.f32.mrf.mxu0
  %1548 = vmatprep.mubr.f32.mxu0 %v1415
  %1549 = vmatmul.mubr.f32.gmra.mxu0 %v1370
  %v1550 = vpop.f32.mrf.mxu0
  %v1551 = vadd.f32 0.0, %v1550
  %v1552 = vpop.f32.mrf.mxu0
  %1553 = vmatprep.mubr.f32.mxu0 %v1418
  %1554 = vmatmul.mubr.f32.gmra.mxu0 %v1372
  %v1555 = vpop.f32.mrf.mxu0
  %v1556 = vadd.f32 0.0, %v1555
  %v1557 = vpop.f32.mrf.mxu0
  %1558 = vmatprep.mubr.f32.mxu0 %v1421
  %1559 = vmatmul.mubr.f32.gmra.mxu0 %v1374
  %v1560 = vpop.f32.mrf.mxu0
  %v1561 = vadd.f32 0.0, %v1560
  %v1562 = vpop.f32.mrf.mxu0
  %1563 = vmatprep.mubr.f32.mxu0 %v1424
  %1564 = vmatmul.mubr.f32.gmra.mxu0 %v1376
  %v1565 = vpop.f32.mrf.mxu0
  %v1566 = vadd.f32 0.0, %v1565
  %v1567 = vpop.f32.mrf.mxu0
  %1568 = vmatprep.mubr.f32.mxu0 %v1427
  %1569 = vmatmul.mubr.f32.gmra.mxu0 %v1378
  %v1570 = vpop.f32.mrf.mxu0
  %v1571 = vadd.f32 0.0, %v1570
  %v1572 = vpop.f32.mrf.mxu0
  %1573 = vdwg.mxu0
  %v1574 = vld [vmem:[%s4] sm:$0xff]
  %v1575 = vld [vmem:[%s4 + $0x8] sm:$0xff]
  %v1576 = vld [vmem:[%s4 + $0x10] sm:$0xff]
  %v1577 = vld [vmem:[%s4 + $0x18] sm:$0xff]
  %v1578 = vld [vmem:[%s4 + $0x20] sm:$0xff]
  %v1579 = vld [vmem:[%s4 + $0x28] sm:$0xff]
  %v1580 = vld [vmem:[%s4 + $0x30] sm:$0xff]
  %v1581 = vld [vmem:[%s4 + $0x38] sm:$0xff]
  %v1582 = vld [vmem:[%s4 + $0x40] sm:$0xff]
  %v1583 = vld [vmem:[%s4 + $0x48] sm:$0xff]
  %v1584 = vld [vmem:[%s4 + $0x50] sm:$0xff]
  %v1585 = vld [vmem:[%s4 + $0x58] sm:$0xff]
  %v1586 = vld [vmem:[%s4 + $0x60] sm:$0xff]
  %v1587 = vld [vmem:[%s4 + $0x68] sm:$0xff]
  %v1588 = vld [vmem:[%s4 + $0x70] sm:$0xff]
  %v1589 = vld [vmem:[%s4 + $0x78] sm:$0xff]
  %v1590 = vld [vmem:[%s4 + $0x80] sm:$0xff]
  %v1591 = vld [vmem:[%s4 + $0x88] sm:$0xff]
  %v1592 = vld [vmem:[%s4 + $0x90] sm:$0xff]
  %v1593 = vld [vmem:[%s4 + $0x98] sm:$0xff]
  %v1594 = vld [vmem:[%s4 + $0xa0] sm:$0xff]
  %v1595 = vld [vmem:[%s4 + $0xa8] sm:$0xff]
  %v1596 = vld [vmem:[%s4 + $0xb0] sm:$0xff]
  %v1597 = vld [vmem:[%s4 + $0xb8] sm:$0xff]
  %v1598 = vld [vmem:[%s4 + $0xc0] sm:$0xff]
  %v1599 = vld [vmem:[%s4 + $0xc8] sm:$0xff]
  %v1600 = vld [vmem:[%s4 + $0xd0] sm:$0xff]
  %v1601 = vld [vmem:[%s4 + $0xd8] sm:$0xff]
  %v1602 = vld [vmem:[%s4 + $0xe0] sm:$0xff]
  %v1603 = vld [vmem:[%s4 + $0xe8] sm:$0xff]
  %v1604 = vld [vmem:[%s4 + $0xf0] sm:$0xff]
  %v1605 = vld [vmem:[%s4 + $0xf8] sm:$0xff]
  %v1607 = vsel %vm1380, %v1575, 0
  %v1610 = vsel %vm1380, %v1577, 0
  %v1613 = vsel %vm1380, %v1579, 0
  %v1616 = vsel %vm1380, %v1581, 0
  %v1619 = vsel %vm1380, %v1583, 0
  %v1622 = vsel %vm1380, %v1585, 0
  %v1625 = vsel %vm1380, %v1587, 0
  %v1628 = vsel %vm1380, %v1589, 0
  %v1631 = vsel %vm1380, %v1591, 0
  %v1634 = vsel %vm1380, %v1593, 0
  %v1637 = vsel %vm1380, %v1595, 0
  %v1640 = vsel %vm1380, %v1597, 0
  %v1643 = vsel %vm1380, %v1599, 0
  %v1646 = vsel %vm1380, %v1601, 0
  %v1649 = vsel %vm1380, %v1603, 0
  %v1652 = vsel %vm1380, %v1605, 0
  %1654 = vmatprep.subr.mxu0 0.0
  %1655 = vmatpush1.msra.mxu0 %v1333
  %1656 = vmatprep.subr.mxu0 0.0
  %1657 = vmatpush1.msra.mxu0 %v1332
  %1658 = vmatprep.subr.mxu0 0.0
  %1659 = vmatpush1.msra.mxu0 %v1331
  %1660 = vmatprep.subr.mxu0 0.0
  %1661 = vmatpush1.msra.mxu0 %v1330
  %1662 = vmatprep.subr.mxu0 0.0
  %1663 = vmatpush1.msra.mxu0 %v1329
  %1664 = vmatprep.subr.mxu0 0.0
  %1665 = vmatpush1.msra.mxu0 %v1328
  %1666 = vmatprep.subr.mxu0 0.0
  %1667 = vmatpush1.msra.mxu0 %v1327
  %1668 = vmatprep.subr.mxu0 0.0
  %1669 = vmatpush1.msra.mxu0 %v1326
  %1670 = vmatprep.subr.mxu0 0.0
  %1671 = vmatpush1.msra.mxu0 %v1325
  %1672 = vmatprep.subr.mxu0 0.0
  %1673 = vmatpush1.msra.mxu0 %v1324
  %1674 = vmatprep.subr.mxu0 0.0
  %1675 = vmatpush1.msra.mxu0 %v1323
  %1676 = vmatprep.subr.mxu0 0.0
  %1677 = vmatpush1.msra.mxu0 %v1322
  %1678 = vmatprep.subr.mxu0 0.0
  %1679 = vmatpush1.msra.mxu0 %v1321
  %1680 = vmatprep.subr.mxu0 0.0
  %1681 = vmatpush1.msra.mxu0 %v1320
  %1682 = vmatprep.subr.mxu0 0.0
  %1683 = vmatpush1.msra.mxu0 %v1319
  %1684 = vmatprep.subr.mxu0 0.0
  %1685 = vmatpush1.msra.mxu0 %v1318
  %1686 = vmatprep.subr.mxu0 0.0
  %1687 = vmatpush2.msra.mxu0 0.0
  %1688 = vmatprep.subr.mxu0 0.0
  %1689 = vmatpush2.msra.mxu0 0.0
  %1690 = vmatprep.subr.mxu0 0.0
  %1691 = vmatpush2.msra.mxu0 %v1347
  %1692 = vmatprep.subr.mxu0 0.0
  %1693 = vmatpush2.msra.mxu0 %v1346
  %1694 = vmatprep.subr.mxu0 0.0
  %1695 = vmatpush2.msra.mxu0 %v1345
  %1696 = vmatprep.subr.mxu0 0.0
  %1697 = vmatpush2.msra.mxu0 %v1344
  %1698 = vmatprep.subr.mxu0 0.0
  %1699 = vmatpush2.msra.mxu0 %v1343
  %1700 = vmatprep.subr.mxu0 0.0
  %1701 = vmatpush2.msra.mxu0 %v1342
  %1702 = vmatprep.subr.mxu0 0.0
  %1703 = vmatpush2.msra.mxu0 %v1341
  %1704 = vmatprep.subr.mxu0 0.0
  %1705 = vmatpush2.msra.mxu0 %v1340
  %1706 = vmatprep.subr.mxu0 0.0
  %1707 = vmatpush2.msra.mxu0 %v1339
  %1708 = vmatprep.subr.mxu0 0.0
  %1709 = vmatpush2.msra.mxu0 %v1338
  %1710 = vmatprep.subr.mxu0 0.0
  %1711 = vmatpush2.msra.mxu0 %v1337
  %1712 = vmatprep.subr.mxu0 0.0
  %1713 = vmatpush2.msra.mxu0 %v1336
  %1714 = vmatprep.subr.mxu0 0.0
  %1715 = vmatpush2.msra.mxu0 %v1335
  %1716 = vmatprep.subr.mxu0 0.0
  %1717 = vmatpush2.msra.mxu0 %v1334
  %1718 = vmatprep.mubr.f32.mxu0 %v1607
  %1719 = vmatmul.mubr.f32.gmra.mxu0 %v1574
  %v1720 = vpop.f32.mrf.mxu0
  %v1721 = vadd.f32 0.0, %v1720
  %v1722 = vpop.f32.mrf.mxu0
  %1723 = vmatprep.mubr.f32.mxu0 %v1610
  %1724 = vmatmul.mubr.f32.gmra.mxu0 %v1576
  %v1725 = vpop.f32.mrf.mxu0
  %v1726 = vadd.f32 0.0, %v1725
  %v1727 = vpop.f32.mrf.mxu0
  %1728 = vmatprep.mubr.f32.mxu0 %v1613
  %1729 = vmatmul.mubr.f32.gmra.mxu0 %v1578
  %v1730 = vpop.f32.mrf.mxu0
  %v1731 = vadd.f32 0.0, %v1730
  %v1732 = vpop.f32.mrf.mxu0
  %1733 = vmatprep.mubr.f32.mxu0 %v1616
  %1734 = vmatmul.mubr.f32.gmra.mxu0 %v1580
  %v1735 = vpop.f32.mrf.mxu0
  %v1736 = vadd.f32 0.0, %v1735
  %v1737 = vpop.f32.mrf.mxu0
  %1738 = vmatprep.mubr.f32.mxu0 %v1619
  %1739 = vmatmul.mubr.f32.gmra.mxu0 %v1582
  %v1740 = vpop.f32.mrf.mxu0
  %v1741 = vadd.f32 0.0, %v1740
  %v1742 = vpop.f32.mrf.mxu0
  %1743 = vmatprep.mubr.f32.mxu0 %v1622
  %1744 = vmatmul.mubr.f32.gmra.mxu0 %v1584
  %v1745 = vpop.f32.mrf.mxu0
  %v1746 = vadd.f32 0.0, %v1745
  %v1747 = vpop.f32.mrf.mxu0
  %1748 = vmatprep.mubr.f32.mxu0 %v1625
  %1749 = vmatmul.mubr.f32.gmra.mxu0 %v1586
  %v1750 = vpop.f32.mrf.mxu0
  %v1751 = vadd.f32 0.0, %v1750
  %v1752 = vpop.f32.mrf.mxu0
  %1753 = vmatprep.mubr.f32.mxu0 %v1628
  %1754 = vmatmul.mubr.f32.gmra.mxu0 %v1588
  %v1755 = vpop.f32.mrf.mxu0
  %v1756 = vadd.f32 0.0, %v1755
  %v1757 = vpop.f32.mrf.mxu0
  %1758 = vmatprep.mubr.f32.mxu0 %v1631
  %1759 = vmatmul.mubr.f32.gmra.mxu0 %v1590
  %v1760 = vpop.f32.mrf.mxu0
  %v1761 = vadd.f32 0.0, %v1760
  %v1762 = vpop.f32.mrf.mxu0
  %1763 = vmatprep.mubr.f32.mxu0 %v1634
  %1764 = vmatmul.mubr.f32.gmra.mxu0 %v1592
  %v1765 = vpop.f32.mrf.mxu0
  %v1766 = vadd.f32 0.0, %v1765
  %v1767 = vpop.f32.mrf.mxu0
  %1768 = vmatprep.mubr.f32.mxu0 %v1637
  %1769 = vmatmul.mubr.f32.gmra.mxu0 %v1594
  %v1770 = vpop.f32.mrf.mxu0
  %v1771 = vadd.f32 0.0, %v1770
  %v1772 = vpop.f32.mrf.mxu0
  %1773 = vmatprep.mubr.f32.mxu0 %v1640
  %1774 = vmatmul.mubr.f32.gmra.mxu0 %v1596
  %v1775 = vpop.f32.mrf.mxu0
  %v1776 = vadd.f32 0.0, %v1775
  %v1777 = vpop.f32.mrf.mxu0
  %1778 = vmatprep.mubr.f32.mxu0 %v1643
  %1779 = vmatmul.mubr.f32.gmra.mxu0 %v1598
  %v1780 = vpop.f32.mrf.mxu0
  %v1781 = vadd.f32 0.0, %v1780
  %v1782 = vpop.f32.mrf.mxu0
  %1783 = vmatprep.mubr.f32.mxu0 %v1646
  %1784 = vmatmul.mubr.f32.gmra.mxu0 %v1600
  %v1785 = vpop.f32.mrf.mxu0
  %v1786 = vadd.f32 0.0, %v1785
  %v1787 = vpop.f32.mrf.mxu0
  %1788 = vmatprep.mubr.f32.mxu0 %v1649
  %1789 = vmatmul.mubr.f32.gmra.mxu0 %v1602
  %v1790 = vpop.f32.mrf.mxu0
  %v1791 = vadd.f32 0.0, %v1790
  %v1792 = vpop.f32.mrf.mxu0
  %1793 = vmatprep.mubr.f32.mxu0 %v1652
  %1794 = vmatmul.mubr.f32.gmra.mxu0 %v1604
  %v1795 = vpop.f32.mrf.mxu0
  %v1796 = vadd.f32 0.0, %v1795
  %v1797 = vpop.f32.mrf.mxu0
  %1798 = vdwg.mxu0
  %v1799 = vmax.f32 %v1496, %v1721
  %v1800 = vmax.f32 %v1501, %v1726
  %v1801 = vmax.f32 %v1506, %v1731
  %v1802 = vmax.f32 %v1511, %v1736
  %v1803 = vmax.f32 %v1516, %v1741
  %v1804 = vmax.f32 %v1521, %v1746
  %v1805 = vmax.f32 %v1526, %v1751
  %v1806 = vmax.f32 %v1531, %v1756
  %v1807 = vmax.f32 %v1536, %v1761
  %v1808 = vmax.f32 %v1541, %v1766
  %v1809 = vmax.f32 %v1546, %v1771
  %v1810 = vmax.f32 %v1551, %v1776
  %v1811 = vmax.f32 %v1556, %v1781
  %v1812 = vmax.f32 %v1561, %v1786
  %v1813 = vmax.f32 %v1566, %v1791
  %v1814 = vmax.f32 %v1571, %v1796
  %v1831 = vrot.slane %v1799, 7
  %v1832 = vrot.slane %v1800, 7
  %v1833 = vsel %vm104, %v1831, %v1832
  %v1834 = vrot.slane %v1801, 7
  %v1835 = vsel %vm104, %v1832, %v1834
  %v1836 = vrot.slane %v1802, 7
  %v1837 = vsel %vm104, %v1834, %v1836
  %v1838 = vrot.slane %v1803, 7
  %v1839 = vsel %vm104, %v1836, %v1838
  %v1840 = vrot.slane %v1804, 7
  %v1841 = vsel %vm104, %v1838, %v1840
  %v1842 = vrot.slane %v1805, 7
  %v1843 = vsel %vm104, %v1840, %v1842
  %v1844 = vrot.slane %v1806, 7
  %v1845 = vsel %vm104, %v1842, %v1844
  %v1846 = vrot.slane %v1807, 7
  %v1847 = vsel %vm104, %v1844, %v1846
  %v1848 = vrot.slane %v1808, 7
  %v1849 = vsel %vm104, %v1846, %v1848
  %v1850 = vrot.slane %v1809, 7
  %v1851 = vsel %vm104, %v1848, %v1850
  %v1852 = vrot.slane %v1810, 7
  %v1853 = vsel %vm104, %v1850, %v1852
  %v1854 = vrot.slane %v1811, 7
  %v1855 = vsel %vm104, %v1852, %v1854
  %v1856 = vrot.slane %v1812, 7
  %v1857 = vsel %vm104, %v1854, %v1856
  %v1858 = vrot.slane %v1813, 7
  %v1859 = vsel %vm104, %v1856, %v1858
  %v1860 = vrot.slane %v1814, 7
  %v1861 = vsel %vm104, %v1858, %v1860
  %v1878 = vsel %vm104, 0.0, %v1831
  %v1879 = vrot.slane %v1799, 1
  %v1880 = vrot.slane %v1800, 1
  %v1881 = vsel %vm166, %v1879, %v1880
  %v1882 = vrot.slane %v1801, 1
  %v1883 = vsel %vm166, %v1880, %v1882
  %v1884 = vrot.slane %v1802, 1
  %v1885 = vsel %vm166, %v1882, %v1884
  %v1886 = vrot.slane %v1803, 1
  %v1887 = vsel %vm166, %v1884, %v1886
  %v1888 = vrot.slane %v1804, 1
  %v1889 = vsel %vm166, %v1886, %v1888
  %v1890 = vrot.slane %v1805, 1
  %v1891 = vsel %vm166, %v1888, %v1890
  %v1892 = vrot.slane %v1806, 1
  %v1893 = vsel %vm166, %v1890, %v1892
  %v1894 = vrot.slane %v1807, 1
  %v1895 = vsel %vm166, %v1892, %v1894
  %v1896 = vrot.slane %v1808, 1
  %v1897 = vsel %vm166, %v1894, %v1896
  %v1898 = vrot.slane %v1809, 1
  %v1899 = vsel %vm166, %v1896, %v1898
  %v1900 = vrot.slane %v1810, 1
  %v1901 = vsel %vm166, %v1898, %v1900
  %v1902 = vrot.slane %v1811, 1
  %v1903 = vsel %vm166, %v1900, %v1902
  %v1904 = vrot.slane %v1812, 1
  %v1905 = vsel %vm166, %v1902, %v1904
  %v1906 = vrot.slane %v1813, 1
  %v1907 = vsel %vm166, %v1904, %v1906
  %v1908 = vrot.slane %v1814, 1
  %v1909 = vsel %vm166, %v1906, %v1908
  %v1926 = vsel %vm166, %v1908, 0.0
  %v1927 = vld [vmem:[%s5] sm:$0xff]
  %v1928 = vld [vmem:[%s5 + $0x8] sm:$0xff]
  %v1929 = vld [vmem:[%s5 + $0x10] sm:$0xff]
  %v1930 = vld [vmem:[%s5 + $0x18] sm:$0xff]
  %v1931 = vld [vmem:[%s5 + $0x20] sm:$0xff]
  %v1932 = vld [vmem:[%s5 + $0x28] sm:$0xff]
  %v1933 = vld [vmem:[%s5 + $0x30] sm:$0xff]
  %v1934 = vld [vmem:[%s5 + $0x38] sm:$0xff]
  %v1935 = vld [vmem:[%s5 + $0x40] sm:$0xff]
  %v1936 = vld [vmem:[%s5 + $0x48] sm:$0xff]
  %v1937 = vld [vmem:[%s5 + $0x50] sm:$0xff]
  %v1938 = vld [vmem:[%s5 + $0x58] sm:$0xff]
  %v1939 = vld [vmem:[%s5 + $0x60] sm:$0xff]
  %v1940 = vld [vmem:[%s5 + $0x68] sm:$0xff]
  %v1941 = vld [vmem:[%s5 + $0x70] sm:$0xff]
  %v1942 = vld [vmem:[%s5 + $0x78] sm:$0xff]
  %v1943 = vld [vmem:[%s5 + $0x80] sm:$0xff]
  %v1944 = vld [vmem:[%s5 + $0x88] sm:$0xff]
  %v1945 = vld [vmem:[%s5 + $0x90] sm:$0xff]
  %v1946 = vld [vmem:[%s5 + $0x98] sm:$0xff]
  %v1947 = vld [vmem:[%s5 + $0xa0] sm:$0xff]
  %v1948 = vld [vmem:[%s5 + $0xa8] sm:$0xff]
  %v1949 = vld [vmem:[%s5 + $0xb0] sm:$0xff]
  %v1950 = vld [vmem:[%s5 + $0xb8] sm:$0xff]
  %v1951 = vld [vmem:[%s5 + $0xc0] sm:$0xff]
  %v1952 = vld [vmem:[%s5 + $0xc8] sm:$0xff]
  %v1953 = vld [vmem:[%s5 + $0xd0] sm:$0xff]
  %v1954 = vld [vmem:[%s5 + $0xd8] sm:$0xff]
  %v1955 = vld [vmem:[%s5 + $0xe0] sm:$0xff]
  %v1956 = vld [vmem:[%s5 + $0xe8] sm:$0xff]
  %v1957 = vld [vmem:[%s5 + $0xf0] sm:$0xff]
  %v1958 = vld [vmem:[%s5 + $0xf8] sm:$0xff]
  %s1959 = scalar_lea.vmem %s5, 256
  %v1960 = vld [vmem:[%s1959] sm:$0xff]
  %v1961 = vld [vmem:[%s1959 + $0x8] sm:$0xff]
  %v1962 = vld [vmem:[%s1959 + $0x10] sm:$0xff]
  %v1963 = vld [vmem:[%s1959 + $0x18] sm:$0xff]
  %v1964 = vld [vmem:[%s1959 + $0x20] sm:$0xff]
  %v1965 = vld [vmem:[%s1959 + $0x28] sm:$0xff]
  %v1966 = vld [vmem:[%s1959 + $0x30] sm:$0xff]
  %v1967 = vld [vmem:[%s1959 + $0x38] sm:$0xff]
  %v1968 = vld [vmem:[%s1959 + $0x40] sm:$0xff]
  %v1969 = vld [vmem:[%s1959 + $0x48] sm:$0xff]
  %v1970 = vld [vmem:[%s1959 + $0x50] sm:$0xff]
  %v1971 = vld [vmem:[%s1959 + $0x58] sm:$0xff]
  %v1972 = vld [vmem:[%s1959 + $0x60] sm:$0xff]
  %v1973 = vld [vmem:[%s1959 + $0x68] sm:$0xff]
  %v1974 = vld [vmem:[%s1959 + $0x70] sm:$0xff]
  %v1975 = vld [vmem:[%s1959 + $0x78] sm:$0xff]
  %v1976 = vld [vmem:[%s1959 + $0x80] sm:$0xff]
  %v1977 = vld [vmem:[%s1959 + $0x88] sm:$0xff]
  %v1978 = vld [vmem:[%s1959 + $0x90] sm:$0xff]
  %v1979 = vld [vmem:[%s1959 + $0x98] sm:$0xff]
  %v1980 = vld [vmem:[%s1959 + $0xa0] sm:$0xff]
  %v1981 = vld [vmem:[%s1959 + $0xa8] sm:$0xff]
  %v1982 = vld [vmem:[%s1959 + $0xb0] sm:$0xff]
  %v1983 = vld [vmem:[%s1959 + $0xb8] sm:$0xff]
  %v1984 = vld [vmem:[%s1959 + $0xc0] sm:$0xff]
  %v1985 = vld [vmem:[%s1959 + $0xc8] sm:$0xff]
  %v1986 = vld [vmem:[%s1959 + $0xd0] sm:$0xff]
  %v1987 = vld [vmem:[%s1959 + $0xd8] sm:$0xff]
  %v1988 = vld [vmem:[%s1959 + $0xe0] sm:$0xff]
  %v1989 = vld [vmem:[%s1959 + $0xe8] sm:$0xff]
  %v1990 = vld [vmem:[%s1959 + $0xf0] sm:$0xff]
  %v1991 = vld [vmem:[%s1959 + $0xf8] sm:$0xff]
  %1992 = vmatprep.subr.mxu0 %v1991
  %1993 = vmatpush1.msra.mxu0 %v1990
  %1994 = vmatprep.subr.mxu0 %v1989
  %1995 = vmatpush1.msra.mxu0 %v1988
  %1996 = vmatprep.subr.mxu0 %v1987
  %1997 = vmatpush1.msra.mxu0 %v1986
  %1998 = vmatprep.subr.mxu0 %v1985
  %1999 = vmatpush1.msra.mxu0 %v1984
  %2000 = vmatprep.subr.mxu0 %v1983
  %2001 = vmatpush1.msra.mxu0 %v1982
  %2002 = vmatprep.subr.mxu0 %v1981
  %2003 = vmatpush1.msra.mxu0 %v1980
  %2004 = vmatprep.subr.mxu0 %v1979
  %2005 = vmatpush1.msra.mxu0 %v1978
  %2006 = vmatprep.subr.mxu0 %v1977
  %2007 = vmatpush1.msra.mxu0 %v1976
  %2008 = vmatprep.subr.mxu0 %v1975
  %2009 = vmatpush1.msra.mxu0 %v1974
  %2010 = vmatprep.subr.mxu0 %v1973
  %2011 = vmatpush1.msra.mxu0 %v1972
  %2012 = vmatprep.subr.mxu0 %v1971
  %2013 = vmatpush1.msra.mxu0 %v1970
  %2014 = vmatprep.subr.mxu0 %v1969
  %2015 = vmatpush1.msra.mxu0 %v1968
  %2016 = vmatprep.subr.mxu0 %v1967
  %2017 = vmatpush1.msra.mxu0 %v1966
  %2018 = vmatprep.subr.mxu0 %v1965
  %2019 = vmatpush1.msra.mxu0 %v1964
  %2020 = vmatprep.subr.mxu0 %v1963
  %2021 = vmatpush1.msra.mxu0 %v1962
  %2022 = vmatprep.subr.mxu0 %v1961
  %2023 = vmatpush1.msra.mxu0 %v1960
  %2024 = vmatprep.subr.mxu0 0.0
  %2025 = vmatpush2.msra.mxu0 0.0
  %2026 = vmatprep.subr.mxu0 0.0
  %2027 = vmatpush2.msra.mxu0 0.0
  %2028 = vmatprep.subr.mxu0 0.0
  %2029 = vmatpush2.msra.mxu0 0.0
  %2030 = vmatprep.subr.mxu0 0.0
  %2031 = vmatpush2.msra.mxu0 0.0
  %2032 = vmatprep.subr.mxu0 0.0
  %2033 = vmatpush2.msra.mxu0 0.0
  %2034 = vmatprep.subr.mxu0 0.0
  %2035 = vmatpush2.msra.mxu0 0.0
  %2036 = vmatprep.subr.mxu0 0.0
  %2037 = vmatpush2.msra.mxu0 0.0
  %2038 = vmatprep.subr.mxu0 0.0
  %2039 = vmatpush2.msra.mxu0 0.0
  %2040 = vmatprep.subr.mxu0 0.0
  %2041 = vmatpush2.msra.mxu0 0.0
  %2042 = vmatprep.subr.mxu0 0.0
  %2043 = vmatpush2.msra.mxu0 0.0
  %2044 = vmatprep.subr.mxu0 0.0
  %2045 = vmatpush2.msra.mxu0 0.0
  %2046 = vmatprep.subr.mxu0 0.0
  %2047 = vmatpush2.msra.mxu0 0.0
  %2048 = vmatprep.subr.mxu0 0.0
  %2049 = vmatpush2.msra.mxu0 0.0
  %2050 = vmatprep.subr.mxu0 0.0
  %2051 = vmatpush2.msra.mxu0 0.0
  %2052 = vmatprep.subr.mxu0 0.0
  %2053 = vmatpush2.msra.mxu0 0.0
  %2054 = vmatprep.subr.mxu0 0.0
  %2055 = vmatpush2.msra.mxu0 0.0
  %2056 = vmatprep.mubr.f32.mxu0 0.0
  %2057 = vmatmul.mubr.f32.gmra.mxu0 %v1799
  %v2058 = vpop.f32.mrf.mxu0
  %v2059 = vadd.f32 0.0, %v2058
  %v2060 = vpop.f32.mrf.mxu0
  %v2061 = vadd.f32 0.0, %v2060
  %2062 = vmatprep.mubr.f32.mxu0 0.0
  %2063 = vmatmul.mubr.f32.gmra.mxu0 %v1800
  %v2064 = vpop.f32.mrf.mxu0
  %v2065 = vadd.f32 0.0, %v2064
  %v2066 = vpop.f32.mrf.mxu0
  %v2067 = vadd.f32 0.0, %v2066
  %2068 = vmatprep.mubr.f32.mxu0 0.0
  %2069 = vmatmul.mubr.f32.gmra.mxu0 %v1801
  %v2070 = vpop.f32.mrf.mxu0
  %v2071 = vadd.f32 0.0, %v2070
  %v2072 = vpop.f32.mrf.mxu0
  %v2073 = vadd.f32 0.0, %v2072
  %2074 = vmatprep.mubr.f32.mxu0 0.0
  %2075 = vmatmul.mubr.f32.gmra.mxu0 %v1802
  %v2076 = vpop.f32.mrf.mxu0
  %v2077 = vadd.f32 0.0, %v2076
  %v2078 = vpop.f32.mrf.mxu0
  %v2079 = vadd.f32 0.0, %v2078
  %2080 = vmatprep.mubr.f32.mxu0 0.0
  %2081 = vmatmul.mubr.f32.gmra.mxu0 %v1803
  %v2082 = vpop.f32.mrf.mxu0
  %v2083 = vadd.f32 0.0, %v2082
  %v2084 = vpop.f32.mrf.mxu0
  %v2085 = vadd.f32 0.0, %v2084
  %2086 = vmatprep.mubr.f32.mxu0 0.0
  %2087 = vmatmul.mubr.f32.gmra.mxu0 %v1804
  %v2088 = vpop.f32.mrf.mxu0
  %v2089 = vadd.f32 0.0, %v2088
  %v2090 = vpop.f32.mrf.mxu0
  %v2091 = vadd.f32 0.0, %v2090
  %2092 = vmatprep.mubr.f32.mxu0 0.0
  %2093 = vmatmul.mubr.f32.gmra.mxu0 %v1805
  %v2094 = vpop.f32.mrf.mxu0
  %v2095 = vadd.f32 0.0, %v2094
  %v2096 = vpop.f32.mrf.mxu0
  %v2097 = vadd.f32 0.0, %v2096
  %2098 = vmatprep.mubr.f32.mxu0 0.0
  %2099 = vmatmul.mubr.f32.gmra.mxu0 %v1806
  %v2100 = vpop.f32.mrf.mxu0
  %v2101 = vadd.f32 0.0, %v2100
  %v2102 = vpop.f32.mrf.mxu0
  %v2103 = vadd.f32 0.0, %v2102
  %2104 = vmatprep.mubr.f32.mxu0 0.0
  %2105 = vmatmul.mubr.f32.gmra.mxu0 %v1807
  %v2106 = vpop.f32.mrf.mxu0
  %v2107 = vadd.f32 0.0, %v2106
  %v2108 = vpop.f32.mrf.mxu0
  %v2109 = vadd.f32 0.0, %v2108
  %2110 = vmatprep.mubr.f32.mxu0 0.0
  %2111 = vmatmul.mubr.f32.gmra.mxu0 %v1808
  %v2112 = vpop.f32.mrf.mxu0
  %v2113 = vadd.f32 0.0, %v2112
  %v2114 = vpop.f32.mrf.mxu0
  %v2115 = vadd.f32 0.0, %v2114
  %2116 = vmatprep.mubr.f32.mxu0 0.0
  %2117 = vmatmul.mubr.f32.gmra.mxu0 %v1809
  %v2118 = vpop.f32.mrf.mxu0
  %v2119 = vadd.f32 0.0, %v2118
  %v2120 = vpop.f32.mrf.mxu0
  %v2121 = vadd.f32 0.0, %v2120
  %2122 = vmatprep.mubr.f32.mxu0 0.0
  %2123 = vmatmul.mubr.f32.gmra.mxu0 %v1810
  %v2124 = vpop.f32.mrf.mxu0
  %v2125 = vadd.f32 0.0, %v2124
  %v2126 = vpop.f32.mrf.mxu0
  %v2127 = vadd.f32 0.0, %v2126
  %2128 = vmatprep.mubr.f32.mxu0 0.0
  %2129 = vmatmul.mubr.f32.gmra.mxu0 %v1811
  %v2130 = vpop.f32.mrf.mxu0
  %v2131 = vadd.f32 0.0, %v2130
  %v2132 = vpop.f32.mrf.mxu0
  %v2133 = vadd.f32 0.0, %v2132
  %2134 = vmatprep.mubr.f32.mxu0 0.0
  %2135 = vmatmul.mubr.f32.gmra.mxu0 %v1812
  %v2136 = vpop.f32.mrf.mxu0
  %v2137 = vadd.f32 0.0, %v2136
  %v2138 = vpop.f32.mrf.mxu0
  %v2139 = vadd.f32 0.0, %v2138
  %2140 = vmatprep.mubr.f32.mxu0 0.0
  %2141 = vmatmul.mubr.f32.gmra.mxu0 %v1813
  %v2142 = vpop.f32.mrf.mxu0
  %v2143 = vadd.f32 0.0, %v2142
  %v2144 = vpop.f32.mrf.mxu0
  %v2145 = vadd.f32 0.0, %v2144
  %2146 = vmatprep.mubr.f32.mxu0 0.0
  %2147 = vmatmul.mubr.f32.gmra.mxu0 %v1814
  %v2148 = vpop.f32.mrf.mxu0
  %v2149 = vadd.f32 0.0, %v2148
  %v2150 = vpop.f32.mrf.mxu0
  %v2151 = vadd.f32 0.0, %v2150
  %2152 = vdwg.mxu0
  %2153 = vmatprep.subr.mxu0 %v1958
  %2154 = vmatpush1.msra.mxu0 %v1957
  %2155 = vmatprep.subr.mxu0 %v1956
  %2156 = vmatpush1.msra.mxu0 %v1955
  %2157 = vmatprep.subr.mxu0 %v1954
  %2158 = vmatpush1.msra.mxu0 %v1953
  %2159 = vmatprep.subr.mxu0 %v1952
  %2160 = vmatpush1.msra.mxu0 %v1951
  %2161 = vmatprep.subr.mxu0 %v1950
  %2162 = vmatpush1.msra.mxu0 %v1949
  %2163 = vmatprep.subr.mxu0 %v1948
  %2164 = vmatpush1.msra.mxu0 %v1947
  %2165 = vmatprep.subr.mxu0 %v1946
  %2166 = vmatpush1.msra.mxu0 %v1945
  %2167 = vmatprep.subr.mxu0 %v1944
  %2168 = vmatpush1.msra.mxu0 %v1943
  %2169 = vmatprep.subr.mxu0 %v1942
  %2170 = vmatpush1.msra.mxu0 %v1941
  %2171 = vmatprep.subr.mxu0 %v1940
  %2172 = vmatpush1.msra.mxu0 %v1939
  %2173 = vmatprep.subr.mxu0 %v1938
  %2174 = vmatpush1.msra.mxu0 %v1937
  %2175 = vmatprep.subr.mxu0 %v1936
  %2176 = vmatpush1.msra.mxu0 %v1935
  %2177 = vmatprep.subr.mxu0 %v1934
  %2178 = vmatpush1.msra.mxu0 %v1933
  %2179 = vmatprep.subr.mxu0 %v1932
  %2180 = vmatpush1.msra.mxu0 %v1931
  %2181 = vmatprep.subr.mxu0 %v1930
  %2182 = vmatpush1.msra.mxu0 %v1929
  %2183 = vmatprep.subr.mxu0 %v1928
  %2184 = vmatpush1.msra.mxu0 %v1927
  %2185 = vmatprep.subr.mxu0 0.0
  %2186 = vmatpush2.msra.mxu0 0.0
  %2187 = vmatprep.subr.mxu0 0.0
  %2188 = vmatpush2.msra.mxu0 0.0
  %2189 = vmatprep.subr.mxu0 0.0
  %2190 = vmatpush2.msra.mxu0 0.0
  %2191 = vmatprep.subr.mxu0 0.0
  %2192 = vmatpush2.msra.mxu0 0.0
  %2193 = vmatprep.subr.mxu0 0.0
  %2194 = vmatpush2.msra.mxu0 0.0
  %2195 = vmatprep.subr.mxu0 0.0
  %2196 = vmatpush2.msra.mxu0 0.0
  %2197 = vmatprep.subr.mxu0 0.0
  %2198 = vmatpush2.msra.mxu0 0.0
  %2199 = vmatprep.subr.mxu0 0.0
  %2200 = vmatpush2.msra.mxu0 0.0
  %2201 = vmatprep.subr.mxu0 0.0
  %2202 = vmatpush2.msra.mxu0 0.0
  %2203 = vmatprep.subr.mxu0 0.0
  %2204 = vmatpush2.msra.mxu0 0.0
  %2205 = vmatprep.subr.mxu0 0.0
  %2206 = vmatpush2.msra.mxu0 0.0
  %2207 = vmatprep.subr.mxu0 0.0
  %2208 = vmatpush2.msra.mxu0 0.0
  %2209 = vmatprep.subr.mxu0 0.0
  %2210 = vmatpush2.msra.mxu0 0.0
  %2211 = vmatprep.subr.mxu0 0.0
  %2212 = vmatpush2.msra.mxu0 0.0
  %2213 = vmatprep.subr.mxu0 0.0
  %2214 = vmatpush2.msra.mxu0 0.0
  %2215 = vmatprep.subr.mxu0 0.0
  %2216 = vmatpush2.msra.mxu0 0.0
  %2217 = vmatprep.mubr.f32.mxu0 0.0
  %2218 = vmatmul.mubr.f32.gmra.mxu0 %v1878
  %v2219 = vpop.f32.mrf.mxu0
  %v2220 = vadd.f32 %v2059, %v2219
  %v2221 = vpop.f32.mrf.mxu0
  %v2222 = vadd.f32 %v2061, %v2221
  %2223 = vmatprep.mubr.f32.mxu0 0.0
  %2224 = vmatmul.mubr.f32.gmra.mxu0 %v1833
  %v2225 = vpop.f32.mrf.mxu0
  %v2226 = vadd.f32 %v2065, %v2225
  %v2227 = vpop.f32.mrf.mxu0
  %v2228 = vadd.f32 %v2067, %v2227
  %2229 = vmatprep.mubr.f32.mxu0 0.0
  %2230 = vmatmul.mubr.f32.gmra.mxu0 %v1835
  %v2231 = vpop.f32.mrf.mxu0
  %v2232 = vadd.f32 %v2071, %v2231
  %v2233 = vpop.f32.mrf.mxu0
  %v2234 = vadd.f32 %v2073, %v2233
  %2235 = vmatprep.mubr.f32.mxu0 0.0
  %2236 = vmatmul.mubr.f32.gmra.mxu0 %v1837
  %v2237 = vpop.f32.mrf.mxu0
  %v2238 = vadd.f32 %v2077, %v2237
  %v2239 = vpop.f32.mrf.mxu0
  %v2240 = vadd.f32 %v2079, %v2239
  %2241 = vmatprep.mubr.f32.mxu0 0.0
  %2242 = vmatmul.mubr.f32.gmra.mxu0 %v1839
  %v2243 = vpop.f32.mrf.mxu0
  %v2244 = vadd.f32 %v2083, %v2243
  %v2245 = vpop.f32.mrf.mxu0
  %v2246 = vadd.f32 %v2085, %v2245
  %2247 = vmatprep.mubr.f32.mxu0 0.0
  %2248 = vmatmul.mubr.f32.gmra.mxu0 %v1841
  %v2249 = vpop.f32.mrf.mxu0
  %v2250 = vadd.f32 %v2089, %v2249
  %v2251 = vpop.f32.mrf.mxu0
  %v2252 = vadd.f32 %v2091, %v2251
  %2253 = vmatprep.mubr.f32.mxu0 0.0
  %2254 = vmatmul.mubr.f32.gmra.mxu0 %v1843
  %v2255 = vpop.f32.mrf.mxu0
  %v2256 = vadd.f32 %v2095, %v2255
  %v2257 = vpop.f32.mrf.mxu0
  %v2258 = vadd.f32 %v2097, %v2257
  %2259 = vmatprep.mubr.f32.mxu0 0.0
  %2260 = vmatmul.mubr.f32.gmra.mxu0 %v1845
  %v2261 = vpop.f32.mrf.mxu0
  %v2262 = vadd.f32 %v2101, %v2261
  %v2263 = vpop.f32.mrf.mxu0
  %v2264 = vadd.f32 %v2103, %v2263
  %2265 = vmatprep.mubr.f32.mxu0 0.0
  %2266 = vmatmul.mubr.f32.gmra.mxu0 %v1847
  %v2267 = vpop.f32.mrf.mxu0
  %v2268 = vadd.f32 %v2107, %v2267
  %v2269 = vpop.f32.mrf.mxu0
  %v2270 = vadd.f32 %v2109, %v2269
  %2271 = vmatprep.mubr.f32.mxu0 0.0
  %2272 = vmatmul.mubr.f32.gmra.mxu0 %v1849
  %v2273 = vpop.f32.mrf.mxu0
  %v2274 = vadd.f32 %v2113, %v2273
  %v2275 = vpop.f32.mrf.mxu0
  %v2276 = vadd.f32 %v2115, %v2275
  %2277 = vmatprep.mubr.f32.mxu0 0.0
  %2278 = vmatmul.mubr.f32.gmra.mxu0 %v1851
  %v2279 = vpop.f32.mrf.mxu0
  %v2280 = vadd.f32 %v2119, %v2279
  %v2281 = vpop.f32.mrf.mxu0
  %v2282 = vadd.f32 %v2121, %v2281
  %2283 = vmatprep.mubr.f32.mxu0 0.0
  %2284 = vmatmul.mubr.f32.gmra.mxu0 %v1853
  %v2285 = vpop.f32.mrf.mxu0
  %v2286 = vadd.f32 %v2125, %v2285
  %v2287 = vpop.f32.mrf.mxu0
  %v2288 = vadd.f32 %v2127, %v2287
  %2289 = vmatprep.mubr.f32.mxu0 0.0
  %2290 = vmatmul.mubr.f32.gmra.mxu0 %v1855
  %v2291 = vpop.f32.mrf.mxu0
  %v2292 = vadd.f32 %v2131, %v2291
  %v2293 = vpop.f32.mrf.mxu0
  %v2294 = vadd.f32 %v2133, %v2293
  %2295 = vmatprep.mubr.f32.mxu0 0.0
  %2296 = vmatmul.mubr.f32.gmra.mxu0 %v1857
  %v2297 = vpop.f32.mrf.mxu0
  %v2298 = vadd.f32 %v2137, %v2297
  %v2299 = vpop.f32.mrf.mxu0
  %v2300 = vadd.f32 %v2139, %v2299
  %2301 = vmatprep.mubr.f32.mxu0 0.0
  %2302 = vmatmul.mubr.f32.gmra.mxu0 %v1859
  %v2303 = vpop.f32.mrf.mxu0
  %v2304 = vadd.f32 %v2143, %v2303
  %v2305 = vpop.f32.mrf.mxu0
  %v2306 = vadd.f32 %v2145, %v2305
  %2307 = vmatprep.mubr.f32.mxu0 0.0
  %2308 = vmatmul.mubr.f32.gmra.mxu0 %v1861
  %v2309 = vpop.f32.mrf.mxu0
  %v2310 = vadd.f32 %v2149, %v2309
  %v2311 = vpop.f32.mrf.mxu0
  %v2312 = vadd.f32 %v2151, %v2311
  %2313 = vdwg.mxu0
  %s2314 = scalar_lea.vmem %s5, 512
  %v2315 = vld [vmem:[%s2314] sm:$0xff]
  %v2316 = vld [vmem:[%s2314 + $0x8] sm:$0xff]
  %v2317 = vld [vmem:[%s2314 + $0x10] sm:$0xff]
  %v2318 = vld [vmem:[%s2314 + $0x18] sm:$0xff]
  %v2319 = vld [vmem:[%s2314 + $0x20] sm:$0xff]
  %v2320 = vld [vmem:[%s2314 + $0x28] sm:$0xff]
  %v2321 = vld [vmem:[%s2314 + $0x30] sm:$0xff]
  %v2322 = vld [vmem:[%s2314 + $0x38] sm:$0xff]
  %v2323 = vld [vmem:[%s2314 + $0x40] sm:$0xff]
  %v2324 = vld [vmem:[%s2314 + $0x48] sm:$0xff]
  %v2325 = vld [vmem:[%s2314 + $0x50] sm:$0xff]
  %v2326 = vld [vmem:[%s2314 + $0x58] sm:$0xff]
  %v2327 = vld [vmem:[%s2314 + $0x60] sm:$0xff]
  %v2328 = vld [vmem:[%s2314 + $0x68] sm:$0xff]
  %v2329 = vld [vmem:[%s2314 + $0x70] sm:$0xff]
  %v2330 = vld [vmem:[%s2314 + $0x78] sm:$0xff]
  %v2331 = vld [vmem:[%s2314 + $0x80] sm:$0xff]
  %v2332 = vld [vmem:[%s2314 + $0x88] sm:$0xff]
  %v2333 = vld [vmem:[%s2314 + $0x90] sm:$0xff]
  %v2334 = vld [vmem:[%s2314 + $0x98] sm:$0xff]
  %v2335 = vld [vmem:[%s2314 + $0xa0] sm:$0xff]
  %v2336 = vld [vmem:[%s2314 + $0xa8] sm:$0xff]
  %v2337 = vld [vmem:[%s2314 + $0xb0] sm:$0xff]
  %v2338 = vld [vmem:[%s2314 + $0xb8] sm:$0xff]
  %v2339 = vld [vmem:[%s2314 + $0xc0] sm:$0xff]
  %v2340 = vld [vmem:[%s2314 + $0xc8] sm:$0xff]
  %v2341 = vld [vmem:[%s2314 + $0xd0] sm:$0xff]
  %v2342 = vld [vmem:[%s2314 + $0xd8] sm:$0xff]
  %v2343 = vld [vmem:[%s2314 + $0xe0] sm:$0xff]
  %v2344 = vld [vmem:[%s2314 + $0xe8] sm:$0xff]
  %v2345 = vld [vmem:[%s2314 + $0xf0] sm:$0xff]
  %v2346 = vld [vmem:[%s2314 + $0xf8] sm:$0xff]
  %2347 = vmatprep.subr.mxu0 %v2346
  %2348 = vmatpush1.msra.mxu0 %v2345
  %2349 = vmatprep.subr.mxu0 %v2344
  %2350 = vmatpush1.msra.mxu0 %v2343
  %2351 = vmatprep.subr.mxu0 %v2342
  %2352 = vmatpush1.msra.mxu0 %v2341
  %2353 = vmatprep.subr.mxu0 %v2340
  %2354 = vmatpush1.msra.mxu0 %v2339
  %2355 = vmatprep.subr.mxu0 %v2338
  %2356 = vmatpush1.msra.mxu0 %v2337
  %2357 = vmatprep.subr.mxu0 %v2336
  %2358 = vmatpush1.msra.mxu0 %v2335
  %2359 = vmatprep.subr.mxu0 %v2334
  %2360 = vmatpush1.msra.mxu0 %v2333
  %2361 = vmatprep.subr.mxu0 %v2332
  %2362 = vmatpush1.msra.mxu0 %v2331
  %2363 = vmatprep.subr.mxu0 %v2330
  %2364 = vmatpush1.msra.mxu0 %v2329
  %2365 = vmatprep.subr.mxu0 %v2328
  %2366 = vmatpush1.msra.mxu0 %v2327
  %2367 = vmatprep.subr.mxu0 %v2326
  %2368 = vmatpush1.msra.mxu0 %v2325
  %2369 = vmatprep.subr.mxu0 %v2324
  %2370 = vmatpush1.msra.mxu0 %v2323
  %2371 = vmatprep.subr.mxu0 %v2322
  %2372 = vmatpush1.msra.mxu0 %v2321
  %2373 = vmatprep.subr.mxu0 %v2320
  %2374 = vmatpush1.msra.mxu0 %v2319
  %2375 = vmatprep.subr.mxu0 %v2318
  %2376 = vmatpush1.msra.mxu0 %v2317
  %2377 = vmatprep.subr.mxu0 %v2316
  %2378 = vmatpush1.msra.mxu0 %v2315
  %2379 = vmatprep.subr.mxu0 0.0
  %2380 = vmatpush2.msra.mxu0 0.0
  %2381 = vmatprep.subr.mxu0 0.0
  %2382 = vmatpush2.msra.mxu0 0.0
  %2383 = vmatprep.subr.mxu0 0.0
  %2384 = vmatpush2.msra.mxu0 0.0
  %2385 = vmatprep.subr.mxu0 0.0
  %2386 = vmatpush2.msra.mxu0 0.0
  %2387 = vmatprep.subr.mxu0 0.0
  %2388 = vmatpush2.msra.mxu0 0.0
  %2389 = vmatprep.subr.mxu0 0.0
  %2390 = vmatpush2.msra.mxu0 0.0
  %2391 = vmatprep.subr.mxu0 0.0
  %2392 = vmatpush2.msra.mxu0 0.0
  %2393 = vmatprep.subr.mxu0 0.0
  %2394 = vmatpush2.msra.mxu0 0.0
  %2395 = vmatprep.subr.mxu0 0.0
  %2396 = vmatpush2.msra.mxu0 0.0
  %2397 = vmatprep.subr.mxu0 0.0
  %2398 = vmatpush2.msra.mxu0 0.0
  %2399 = vmatprep.subr.mxu0 0.0
  %2400 = vmatpush2.msra.mxu0 0.0
  %2401 = vmatprep.subr.mxu0 0.0
  %2402 = vmatpush2.msra.mxu0 0.0
  %2403 = vmatprep.subr.mxu0 0.0
  %2404 = vmatpush2.msra.mxu0 0.0
  %2405 = vmatprep.subr.mxu0 0.0
  %2406 = vmatpush2.msra.mxu0 0.0
  %2407 = vmatprep.subr.mxu0 0.0
  %2408 = vmatpush2.msra.mxu0 0.0
  %2409 = vmatprep.subr.mxu0 0.0
  %2410 = vmatpush2.msra.mxu0 0.0
  %2411 = vmatprep.mubr.f32.mxu0 0.0
  %2412 = vmatmul.mubr.f32.gmra.mxu0 %v1881
  %v2413 = vpop.f32.mrf.mxu0
  %v2414 = vadd.f32 0.0, %v2413
  %v2415 = vpop.f32.mrf.mxu0
  %v2416 = vadd.f32 0.0, %v2415
  %2417 = vmatprep.mubr.f32.mxu0 0.0
  %2418 = vmatmul.mubr.f32.gmra.mxu0 %v1883
  %v2419 = vpop.f32.mrf.mxu0
  %v2420 = vadd.f32 0.0, %v2419
  %v2421 = vpop.f32.mrf.mxu0
  %v2422 = vadd.f32 0.0, %v2421
  %2423 = vmatprep.mubr.f32.mxu0 0.0
  %2424 = vmatmul.mubr.f32.gmra.mxu0 %v1885
  %v2425 = vpop.f32.mrf.mxu0
  %v2426 = vadd.f32 0.0, %v2425
  %v2427 = vpop.f32.mrf.mxu0
  %v2428 = vadd.f32 0.0, %v2427
  %2429 = vmatprep.mubr.f32.mxu0 0.0
  %2430 = vmatmul.mubr.f32.gmra.mxu0 %v1887
  %v2431 = vpop.f32.mrf.mxu0
  %v2432 = vadd.f32 0.0, %v2431
  %v2433 = vpop.f32.mrf.mxu0
  %v2434 = vadd.f32 0.0, %v2433
  %2435 = vmatprep.mubr.f32.mxu0 0.0
  %2436 = vmatmul.mubr.f32.gmra.mxu0 %v1889
  %v2437 = vpop.f32.mrf.mxu0
  %v2438 = vadd.f32 0.0, %v2437
  %v2439 = vpop.f32.mrf.mxu0
  %v2440 = vadd.f32 0.0, %v2439
  %2441 = vmatprep.mubr.f32.mxu0 0.0
  %2442 = vmatmul.mubr.f32.gmra.mxu0 %v1891
  %v2443 = vpop.f32.mrf.mxu0
  %v2444 = vadd.f32 0.0, %v2443
  %v2445 = vpop.f32.mrf.mxu0
  %v2446 = vadd.f32 0.0, %v2445
  %2447 = vmatprep.mubr.f32.mxu0 0.0
  %2448 = vmatmul.mubr.f32.gmra.mxu0 %v1893
  %v2449 = vpop.f32.mrf.mxu0
  %v2450 = vadd.f32 0.0, %v2449
  %v2451 = vpop.f32.mrf.mxu0
  %v2452 = vadd.f32 0.0, %v2451
  %2453 = vmatprep.mubr.f32.mxu0 0.0
  %2454 = vmatmul.mubr.f32.gmra.mxu0 %v1895
  %v2455 = vpop.f32.mrf.mxu0
  %v2456 = vadd.f32 0.0, %v2455
  %v2457 = vpop.f32.mrf.mxu0
  %v2458 = vadd.f32 0.0, %v2457
  %2459 = vmatprep.mubr.f32.mxu0 0.0
  %2460 = vmatmul.mubr.f32.gmra.mxu0 %v1897
  %v2461 = vpop.f32.mrf.mxu0
  %v2462 = vadd.f32 0.0, %v2461
  %v2463 = vpop.f32.mrf.mxu0
  %v2464 = vadd.f32 0.0, %v2463
  %2465 = vmatprep.mubr.f32.mxu0 0.0
  %2466 = vmatmul.mubr.f32.gmra.mxu0 %v1899
  %v2467 = vpop.f32.mrf.mxu0
  %v2468 = vadd.f32 0.0, %v2467
  %v2469 = vpop.f32.mrf.mxu0
  %v2470 = vadd.f32 0.0, %v2469
  %2471 = vmatprep.mubr.f32.mxu0 0.0
  %2472 = vmatmul.mubr.f32.gmra.mxu0 %v1901
  %v2473 = vpop.f32.mrf.mxu0
  %v2474 = vadd.f32 0.0, %v2473
  %v2475 = vpop.f32.mrf.mxu0
  %v2476 = vadd.f32 0.0, %v2475
  %2477 = vmatprep.mubr.f32.mxu0 0.0
  %2478 = vmatmul.mubr.f32.gmra.mxu0 %v1903
  %v2479 = vpop.f32.mrf.mxu0
  %v2480 = vadd.f32 0.0, %v2479
  %v2481 = vpop.f32.mrf.mxu0
  %v2482 = vadd.f32 0.0, %v2481
  %2483 = vmatprep.mubr.f32.mxu0 0.0
  %2484 = vmatmul.mubr.f32.gmra.mxu0 %v1905
  %v2485 = vpop.f32.mrf.mxu0
  %v2486 = vadd.f32 0.0, %v2485
  %v2487 = vpop.f32.mrf.mxu0
  %v2488 = vadd.f32 0.0, %v2487
  %2489 = vmatprep.mubr.f32.mxu0 0.0
  %2490 = vmatmul.mubr.f32.gmra.mxu0 %v1907
  %v2491 = vpop.f32.mrf.mxu0
  %v2492 = vadd.f32 0.0, %v2491
  %v2493 = vpop.f32.mrf.mxu0
  %v2494 = vadd.f32 0.0, %v2493
  %2495 = vmatprep.mubr.f32.mxu0 0.0
  %2496 = vmatmul.mubr.f32.gmra.mxu0 %v1909
  %v2497 = vpop.f32.mrf.mxu0
  %v2498 = vadd.f32 0.0, %v2497
  %v2499 = vpop.f32.mrf.mxu0
  %v2500 = vadd.f32 0.0, %v2499
  %2501 = vmatprep.mubr.f32.mxu0 0.0
  %2502 = vmatmul.mubr.f32.gmra.mxu0 %v1926
  %v2503 = vpop.f32.mrf.mxu0
  %v2504 = vadd.f32 0.0, %v2503
  %v2505 = vpop.f32.mrf.mxu0
  %v2506 = vadd.f32 0.0, %v2505
  %2507 = vdwg.mxu0
  %v2508 = vadd.f32 %v2220, %v2414
  %v2509 = vadd.f32 %v2222, %v2416
  %v2510 = vadd.f32 %v2226, %v2420
  %v2511 = vadd.f32 %v2228, %v2422
  %v2512 = vadd.f32 %v2232, %v2426
  %v2513 = vadd.f32 %v2234, %v2428
  %v2514 = vadd.f32 %v2238, %v2432
  %v2515 = vadd.f32 %v2240, %v2434
  %v2516 = vadd.f32 %v2244, %v2438
  %v2517 = vadd.f32 %v2246, %v2440
  %v2518 = vadd.f32 %v2250, %v2444
  %v2519 = vadd.f32 %v2252, %v2446
  %v2520 = vadd.f32 %v2256, %v2450
  %v2521 = vadd.f32 %v2258, %v2452
  %v2522 = vadd.f32 %v2262, %v2456
  %v2523 = vadd.f32 %v2264, %v2458
  %v2524 = vadd.f32 %v2268, %v2462
  %v2525 = vadd.f32 %v2270, %v2464
  %v2526 = vadd.f32 %v2274, %v2468
  %v2527 = vadd.f32 %v2276, %v2470
  %v2528 = vadd.f32 %v2280, %v2474
  %v2529 = vadd.f32 %v2282, %v2476
  %v2530 = vadd.f32 %v2286, %v2480
  %v2531 = vadd.f32 %v2288, %v2482
  %v2532 = vadd.f32 %v2292, %v2486
  %v2533 = vadd.f32 %v2294, %v2488
  %v2534 = vadd.f32 %v2298, %v2492
  %v2535 = vadd.f32 %v2300, %v2494
  %v2536 = vadd.f32 %v2304, %v2498
  %v2537 = vadd.f32 %v2306, %v2500
  %v2538 = vadd.f32 %v2310, %v2504
  %v2539 = vadd.f32 %v2312, %v2506
  %v2540 = vmax.f32 %v2508, %v2509
  %v2541 = vmax.f32 %v2510, %v2511
  %v2542 = vmax.f32 %v2512, %v2513
  %v2543 = vmax.f32 %v2514, %v2515
  %v2544 = vmax.f32 %v2516, %v2517
  %v2545 = vmax.f32 %v2518, %v2519
  %v2546 = vmax.f32 %v2520, %v2521
  %v2547 = vmax.f32 %v2522, %v2523
  %v2548 = vmax.f32 %v2524, %v2525
  %v2549 = vmax.f32 %v2526, %v2527
  %v2550 = vmax.f32 %v2528, %v2529
  %v2551 = vmax.f32 %v2530, %v2531
  %v2552 = vmax.f32 %v2532, %v2533
  %v2553 = vmax.f32 %v2534, %v2535
  %v2554 = vmax.f32 %v2536, %v2537
  %v2555 = vmax.f32 %v2538, %v2539
  %v2556 = vld [vmem:[%s6] sm:$0x1]
  %v2558 = vlaneseq
  %v2559 = vshrl.u32 %v2558, 7
  %v2560 = vsub.s32 0, %v2559
  %v2561 = vrot.slane %v2556, %v2560
  %v2563 = vadd.f32 %v2540, %v2561
  %v2564 = vadd.f32 %v2541, %v2561
  %v2565 = vadd.f32 %v2542, %v2561
  %v2566 = vadd.f32 %v2543, %v2561
  %v2567 = vadd.f32 %v2544, %v2561
  %v2568 = vadd.f32 %v2545, %v2561
  %v2569 = vadd.f32 %v2546, %v2561
  %v2570 = vadd.f32 %v2547, %v2561
  %v2571 = vadd.f32 %v2548, %v2561
  %v2572 = vadd.f32 %v2549, %v2561
  %v2573 = vadd.f32 %v2550, %v2561
  %v2574 = vadd.f32 %v2551, %v2561
  %v2575 = vadd.f32 %v2552, %v2561
  %v2576 = vadd.f32 %v2553, %v2561
  %v2577 = vadd.f32 %v2554, %v2561
  %v2578 = vadd.f32 %v2555, %v2561
  %v2579 = vmax.f32 %v2563, 0.0
  %v2580 = vmax.f32 %v2564, 0.0
  %v2581 = vmax.f32 %v2565, 0.0
  %v2582 = vmax.f32 %v2566, 0.0
  %v2583 = vmax.f32 %v2567, 0.0
  %v2584 = vmax.f32 %v2568, 0.0
  %v2585 = vmax.f32 %v2569, 0.0
  %v2586 = vmax.f32 %v2570, 0.0
  %v2587 = vmax.f32 %v2571, 0.0
  %v2588 = vmax.f32 %v2572, 0.0
  %v2589 = vmax.f32 %v2573, 0.0
  %v2590 = vmax.f32 %v2574, 0.0
  %v2591 = vmax.f32 %v2575, 0.0
  %v2592 = vmax.f32 %v2576, 0.0
  %v2593 = vmax.f32 %v2577, 0.0
  %v2594 = vmax.f32 %v2578, 0.0
  %v2595 = vld [vmem:[%s7] sm:$0xff]
  %v2596 = vld [vmem:[%s7 + $0x8] sm:$0xff]
  %v2597 = vld [vmem:[%s7 + $0x10] sm:$0xff]
  %v2598 = vld [vmem:[%s7 + $0x18] sm:$0xff]
  %v2599 = vld [vmem:[%s7 + $0x20] sm:$0xff]
  %v2600 = vld [vmem:[%s7 + $0x28] sm:$0xff]
  %v2601 = vld [vmem:[%s7 + $0x30] sm:$0xff]
  %2602 = vmatprep.subr.mxu0 0.0
  %2603 = vmatpush1.msra.mxu0 %v2594
  %2604 = vmatprep.subr.mxu0 0.0
  %2605 = vmatpush1.msra.mxu0 %v2593
  %2606 = vmatprep.subr.mxu0 0.0
  %2607 = vmatpush1.msra.mxu0 %v2592
  %2608 = vmatprep.subr.mxu0 0.0
  %2609 = vmatpush1.msra.mxu0 %v2591
  %2610 = vmatprep.subr.mxu0 0.0
  %2611 = vmatpush1.msra.mxu0 %v2590
  %2612 = vmatprep.subr.mxu0 0.0
  %2613 = vmatpush1.msra.mxu0 %v2589
  %2614 = vmatprep.subr.mxu0 0.0
  %2615 = vmatpush1.msra.mxu0 %v2588
  %2616 = vmatprep.subr.mxu0 0.0
  %2617 = vmatpush1.msra.mxu0 %v2587
  %2618 = vmatprep.subr.mxu0 0.0
  %2619 = vmatpush1.msra.mxu0 %v2586
  %2620 = vmatprep.subr.mxu0 0.0
  %2621 = vmatpush1.msra.mxu0 %v2585
  %2622 = vmatprep.subr.mxu0 0.0
  %2623 = vmatpush1.msra.mxu0 %v2584
  %2624 = vmatprep.subr.mxu0 0.0
  %2625 = vmatpush1.msra.mxu0 %v2583
  %2626 = vmatprep.subr.mxu0 0.0
  %2627 = vmatpush1.msra.mxu0 %v2582
  %2628 = vmatprep.subr.mxu0 0.0
  %2629 = vmatpush1.msra.mxu0 %v2581
  %2630 = vmatprep.subr.mxu0 0.0
  %2631 = vmatpush1.msra.mxu0 %v2580
  %2632 = vmatprep.subr.mxu0 0.0
  %2633 = vmatpush1.msra.mxu0 %v2579
  %2634 = vmatprep.subr.mxu0 0.0
  %2635 = vmatpush2.msra.mxu0 0.0
  %2636 = vmatprep.subr.mxu0 0.0
  %2637 = vmatpush2.msra.mxu0 0.0
  %2638 = vmatprep.subr.mxu0 0.0
  %2639 = vmatpush2.msra.mxu0 0.0
  %2640 = vmatprep.subr.mxu0 0.0
  %2641 = vmatpush2.msra.mxu0 0.0
  %2642 = vmatprep.subr.mxu0 0.0
  %2643 = vmatpush2.msra.mxu0 0.0
  %2644 = vmatprep.subr.mxu0 0.0
  %2645 = vmatpush2.msra.mxu0 0.0
  %2646 = vmatprep.subr.mxu0 0.0
  %2647 = vmatpush2.msra.mxu0 0.0
  %2648 = vmatprep.subr.mxu0 0.0
  %2649 = vmatpush2.msra.mxu0 0.0
  %2650 = vmatprep.subr.mxu0 0.0
  %2651 = vmatpush2.msra.mxu0 0.0
  %2652 = vmatprep.subr.mxu0 0.0
  %2653 = vmatpush2.msra.mxu0 0.0
  %2654 = vmatprep.subr.mxu0 0.0
  %2655 = vmatpush2.msra.mxu0 0.0
  %2656 = vmatprep.subr.mxu0 0.0
  %2657 = vmatpush2.msra.mxu0 0.0
  %2658 = vmatprep.subr.mxu0 0.0
  %2659 = vmatpush2.msra.mxu0 0.0
  %2660 = vmatprep.subr.mxu0 0.0
  %2661 = vmatpush2.msra.mxu0 0.0
  %2662 = vmatprep.subr.mxu0 0.0
  %2663 = vmatpush2.msra.mxu0 0.0
  %2664 = vmatprep.subr.mxu0 0.0
  %2665 = vmatpush2.msra.mxu0 0.0
  %2666 = vmatprep.mubr.f32.mxu0 0.0
  %2667 = vmatmul.mubr.f32.gmra.mxu0 %v2595
  %v2668 = vpop.f32.mrf.mxu0
  %v2669 = vadd.f32 0.0, %v2668
  %v2670 = vpop.f32.mrf.mxu0
  %2671 = vmatprep.mubr.f32.mxu0 0.0
  %2672 = vmatmul.mubr.f32.gmra.mxu0 %v2596
  %v2673 = vpop.f32.mrf.mxu0
  %v2674 = vadd.f32 0.0, %v2673
  %v2675 = vpop.f32.mrf.mxu0
  %2676 = vmatprep.mubr.f32.mxu0 0.0
  %2677 = vmatmul.mubr.f32.gmra.mxu0 %v2597
  %v2678 = vpop.f32.mrf.mxu0
  %v2679 = vadd.f32 0.0, %v2678
  %v2680 = vpop.f32.mrf.mxu0
  %2681 = vmatprep.mubr.f32.mxu0 0.0
  %2682 = vmatmul.mubr.f32.gmra.mxu0 %v2598
  %v2683 = vpop.f32.mrf.mxu0
  %v2684 = vadd.f32 0.0, %v2683
  %v2685 = vpop.f32.mrf.mxu0
  %2686 = vmatprep.mubr.f32.mxu0 0.0
  %2687 = vmatmul.mubr.f32.gmra.mxu0 %v2599
  %v2688 = vpop.f32.mrf.mxu0
  %v2689 = vadd.f32 0.0, %v2688
  %v2690 = vpop.f32.mrf.mxu0
  %2691 = vmatprep.mubr.f32.mxu0 0.0
  %2692 = vmatmul.mubr.f32.gmra.mxu0 %v2600
  %v2693 = vpop.f32.mrf.mxu0
  %v2694 = vadd.f32 0.0, %v2693
  %v2695 = vpop.f32.mrf.mxu0
  %2696 = vmatprep.mubr.f32.mxu0 0.0
  %2697 = vmatmul.mubr.f32.gmra.mxu0 %v2601
  %v2698 = vpop.f32.mrf.mxu0
  %v2699 = vadd.f32 0.0, %v2698
  %v2700 = vpop.f32.mrf.mxu0
  %2701 = vdwg.mxu0
  %v2702 = vld [vmem:[%s8] sm:$0xff]
  %v2703 = vld [vmem:[%s8 + $0x8] sm:$0xff]
  %v2704 = vld [vmem:[%s8 + $0x10] sm:$0xff]
  %v2705 = vld [vmem:[%s8 + $0x18] sm:$0xff]
  %v2706 = vld [vmem:[%s8 + $0x20] sm:$0xff]
  %v2707 = vld [vmem:[%s8 + $0x28] sm:$0xff]
  %v2708 = vld [vmem:[%s8 + $0x30] sm:$0xff]
  %2709 = vmatprep.subr.mxu0 0.0
  %2710 = vmatpush1.msra.mxu0 %v2594
  %2711 = vmatprep.subr.mxu0 0.0
  %2712 = vmatpush1.msra.mxu0 %v2593
  %2713 = vmatprep.subr.mxu0 0.0
  %2714 = vmatpush1.msra.mxu0 %v2592
  %2715 = vmatprep.subr.mxu0 0.0
  %2716 = vmatpush1.msra.mxu0 %v2591
  %2717 = vmatprep.subr.mxu0 0.0
  %2718 = vmatpush1.msra.mxu0 %v2590
  %2719 = vmatprep.subr.mxu0 0.0
  %2720 = vmatpush1.msra.mxu0 %v2589
  %2721 = vmatprep.subr.mxu0 0.0
  %2722 = vmatpush1.msra.mxu0 %v2588
  %2723 = vmatprep.subr.mxu0 0.0
  %2724 = vmatpush1.msra.mxu0 %v2587
  %2725 = vmatprep.subr.mxu0 0.0
  %2726 = vmatpush1.msra.mxu0 %v2586
  %2727 = vmatprep.subr.mxu0 0.0
  %2728 = vmatpush1.msra.mxu0 %v2585
  %2729 = vmatprep.subr.mxu0 0.0
  %2730 = vmatpush1.msra.mxu0 %v2584
  %2731 = vmatprep.subr.mxu0 0.0
  %2732 = vmatpush1.msra.mxu0 %v2583
  %2733 = vmatprep.subr.mxu0 0.0
  %2734 = vmatpush1.msra.mxu0 %v2582
  %2735 = vmatprep.subr.mxu0 0.0
  %2736 = vmatpush1.msra.mxu0 %v2581
  %2737 = vmatprep.subr.mxu0 0.0
  %2738 = vmatpush1.msra.mxu0 %v2580
  %2739 = vmatprep.subr.mxu0 0.0
  %2740 = vmatpush1.msra.mxu0 %v2579
  %2741 = vmatprep.subr.mxu0 0.0
  %2742 = vmatpush2.msra.mxu0 0.0
  %2743 = vmatprep.subr.mxu0 0.0
  %2744 = vmatpush2.msra.mxu0 0.0
  %2745 = vmatprep.subr.mxu0 0.0
  %2746 = vmatpush2.msra.mxu0 0.0
  %2747 = vmatprep.subr.mxu0 0.0
  %2748 = vmatpush2.msra.mxu0 0.0
  %2749 = vmatprep.subr.mxu0 0.0
  %2750 = vmatpush2.msra.mxu0 0.0
  %2751 = vmatprep.subr.mxu0 0.0
  %2752 = vmatpush2.msra.mxu0 0.0
  %2753 = vmatprep.subr.mxu0 0.0
  %2754 = vmatpush2.msra.mxu0 0.0
  %2755 = vmatprep.subr.mxu0 0.0
  %2756 = vmatpush2.msra.mxu0 0.0
  %2757 = vmatprep.subr.mxu0 0.0
  %2758 = vmatpush2.msra.mxu0 0.0
  %2759 = vmatprep.subr.mxu0 0.0
  %2760 = vmatpush2.msra.mxu0 0.0
  %2761 = vmatprep.subr.mxu0 0.0
  %2762 = vmatpush2.msra.mxu0 0.0
  %2763 = vmatprep.subr.mxu0 0.0
  %2764 = vmatpush2.msra.mxu0 0.0
  %2765 = vmatprep.subr.mxu0 0.0
  %2766 = vmatpush2.msra.mxu0 0.0
  %2767 = vmatprep.subr.mxu0 0.0
  %2768 = vmatpush2.msra.mxu0 0.0
  %2769 = vmatprep.subr.mxu0 0.0
  %2770 = vmatpush2.msra.mxu0 0.0
  %2771 = vmatprep.subr.mxu0 0.0
  %2772 = vmatpush2.msra.mxu0 0.0
  %2773 = vmatprep.mubr.f32.mxu0 0.0
  %2774 = vmatmul.mubr.f32.gmra.mxu0 %v2702
  %v2775 = vpop.f32.mrf.mxu0
  %v2776 = vadd.f32 0.0, %v2775
  %v2777 = vpop.f32.mrf.mxu0
  %2778 = vmatprep.mubr.f32.mxu0 0.0
  %2779 = vmatmul.mubr.f32.gmra.mxu0 %v2703
  %v2780 = vpop.f32.mrf.mxu0
  %v2781 = vadd.f32 0.0, %v2780
  %v2782 = vpop.f32.mrf.mxu0
  %2783 = vmatprep.mubr.f32.mxu0 0.0
  %2784 = vmatmul.mubr.f32.gmra.mxu0 %v2704
  %v2785 = vpop.f32.mrf.mxu0
  %v2786 = vadd.f32 0.0, %v2785
  %v2787 = vpop.f32.mrf.mxu0
  %2788 = vmatprep.mubr.f32.mxu0 0.0
  %2789 = vmatmul.mubr.f32.gmra.mxu0 %v2705
  %v2790 = vpop.f32.mrf.mxu0
  %v2791 = vadd.f32 0.0, %v2790
  %v2792 = vpop.f32.mrf.mxu0
  %2793 = vmatprep.mubr.f32.mxu0 0.0
  %2794 = vmatmul.mubr.f32.gmra.mxu0 %v2706
  %v2795 = vpop.f32.mrf.mxu0
  %v2796 = vadd.f32 0.0, %v2795
  %v2797 = vpop.f32.mrf.mxu0
  %2798 = vmatprep.mubr.f32.mxu0 0.0
  %2799 = vmatmul.mubr.f32.gmra.mxu0 %v2707
  %v2800 = vpop.f32.mrf.mxu0
  %v2801 = vadd.f32 0.0, %v2800
  %v2802 = vpop.f32.mrf.mxu0
  %2803 = vmatprep.mubr.f32.mxu0 0.0
  %2804 = vmatmul.mubr.f32.gmra.mxu0 %v2708
  %v2805 = vpop.f32.mrf.mxu0
  %v2806 = vadd.f32 0.0, %v2805
  %v2807 = vpop.f32.mrf.mxu0
  %2808 = vdwg.mxu0
  %v2809 = vmax.f32 %v2669, %v2776
  %v2810 = vmax.f32 %v2674, %v2781
  %v2811 = vmax.f32 %v2679, %v2786
  %v2812 = vmax.f32 %v2684, %v2791
  %v2813 = vmax.f32 %v2689, %v2796
  %v2814 = vmax.f32 %v2694, %v2801
  %v2815 = vmax.f32 %v2699, %v2806
  %v2816 = vld [vmem:[%s9] sm:$0xff]
  %v2817 = vld [vmem:[%s9 + $0x8] sm:$0xff]
  %v2818 = vld [vmem:[%s9 + $0x10] sm:$0xff]
  %v2819 = vld [vmem:[%s9 + $0x18] sm:$0xff]
  %v2820 = vld [vmem:[%s9 + $0x20] sm:$0xff]
  %v2821 = vld [vmem:[%s9 + $0x28] sm:$0xff]
  %v2822 = vld [vmem:[%s9 + $0x30] sm:$0xff]
  %v2823 = vld [vmem:[%s9 + $0x38] sm:$0xff]
  %v2824 = vld [vmem:[%s9 + $0x40] sm:$0xff]
  %v2825 = vld [vmem:[%s9 + $0x48] sm:$0xff]
  %v2826 = vld [vmem:[%s9 + $0x50] sm:$0xff]
  %v2827 = vld [vmem:[%s9 + $0x58] sm:$0xff]
  %v2828 = vld [vmem:[%s9 + $0x60] sm:$0xff]
  %v2829 = vld [vmem:[%s9 + $0x68] sm:$0xff]
  %v2830 = vld [vmem:[%s9 + $0x70] sm:$0xff]
  %v2831 = vld [vmem:[%s9 + $0x78] sm:$0xff]
  %v2832 = vld [vmem:[%s9 + $0x80] sm:$0xff]
  %v2833 = vld [vmem:[%s9 + $0x88] sm:$0xff]
  %v2834 = vld [vmem:[%s9 + $0x90] sm:$0xff]
  %v2835 = vld [vmem:[%s9 + $0x98] sm:$0xff]
  %v2836 = vld [vmem:[%s9 + $0xa0] sm:$0xff]
  %v2837 = vld [vmem:[%s9 + $0xa8] sm:$0xff]
  %v2838 = vld [vmem:[%s9 + $0xb0] sm:$0xff]
  %v2839 = vld [vmem:[%s9 + $0xb8] sm:$0xff]
  %v2840 = vld [vmem:[%s9 + $0xc0] sm:$0xff]
  %v2841 = vld [vmem:[%s9 + $0xc8] sm:$0xff]
  %v2842 = vld [vmem:[%s9 + $0xd0] sm:$0xff]
  %v2843 = vld [vmem:[%s9 + $0xd8] sm:$0xff]
  %v2844 = vld [vmem:[%s9 + $0xe0] sm:$0xff]
  %v2845 = vld [vmem:[%s9 + $0xe8] sm:$0xff]
  %v2846 = vld [vmem:[%s9 + $0xf0] sm:$0xff]
  %v2847 = vld [vmem:[%s9 + $0xf8] sm:$0xff]
  %v2848 = vld [vmem:[%s9 + $0x100] sm:$0xff]
  %v2849 = vld [vmem:[%s9 + $0x108] sm:$0xff]
  %v2850 = vld [vmem:[%s9 + $0x110] sm:$0xff]
  %v2851 = vld [vmem:[%s9 + $0x118] sm:$0xff]
  %v2852 = vld [vmem:[%s9 + $0x120] sm:$0xff]
  %v2853 = vld [vmem:[%s9 + $0x128] sm:$0xff]
  %v2854 = vld [vmem:[%s9 + $0x130] sm:$0xff]
  %v2855 = vld [vmem:[%s9 + $0x138] sm:$0xff]
  %v2856 = vld [vmem:[%s9 + $0x140] sm:$0xff]
  %v2857 = vld [vmem:[%s9 + $0x148] sm:$0xff]
  %v2858 = vld [vmem:[%s9 + $0x150] sm:$0xff]
  %v2859 = vld [vmem:[%s9 + $0x158] sm:$0xff]
  %v2860 = vld [vmem:[%s9 + $0x160] sm:$0xff]
  %v2861 = vld [vmem:[%s9 + $0x168] sm:$0xff]
  %v2862 = vld [vmem:[%s9 + $0x170] sm:$0xff]
  %v2863 = vld [vmem:[%s9 + $0x178] sm:$0xff]
  %v2864 = vld [vmem:[%s9 + $0x180] sm:$0xff]
  %v2865 = vld [vmem:[%s9 + $0x188] sm:$0xff]
  %v2866 = vld [vmem:[%s9 + $0x190] sm:$0xff]
  %v2867 = vld [vmem:[%s9 + $0x198] sm:$0xff]
  %v2868 = vld [vmem:[%s9 + $0x1a0] sm:$0xff]
  %v2869 = vld [vmem:[%s9 + $0x1a8] sm:$0xff]
  %v2870 = vld [vmem:[%s9 + $0x1b0] sm:$0xff]
  %v2871 = vld [vmem:[%s9 + $0x1b8] sm:$0xff]
  %v2872 = vld [vmem:[%s9 + $0x1c0] sm:$0xff]
  %v2873 = vld [vmem:[%s9 + $0x1c8] sm:$0xff]
  %v2874 = vld [vmem:[%s9 + $0x1d0] sm:$0xff]
  %v2875 = vld [vmem:[%s9 + $0x1d8] sm:$0xff]
  %v2876 = vld [vmem:[%s9 + $0x1e0] sm:$0xff]
  %v2877 = vld [vmem:[%s9 + $0x1e8] sm:$0xff]
  %v2878 = vld [vmem:[%s9 + $0x1f0] sm:$0xff]
  %v2879 = vld [vmem:[%s9 + $0x1f8] sm:$0xff]
  %v2880 = vld [vmem:[%s9 + $0x200] sm:$0xff]
  %v2881 = vld [vmem:[%s9 + $0x208] sm:$0xff]
  %v2882 = vld [vmem:[%s9 + $0x210] sm:$0xff]
  %v2883 = vld [vmem:[%s9 + $0x218] sm:$0xff]
  %v2884 = vld [vmem:[%s9 + $0x220] sm:$0xff]
  %v2885 = vld [vmem:[%s9 + $0x228] sm:$0xff]
  %v2886 = vld [vmem:[%s9 + $0x230] sm:$0xff]
  %v2887 = vld [vmem:[%s9 + $0x238] sm:$0xff]
  %v2888 = vld [vmem:[%s9 + $0x240] sm:$0xff]
  %v2889 = vld [vmem:[%s9 + $0x248] sm:$0xff]
  %v2890 = vld [vmem:[%s9 + $0x250] sm:$0xff]
  %v2891 = vld [vmem:[%s9 + $0x258] sm:$0xff]
  %v2892 = vld [vmem:[%s9 + $0x260] sm:$0xff]
  %v2893 = vld [vmem:[%s9 + $0x268] sm:$0xff]
  %v2894 = vld [vmem:[%s9 + $0x270] sm:$0xff]
  %v2895 = vld [vmem:[%s9 + $0x278] sm:$0xff]
  %v2896 = vld [vmem:[%s9 + $0x280] sm:$0xff]
  %v2897 = vld [vmem:[%s9 + $0x288] sm:$0xff]
  %v2898 = vld [vmem:[%s9 + $0x290] sm:$0xff]
  %v2899 = vld [vmem:[%s9 + $0x298] sm:$0xff]
  %v2900 = vld [vmem:[%s9 + $0x2a0] sm:$0xff]
  %v2901 = vld [vmem:[%s9 + $0x2a8] sm:$0xff]
  %v2902 = vld [vmem:[%s9 + $0x2b0] sm:$0xff]
  %v2903 = vld [vmem:[%s9 + $0x2b8] sm:$0xff]
  %v2904 = vld [vmem:[%s9 + $0x2c0] sm:$0xff]
  %v2905 = vld [vmem:[%s9 + $0x2c8] sm:$0xff]
  %v2906 = vld [vmem:[%s9 + $0x2d0] sm:$0xff]
  %v2907 = vld [vmem:[%s9 + $0x2d8] sm:$0xff]
  %v2908 = vld [vmem:[%s9 + $0x2e0] sm:$0xff]
  %v2909 = vld [vmem:[%s9 + $0x2e8] sm:$0xff]
  %v2910 = vld [vmem:[%s9 + $0x2f0] sm:$0xff]
  %v2911 = vld [vmem:[%s9 + $0x2f8] sm:$0xff]
  %v2912 = vld [vmem:[%s9 + $0x300] sm:$0xff]
  %v2913 = vld [vmem:[%s9 + $0x308] sm:$0xff]
  %v2914 = vld [vmem:[%s9 + $0x310] sm:$0xff]
  %v2915 = vld [vmem:[%s9 + $0x318] sm:$0xff]
  %v2916 = vld [vmem:[%s9 + $0x320] sm:$0xff]
  %v2917 = vld [vmem:[%s9 + $0x328] sm:$0xff]
  %v2918 = vld [vmem:[%s9 + $0x330] sm:$0xff]
  %v2919 = vld [vmem:[%s9 + $0x338] sm:$0xff]
  %v2920 = vld [vmem:[%s9 + $0x340] sm:$0xff]
  %v2921 = vld [vmem:[%s9 + $0x348] sm:$0xff]
  %v2922 = vld [vmem:[%s9 + $0x350] sm:$0xff]
  %v2923 = vld [vmem:[%s9 + $0x358] sm:$0xff]
  %v2924 = vld [vmem:[%s9 + $0x360] sm:$0xff]
  %v2925 = vld [vmem:[%s9 + $0x368] sm:$0xff]
  %v2926 = vld [vmem:[%s9 + $0x370] sm:$0xff]
  %v2927 = vld [vmem:[%s9 + $0x378] sm:$0xff]
  %v2928 = vld [vmem:[%s10] sm:$0x1]
  %v2930 = vlaneseq
  %v2931 = vshrl.u32 %v2930, 7
  %v2932 = vsub.s32 0, %v2931
  %v2933 = vrot.slane %v2928, %v2932
  %2935 = vmatprep.subr.mxu0 0.0
  %2936 = vmatpush1.msra.mxu0 %v2831
  %2937 = vmatprep.subr.mxu0 0.0
  %2938 = vmatpush1.msra.mxu0 %v2830
  %2939 = vmatprep.subr.mxu0 0.0
  %2940 = vmatpush1.msra.mxu0 %v2829
  %2941 = vmatprep.subr.mxu0 0.0
  %2942 = vmatpush1.msra.mxu0 %v2828
  %2943 = vmatprep.subr.mxu0 0.0
  %2944 = vmatpush1.msra.mxu0 %v2827
  %2945 = vmatprep.subr.mxu0 0.0
  %2946 = vmatpush1.msra.mxu0 %v2826
  %2947 = vmatprep.subr.mxu0 0.0
  %2948 = vmatpush1.msra.mxu0 %v2825
  %2949 = vmatprep.subr.mxu0 0.0
  %2950 = vmatpush1.msra.mxu0 %v2824
  %2951 = vmatprep.subr.mxu0 0.0
  %2952 = vmatpush1.msra.mxu0 %v2823
  %2953 = vmatprep.subr.mxu0 0.0
  %2954 = vmatpush1.msra.mxu0 %v2822
  %2955 = vmatprep.subr.mxu0 0.0
  %2956 = vmatpush1.msra.mxu0 %v2821
  %2957 = vmatprep.subr.mxu0 0.0
  %2958 = vmatpush1.msra.mxu0 %v2820
  %2959 = vmatprep.subr.mxu0 0.0
  %2960 = vmatpush1.msra.mxu0 %v2819
  %2961 = vmatprep.subr.mxu0 0.0
  %2962 = vmatpush1.msra.mxu0 %v2818
  %2963 = vmatprep.subr.mxu0 0.0
  %2964 = vmatpush1.msra.mxu0 %v2817
  %2965 = vmatprep.subr.mxu0 0.0
  %2966 = vmatpush1.msra.mxu0 %v2816
  %2967 = vmatprep.subr.mxu0 0.0
  %2968 = vmatpush2.msra.mxu0 %v2847
  %2969 = vmatprep.subr.mxu0 0.0
  %2970 = vmatpush2.msra.mxu0 %v2846
  %2971 = vmatprep.subr.mxu0 0.0
  %2972 = vmatpush2.msra.mxu0 %v2845
  %2973 = vmatprep.subr.mxu0 0.0
  %2974 = vmatpush2.msra.mxu0 %v2844
  %2975 = vmatprep.subr.mxu0 0.0
  %2976 = vmatpush2.msra.mxu0 %v2843
  %2977 = vmatprep.subr.mxu0 0.0
  %2978 = vmatpush2.msra.mxu0 %v2842
  %2979 = vmatprep.subr.mxu0 0.0
  %2980 = vmatpush2.msra.mxu0 %v2841
  %2981 = vmatprep.subr.mxu0 0.0
  %2982 = vmatpush2.msra.mxu0 %v2840
  %2983 = vmatprep.subr.mxu0 0.0
  %2984 = vmatpush2.msra.mxu0 %v2839
  %2985 = vmatprep.subr.mxu0 0.0
  %2986 = vmatpush2.msra.mxu0 %v2838
  %2987 = vmatprep.subr.mxu0 0.0
  %2988 = vmatpush2.msra.mxu0 %v2837
  %2989 = vmatprep.subr.mxu0 0.0
  %2990 = vmatpush2.msra.mxu0 %v2836
  %2991 = vmatprep.subr.mxu0 0.0
  %2992 = vmatpush2.msra.mxu0 %v2835
  %2993 = vmatprep.subr.mxu0 0.0
  %2994 = vmatpush2.msra.mxu0 %v2834
  %2995 = vmatprep.subr.mxu0 0.0
  %2996 = vmatpush2.msra.mxu0 %v2833
  %2997 = vmatprep.subr.mxu0 0.0
  %2998 = vmatpush2.msra.mxu0 %v2832
  %2999 = vmatprep.mubr.f32.mxu0 %v2810
  %3000 = vmatmul.mubr.f32.gmra.mxu0 %v2809
  %v3001 = vpop.f32.mrf.mxu0
  %v3002 = vadd.f32 %v2933, %v3001
  %v3003 = vpop.f32.mrf.mxu0
  %3004 = vdwg.mxu0
  %3005 = vmatprep.subr.mxu0 0.0
  %3006 = vmatpush1.msra.mxu0 %v2863
  %3007 = vmatprep.subr.mxu0 0.0
  %3008 = vmatpush1.msra.mxu0 %v2862
  %3009 = vmatprep.subr.mxu0 0.0
  %3010 = vmatpush1.msra.mxu0 %v2861
  %3011 = vmatprep.subr.mxu0 0.0
  %3012 = vmatpush1.msra.mxu0 %v2860
  %3013 = vmatprep.subr.mxu0 0.0
  %3014 = vmatpush1.msra.mxu0 %v2859
  %3015 = vmatprep.subr.mxu0 0.0
  %3016 = vmatpush1.msra.mxu0 %v2858
  %3017 = vmatprep.subr.mxu0 0.0
  %3018 = vmatpush1.msra.mxu0 %v2857
  %3019 = vmatprep.subr.mxu0 0.0
  %3020 = vmatpush1.msra.mxu0 %v2856
  %3021 = vmatprep.subr.mxu0 0.0
  %3022 = vmatpush1.msra.mxu0 %v2855
  %3023 = vmatprep.subr.mxu0 0.0
  %3024 = vmatpush1.msra.mxu0 %v2854
  %3025 = vmatprep.subr.mxu0 0.0
  %3026 = vmatpush1.msra.mxu0 %v2853
  %3027 = vmatprep.subr.mxu0 0.0
  %3028 = vmatpush1.msra.mxu0 %v2852
  %3029 = vmatprep.subr.mxu0 0.0
  %3030 = vmatpush1.msra.mxu0 %v2851
  %3031 = vmatprep.subr.mxu0 0.0
  %3032 = vmatpush1.msra.mxu0 %v2850
  %3033 = vmatprep.subr.mxu0 0.0
  %3034 = vmatpush1.msra.mxu0 %v2849
  %3035 = vmatprep.subr.mxu0 0.0
  %3036 = vmatpush1.msra.mxu0 %v2848
  %3037 = vmatprep.subr.mxu0 0.0
  %3038 = vmatpush2.msra.mxu0 %v2879
  %3039 = vmatprep.subr.mxu0 0.0
  %3040 = vmatpush2.msra.mxu0 %v2878
  %3041 = vmatprep.subr.mxu0 0.0
  %3042 = vmatpush2.msra.mxu0 %v2877
  %3043 = vmatprep.subr.mxu0 0.0
  %3044 = vmatpush2.msra.mxu0 %v2876
  %3045 = vmatprep.subr.mxu0 0.0
  %3046 = vmatpush2.msra.mxu0 %v2875
  %3047 = vmatprep.subr.mxu0 0.0
  %3048 = vmatpush2.msra.mxu0 %v2874
  %3049 = vmatprep.subr.mxu0 0.0
  %3050 = vmatpush2.msra.mxu0 %v2873
  %3051 = vmatprep.subr.mxu0 0.0
  %3052 = vmatpush2.msra.mxu0 %v2872
  %3053 = vmatprep.subr.mxu0 0.0
  %3054 = vmatpush2.msra.mxu0 %v2871
  %3055 = vmatprep.subr.mxu0 0.0
  %3056 = vmatpush2.msra.mxu0 %v2870
  %3057 = vmatprep.subr.mxu0 0.0
  %3058 = vmatpush2.msra.mxu0 %v2869
  %3059 = vmatprep.subr.mxu0 0.0
  %3060 = vmatpush2.msra.mxu0 %v2868
  %3061 = vmatprep.subr.mxu0 0.0
  %3062 = vmatpush2.msra.mxu0 %v2867
  %3063 = vmatprep.subr.mxu0 0.0
  %3064 = vmatpush2.msra.mxu0 %v2866
  %3065 = vmatprep.subr.mxu0 0.0
  %3066 = vmatpush2.msra.mxu0 %v2865
  %3067 = vmatprep.subr.mxu0 0.0
  %3068 = vmatpush2.msra.mxu0 %v2864
  %3069 = vmatprep.mubr.f32.mxu0 %v2812
  %3070 = vmatmul.mubr.f32.gmra.mxu0 %v2811
  %v3071 = vpop.f32.mrf.mxu0
  %v3072 = vadd.f32 %v3002, %v3071
  %v3073 = vpop.f32.mrf.mxu0
  %3074 = vdwg.mxu0
  %3075 = vmatprep.subr.mxu0 0.0
  %3076 = vmatpush1.msra.mxu0 %v2895
  %3077 = vmatprep.subr.mxu0 0.0
  %3078 = vmatpush1.msra.mxu0 %v2894
  %3079 = vmatprep.subr.mxu0 0.0
  %3080 = vmatpush1.msra.mxu0 %v2893
  %3081 = vmatprep.subr.mxu0 0.0
  %3082 = vmatpush1.msra.mxu0 %v2892
  %3083 = vmatprep.subr.mxu0 0.0
  %3084 = vmatpush1.msra.mxu0 %v2891
  %3085 = vmatprep.subr.mxu0 0.0
  %3086 = vmatpush1.msra.mxu0 %v2890
  %3087 = vmatprep.subr.mxu0 0.0
  %3088 = vmatpush1.msra.mxu0 %v2889
  %3089 = vmatprep.subr.mxu0 0.0
  %3090 = vmatpush1.msra.mxu0 %v2888
  %3091 = vmatprep.subr.mxu0 0.0
  %3092 = vmatpush1.msra.mxu0 %v2887
  %3093 = vmatprep.subr.mxu0 0.0
  %3094 = vmatpush1.msra.mxu0 %v2886
  %3095 = vmatprep.subr.mxu0 0.0
  %3096 = vmatpush1.msra.mxu0 %v2885
  %3097 = vmatprep.subr.mxu0 0.0
  %3098 = vmatpush1.msra.mxu0 %v2884
  %3099 = vmatprep.subr.mxu0 0.0
  %3100 = vmatpush1.msra.mxu0 %v2883
  %3101 = vmatprep.subr.mxu0 0.0
  %3102 = vmatpush1.msra.mxu0 %v2882
  %3103 = vmatprep.subr.mxu0 0.0
  %3104 = vmatpush1.msra.mxu0 %v2881
  %3105 = vmatprep.subr.mxu0 0.0
  %3106 = vmatpush1.msra.mxu0 %v2880
  %3107 = vmatprep.subr.mxu0 0.0
  %3108 = vmatpush2.msra.mxu0 %v2911
  %3109 = vmatprep.subr.mxu0 0.0
  %3110 = vmatpush2.msra.mxu0 %v2910
  %3111 = vmatprep.subr.mxu0 0.0
  %3112 = vmatpush2.msra.mxu0 %v2909
  %3113 = vmatprep.subr.mxu0 0.0
  %3114 = vmatpush2.msra.mxu0 %v2908
  %3115 = vmatprep.subr.mxu0 0.0
  %3116 = vmatpush2.msra.mxu0 %v2907
  %3117 = vmatprep.subr.mxu0 0.0
  %3118 = vmatpush2.msra.mxu0 %v2906
  %3119 = vmatprep.subr.mxu0 0.0
  %3120 = vmatpush2.msra.mxu0 %v2905
  %3121 = vmatprep.subr.mxu0 0.0
  %3122 = vmatpush2.msra.mxu0 %v2904
  %3123 = vmatprep.subr.mxu0 0.0
  %3124 = vmatpush2.msra.mxu0 %v2903
  %3125 = vmatprep.subr.mxu0 0.0
  %3126 = vmatpush2.msra.mxu0 %v2902
  %3127 = vmatprep.subr.mxu0 0.0
  %3128 = vmatpush2.msra.mxu0 %v2901
  %3129 = vmatprep.subr.mxu0 0.0
  %3130 = vmatpush2.msra.mxu0 %v2900
  %3131 = vmatprep.subr.mxu0 0.0
  %3132 = vmatpush2.msra.mxu0 %v2899
  %3133 = vmatprep.subr.mxu0 0.0
  %3134 = vmatpush2.msra.mxu0 %v2898
  %3135 = vmatprep.subr.mxu0 0.0
  %3136 = vmatpush2.msra.mxu0 %v2897
  %3137 = vmatprep.subr.mxu0 0.0
  %3138 = vmatpush2.msra.mxu0 %v2896
  %3139 = vmatprep.mubr.f32.mxu0 %v2814
  %3140 = vmatmul.mubr.f32.gmra.mxu0 %v2813
  %v3141 = vpop.f32.mrf.mxu0
  %v3142 = vadd.f32 %v3072, %v3141
  %v3143 = vpop.f32.mrf.mxu0
  %3144 = vdwg.mxu0
  %3145 = vmatprep.subr.mxu0 0.0
  %3146 = vmatpush1.msra.mxu0 %v2927
  %3147 = vmatprep.subr.mxu0 0.0
  %3148 = vmatpush1.msra.mxu0 %v2926
  %3149 = vmatprep.subr.mxu0 0.0
  %3150 = vmatpush1.msra.mxu0 %v2925
  %3151 = vmatprep.subr.mxu0 0.0
  %3152 = vmatpush1.msra.mxu0 %v2924
  %3153 = vmatprep.subr.mxu0 0.0
  %3154 = vmatpush1.msra.mxu0 %v2923
  %3155 = vmatprep.subr.mxu0 0.0
  %3156 = vmatpush1.msra.mxu0 %v2922
  %3157 = vmatprep.subr.mxu0 0.0
  %3158 = vmatpush1.msra.mxu0 %v2921
  %3159 = vmatprep.subr.mxu0 0.0
  %3160 = vmatpush1.msra.mxu0 %v2920
  %3161 = vmatprep.subr.mxu0 0.0
  %3162 = vmatpush1.msra.mxu0 %v2919
  %3163 = vmatprep.subr.mxu0 0.0
  %3164 = vmatpush1.msra.mxu0 %v2918
  %3165 = vmatprep.subr.mxu0 0.0
  %3166 = vmatpush1.msra.mxu0 %v2917
  %3167 = vmatprep.subr.mxu0 0.0
  %3168 = vmatpush1.msra.mxu0 %v2916
  %3169 = vmatprep.subr.mxu0 0.0
  %3170 = vmatpush1.msra.mxu0 %v2915
  %3171 = vmatprep.subr.mxu0 0.0
  %3172 = vmatpush1.msra.mxu0 %v2914
  %3173 = vmatprep.subr.mxu0 0.0
  %3174 = vmatpush1.msra.mxu0 %v2913
  %3175 = vmatprep.subr.mxu0 0.0
  %3176 = vmatpush1.msra.mxu0 %v2912
  %3177 = vmatprep.subr.mxu0 0.0
  %3178 = vmatpush2.msra.mxu0 0.0
  %3179 = vmatprep.subr.mxu0 0.0
  %3180 = vmatpush2.msra.mxu0 0.0
  %3181 = vmatprep.subr.mxu0 0.0
  %3182 = vmatpush2.msra.mxu0 0.0
  %3183 = vmatprep.subr.mxu0 0.0
  %3184 = vmatpush2.msra.mxu0 0.0
  %3185 = vmatprep.subr.mxu0 0.0
  %3186 = vmatpush2.msra.mxu0 0.0
  %3187 = vmatprep.subr.mxu0 0.0
  %3188 = vmatpush2.msra.mxu0 0.0
  %3189 = vmatprep.subr.mxu0 0.0
  %3190 = vmatpush2.msra.mxu0 0.0
  %3191 = vmatprep.subr.mxu0 0.0
  %3192 = vmatpush2.msra.mxu0 0.0
  %3193 = vmatprep.subr.mxu0 0.0
  %3194 = vmatpush2.msra.mxu0 0.0
  %3195 = vmatprep.subr.mxu0 0.0
  %3196 = vmatpush2.msra.mxu0 0.0
  %3197 = vmatprep.subr.mxu0 0.0
  %3198 = vmatpush2.msra.mxu0 0.0
  %3199 = vmatprep.subr.mxu0 0.0
  %3200 = vmatpush2.msra.mxu0 0.0
  %3201 = vmatprep.subr.mxu0 0.0
  %3202 = vmatpush2.msra.mxu0 0.0
  %3203 = vmatprep.subr.mxu0 0.0
  %3204 = vmatpush2.msra.mxu0 0.0
  %3205 = vmatprep.subr.mxu0 0.0
  %3206 = vmatpush2.msra.mxu0 0.0
  %3207 = vmatprep.subr.mxu0 0.0
  %3208 = vmatpush2.msra.mxu0 0.0
  %3209 = vmatprep.mubr.f32.mxu0 0.0
  %3210 = vmatmul.mubr.f32.gmra.mxu0 %v2815
  %v3211 = vpop.f32.mrf.mxu0
  %v3212 = vadd.f32 %v3142, %v3211
  %v3213 = vpop.f32.mrf.mxu0
  %3214 = vdwg.mxu0
  %v3215 = vmax.f32 %v3212, 0.0
  %v3216 = vld [vmem:[%s11] sm:$0xff]
  %v3217 = vld [vmem:[%s11 + $0x8] sm:$0xff]
  %v3218 = vld [vmem:[%s11 + $0x10] sm:$0xff]
  %v3219 = vld [vmem:[%s11 + $0x18] sm:$0xff]
  %v3220 = vld [vmem:[%s11 + $0x20] sm:$0xff]
  %v3221 = vld [vmem:[%s11 + $0x28] sm:$0xff]
  %v3222 = vld [vmem:[%s11 + $0x30] sm:$0xff]
  %v3223 = vld [vmem:[%s11 + $0x38] sm:$0xff]
  %v3224 = vld [vmem:[%s12] sm:$0x1]
  %v3226 = vlaneseq
  %v3227 = vshrl.u32 %v3226, 7
  %v3228 = vsub.s32 0, %v3227
  %v3229 = vrot.slane %v3224, %v3228
  %vm3231 = vcmask 523264
  %v3233 = vsel %vm3231, %v3215, 0
  %3235 = vmatprep.subr.mxu0 0.0
  %3236 = vmatpush1.msra.mxu0 0.0
  %3237 = vmatprep.subr.mxu0 0.0
  %3238 = vmatpush1.msra.mxu0 0.0
  %3239 = vmatprep.subr.mxu0 0.0
  %3240 = vmatpush1.msra.mxu0 0.0
  %3241 = vmatprep.subr.mxu0 0.0
  %3242 = vmatpush1.msra.mxu0 0.0
  %3243 = vmatprep.subr.mxu0 0.0
  %3244 = vmatpush1.msra.mxu0 0.0
  %3245 = vmatprep.subr.mxu0 0.0
  %3246 = vmatpush1.msra.mxu0 0.0
  %3247 = vmatprep.subr.mxu0 0.0
  %3248 = vmatpush1.msra.mxu0 0.0
  %3249 = vmatprep.subr.mxu0 0.0
  %3250 = vmatpush1.msra.mxu0 0.0
  %3251 = vmatprep.subr.mxu0 0.0
  %3252 = vmatpush1.msra.mxu0 %v3223
  %3253 = vmatprep.subr.mxu0 0.0
  %3254 = vmatpush1.msra.mxu0 %v3222
  %3255 = vmatprep.subr.mxu0 0.0
  %3256 = vmatpush1.msra.mxu0 %v3221
  %3257 = vmatprep.subr.mxu0 0.0
  %3258 = vmatpush1.msra.mxu0 %v3220
  %3259 = vmatprep.subr.mxu0 0.0
  %3260 = vmatpush1.msra.mxu0 %v3219
  %3261 = vmatprep.subr.mxu0 0.0
  %3262 = vmatpush1.msra.mxu0 %v3218
  %3263 = vmatprep.subr.mxu0 0.0
  %3264 = vmatpush1.msra.mxu0 %v3217
  %3265 = vmatprep.subr.mxu0 0.0
  %3266 = vmatpush1.msra.mxu0 %v3216
  %3267 = vmatprep.subr.mxu0 0.0
  %3268 = vmatpush2.msra.mxu0 0.0
  %3269 = vmatprep.subr.mxu0 0.0
  %3270 = vmatpush2.msra.mxu0 0.0
  %3271 = vmatprep.subr.mxu0 0.0
  %3272 = vmatpush2.msra.mxu0 0.0
  %3273 = vmatprep.subr.mxu0 0.0
  %3274 = vmatpush2.msra.mxu0 0.0
  %3275 = vmatprep.subr.mxu0 0.0
  %3276 = vmatpush2.msra.mxu0 0.0
  %3277 = vmatprep.subr.mxu0 0.0
  %3278 = vmatpush2.msra.mxu0 0.0
  %3279 = vmatprep.subr.mxu0 0.0
  %3280 = vmatpush2.msra.mxu0 0.0
  %3281 = vmatprep.subr.mxu0 0.0
  %3282 = vmatpush2.msra.mxu0 0.0
  %3283 = vmatprep.subr.mxu0 0.0
  %3284 = vmatpush2.msra.mxu0 0.0
  %3285 = vmatprep.subr.mxu0 0.0
  %3286 = vmatpush2.msra.mxu0 0.0
  %3287 = vmatprep.subr.mxu0 0.0
  %3288 = vmatpush2.msra.mxu0 0.0
  %3289 = vmatprep.subr.mxu0 0.0
  %3290 = vmatpush2.msra.mxu0 0.0
  %3291 = vmatprep.subr.mxu0 0.0
  %3292 = vmatpush2.msra.mxu0 0.0
  %3293 = vmatprep.subr.mxu0 0.0
  %3294 = vmatpush2.msra.mxu0 0.0
  %3295 = vmatprep.subr.mxu0 0.0
  %3296 = vmatpush2.msra.mxu0 0.0
  %3297 = vmatprep.subr.mxu0 0.0
  %3298 = vmatpush2.msra.mxu0 0.0
  %3299 = vmatprep.mubr.f32.mxu0 0.0
  %3300 = vmatmul.mubr.f32.gmra.mxu0 %v3233
  %v3301 = vpop.f32.mrf.mxu0
  %v3302 = vadd.f32 %v3229, %v3301
  %v3303 = vpop.f32.mrf.mxu0
  %3304 = vdwg.mxu0
  %3305 = vst [vmem:[%s13] sm:$0xff] %v3302
  // Predicated region
  $region54: #{digit_classifier_forward.1} parent=0 // pred_check
    _
  $region55: #{digit_classifier_forward.1} parent=0 // pred_check_branch
    %3307 = sbr.rel (0) target = $region57
  $region56: #{digit_classifier_forward.1} parent=0 // pred_region
    _
  $region57: #{digit_classifier_forward.1} parent=0 // pred_fallthru
    _
  // Predicated region
  $region58: #{digit_classifier_forward.1} parent=0 // pred_check
    _
  $region59: #{digit_classifier_forward.1} parent=0 // pred_check_branch
    %3309 = sbr.rel (0) target = $region61
  $region60: #{digit_classifier_forward.1} parent=0 // pred_region
    _
  $region61: #{digit_classifier_forward.1} parent=0 // pred_fallthru
    _

</llo_original>
